<compile_context>
chip_gen: v6e
topology: v6e:2x2x1
jax: 0.10.0
libtpu: 0.0.40
codegen_flags: <defaults>
</compile_context>

<pallas_src>
import jax
import jax.numpy as jnp
from jax import lax
from jax.experimental import pallas as pl
from jax.experimental.pallas import tpu as pltpu

LANE = 128


def _round_up(x, m):
    return (x + m - 1) // m * m


# ----------------------------------------------------------------------------
# Fused kernel: convT(2x2,s2) -> (crop/concat) -> conv3x3+ReLU -> conv3x3+ReLU
# ----------------------------------------------------------------------------
def _conv_up_fused_kernel(x1_ref, x2_ref, wt_ref, w1_ref, b1_ref, w2_ref, b2_ref,
                          o_ref, up_ref):
    # x1_ref : (1, H,  W,  Cin)   bf16   deep feature map
    # x2_ref : (1, Hu, Wu, CP)    bf16   skip, pre-cropped + channel-padded
    # wt_ref : (Cin, 4*CP)        bf16   merged convT taps, cols (ky, kx, c)
    # w1_ref : (9, 2*CP, CP)      bf16   conv1, rows = [up-ch pad | skip-ch pad]
    # b1_ref : (1, CP)            f32    conv1 bias (+ folded convT bias)
    # w2_ref : (9, CP, CP)        bf16   conv2
    # b2_ref : (1, CP)            f32
    # o_ref  : (1, Ho2*Wu, CP)    f32    output embedded on the Wu-stride grid
    # up_ref : (H, 2, Wu, CP)     bf16   scratch; flat view == up[(2h+ky),(2w+kx),c]
    _, H, W, Cin = x1_ref.shape
    _, Hu, Wu, CP = x2_ref.shape
    R1 = (Hu - 2) * Wu - 2        # rows carried through conv1 (covers y<Ho1,x<Wo1)
    R2 = (Hu - 4) * Wu - 4        # rows carried through conv2 (covers y<Ho2,x<Wo2)

    # ---- ConvTranspose2d(k=2,s=2): all 4 taps in ONE MXU matmul ------------
    xf = x1_ref[0].reshape(H * W, Cin)                       # layout-free merge
    taps = jnp.dot(xf, wt_ref[...], preferred_element_type=jnp.float32)
    # columns are (ky, kx, c): kx interleaves into Wu via a reshape, ky via the
    # scratch's second axis.  Both stores are lane-dense (CP = 128*k).
    up_ref[:, 0:1, :, :] = taps[:, :2 * CP].reshape(H, 1, Wu, CP).astype(jnp.bfloat16)
    up_ref[:, 1:2, :, :] = taps[:, 2 * CP:].reshape(H, 1, Wu, CP).astype(jnp.bfloat16)

    # ---- flatten everything onto the (Hu*Wu)-row, Wu-stride grid -----------
    up_flat = up_ref[...].reshape(Hu * Wu, CP)               # layout-free merges
    sk_flat = x2_ref[0].reshape(Hu * Wu, CP)
    cat = jnp.concatenate([up_flat, sk_flat], axis=1)        # free lane concat

    # ---- conv1: 9 row-shifted matmuls, f32 accumulation ---------------------
    # output flat row r = y*Wu + x reads input flat row r + dy*Wu + dx; rows
    # with x >= Wo1 are junk and are never read by valid conv2 rows.
    acc1 = jnp.dot(cat[0:R1], w1_ref[0], preferred_element_type=jnp.float32)
    for t in range(1, 9):
        o = (t // 3) * Wu + (t % 3)
        acc1 = acc1 + jnp.dot(cat[o:o + R1], w1_ref[t],
                              preferred_element_type=jnp.float32)
    h1 = jnp.maximum(acc1 + b1_ref[...], 0.0).astype(jnp.bfloat16)   # (R1, CP)

    # ---- conv2: same trick on the same Wu-stride embedding ------------------
    acc2 = jnp.dot(h1[0:R2], w2_ref[0], preferred_element_type=jnp.float32)
    for t in range(1, 9):
        o = (t // 3) * Wu + (t % 3)
        acc2 = acc2 + jnp.dot(h1[o:o + R2], w2_ref[t],
                              preferred_element_type=jnp.float32)
    out = jnp.maximum(acc2 + b2_ref[...], 0.0)                        # (R2, CP) f32

    # ---- lane-dense output store (wrapper un-embeds x < Wo2, c < Cout) ------
    o_ref[0, 0:R2, :] = out
    pad_rows = o_ref.shape[1] - R2
    if pad_rows:
        o_ref[0, R2:, :] = jnp.zeros((pad_rows, CP), jnp.float32)


# ----------------------------------------------------------------------------
# Conv_up.forward wrapper: NCHW boundary, crop, channel padding, weight packing
# ----------------------------------------------------------------------------
def conv_up_forward(params, x1_nchw, x2_nchw):
    wt, bt = params["wt"], params["bt"]      # (2,2,Cin,Cup), (Cup,)
    w1, b1 = params["w1"], params["b1"]      # (3,3,Cup+Csk,Cmid) HWIO, (Cmid,)
    w2, b2 = params["w2"], params["b2"]      # (3,3,Cmid,Cout)  HWIO, (Cout,)

    N, Cin, H, W = x1_nchw.shape
    _, Csk, H2, W2 = x2_nchw.shape
    Cup, Cmid, Cout = wt.shape[-1], w1.shape[-1], w2.shape[-1]
    assert w1.shape[2] == Cup + Csk, "skip + up channels must equal conv1 Cin"

    Hu, Wu = 2 * H, 2 * W
    assert Hu == Wu, "Conv_up crops a square of side = upsampled height"
    assert H >= 3, "need a positive output after two valid 3x3 convs"
    Ho2, Wo2 = Hu - 4, Wu - 4

    # One padded channel width for up / skip / mid / out (all <= 128 here).
    CP = max(_round_up(c, LANE) for c in (Cup, Csk, Cmid, Cout))
    f32, bf16 = jnp.float32, jnp.bfloat16

    # NCHW -> NHWC; activations to bf16 (matmul inputs), accumulation stays f32.
    x1 = jnp.transpose(x1_nchw, (0, 2, 3, 1)).astype(bf16)
    x2 = jnp.transpose(x2_nchw, (0, 2, 3, 1))

    # Center-crop the skip (extract_img) and zero-pad channels to 128 lanes —
    # cheap wrapper-side layout glue that also shrinks the x2 DMA.
    r0, c0 = (H2 - Hu) // 2, (W2 - Wu) // 2
    x2c = x2[:, r0:r0 + Hu, c0:c0 + Wu, :]
    x2p = jnp.pad(x2c, ((0, 0), (0, 0), (0, 0), (0, CP - Csk))).astype(bf16)

    # Merged transposed-conv taps: (Cin, 4*CP), columns ordered (ky, kx, c_pad).
    wt_p = jnp.pad(wt, ((0, 0), (0, 0), (0, 0), (0, CP - Cup)))
    wt_m = jnp.transpose(wt_p, (2, 0, 1, 3)).reshape(Cin, 4 * CP).astype(bf16)

    # conv1 weights: split cat channels into [up | skip], zero-pad each source
    # and the output channels to CP; rows ordered to match the kernel's lane
    # concat.  Fold the ConvTranspose2d bias into conv1's bias (exact).
    w1u = jnp.pad(w1[:, :, :Cup, :], ((0, 0), (0, 0), (0, CP - Cup), (0, CP - Cmid)))
    w1s = jnp.pad(w1[:, :, Cup:, :], ((0, 0), (0, 0), (0, CP - Csk), (0, CP - Cmid)))
    w1c = jnp.concatenate([w1u, w1s], axis=2).reshape(9, 2 * CP, CP).astype(bf16)
    b1_eff = b1 + jnp.einsum("c,yxcm->m", bt, w1[:, :, :Cup, :])
    b1p = jnp.pad(b1_eff, (0, CP - Cmid)).reshape(1, CP).astype(f32)

    w2p = jnp.pad(w2, ((0, 0), (0, 0), (0, CP - Cmid), (0, CP - Cout)))
    w2c = w2p.reshape(9, CP, CP).astype(bf16)
    b2p = jnp.pad(b2, (0, CP - Cout)).reshape(1, CP).astype(f32)

    R1 = (Hu - 2) * Wu - 2
    R2 = (Hu - 4) * Wu - 4
    flops = 2 * N * (H * W * Cin * 4 * CP + 9 * R1 * (2 * CP) * CP + 9 * R2 * CP * CP)
    bytes_accessed = (x1.size * 2 + x2p.size * 2 + wt_m.size * 2 + w1c.size * 2
                      + w2c.size * 2 + b1p.size * 4 + b2p.size * 4
                      + N * Ho2 * Wu * CP * 4)

    out = pl.pallas_call(
        _conv_up_fused_kernel,
        out_shape=jax.ShapeDtypeStruct((N, Ho2 * Wu, CP), f32),
        grid=(N,),
        in_specs=[
            pl.BlockSpec((1, H, W, Cin), lambda n: (n, 0, 0, 0)),
            pl.BlockSpec((1, Hu, Wu, CP), lambda n: (n, 0, 0, 0)),
            pl.BlockSpec((Cin, 4 * CP), lambda n: (0, 0)),
            pl.BlockSpec((9, 2 * CP, CP), lambda n: (0, 0, 0)),
            pl.BlockSpec((1, CP), lambda n: (0, 0)),
            pl.BlockSpec((9, CP, CP), lambda n: (0, 0, 0)),
            pl.BlockSpec((1, CP), lambda n: (0, 0)),
        ],
        out_specs=pl.BlockSpec((1, Ho2 * Wu, CP), lambda n: (n, 0, 0)),
        scratch_shapes=[pltpu.VMEM((H, 2, Wu, CP), bf16)],          # up (bf16)
        compiler_params=pltpu.CompilerParams(
            dimension_semantics=("parallel",),       # batch across cores
            vmem_limit_bytes=48 * 1024 * 1024,       # within v7x's 64 MiB VMEM
        ),
        cost_estimate=pl.CostEstimate(flops=flops, transcendentals=0,
                                      bytes_accessed=bytes_accessed),
    )(x1, x2p, wt_m, w1c, b1p, w2c, b2p)

    # Un-embed: rows are y*Wu + x (x < Wo2 valid), lanes < Cout valid.
    out = out.reshape(N, Ho2, Wu, CP)[:, :, :Wo2, :Cout]
    return jnp.transpose(out, (0, 3, 1, 2))                  # back to NCHW


# ----------------------------------------------------------------------------
# Plain-JAX f32 reference for validation (independent math path).
# ----------------------------------------------------------------------------
def conv_up_reference(params, x1_nchw, x2_nchw):
    x1 = jnp.transpose(x1_nchw, (0, 2, 3, 1))
    x2 = jnp.transpose(x2_nchw, (0, 2, 3, 1))
    N, H, W, _ = x1.shape
    Cup = params["wt"].shape[-1]
    # stride==kernel==2 transposed conv == non-overlapping block expansion
    up = jnp.einsum("nijc,klcd->nikjld", x1, params["wt"])
    up = up.reshape(N, 2 * H, 2 * W, Cup) + params["bt"]
    size = up.shape[1]                      # PyTorch extract_img crops a square
    r0 = (x2.shape[1] - size) // 2
    c0 = (x2.shape[2] - size) // 2
    x2c = x2[:, r0:r0 + size, c0:c0 + size, :]
    cat = jnp.concatenate([up, x2c], axis=-1)
    dn = ("NHWC", "HWIO", "NHWC")
    h = lax.conv_general_dilated(cat, params["w1"], (1, 1), "VALID",
                                 dimension_numbers=dn) + params["b1"]
    h = jnp.maximum(h, 0.0)
    h = lax.conv_general_dilated(h, params["w2"], (1, 1), "VALID",
                                 dimension_numbers=dn) + params["b2"]
    h = jnp.maximum(h, 0.0)
    return jnp.transpose(h, (0, 3, 1, 2))


if __name__ == "__main__":
    # Conv_up(in_ch=4, out_ch=2); x1 is the "deep" feature map, x2 the skip.
    in_ch, out_ch = 4, 2
    N, H, W = 2, 8, 8          # x1 spatial 8x8 -> upsampled to 16x16
    H2, W2 = 20, 20            # x2 spatial, center-cropped to 16x16

    key = jax.random.PRNGKey(0)
    kx1, kx2, kwt, kbt, kw1, kb1, kw2, kb2 = jax.random.split(key, 8)

    x1 = jax.random.normal(kx1, (N, in_ch, H, W), jnp.float32)       # NCHW
    x2 = jax.random.normal(kx2, (N, out_ch, H2, W2), jnp.float32)    # NCHW

    params = {
        # ConvTranspose2d(in_ch, out_ch, kernel=2, stride=2): (ky, kx, cin, cout)
        "wt": 0.1 * jax.random.normal(kwt, (2, 2, in_ch, out_ch), jnp.float32),
        "bt": 0.1 * jax.random.normal(kbt, (out_ch,), jnp.float32),
        # Double_conv: Conv2d(in_ch,out_ch,3) -> ReLU -> Conv2d(out_ch,out_ch,3) -> ReLU
        "w1": 0.1 * jax.random.normal(kw1, (3, 3, in_ch, out_ch), jnp.float32),
        "b1": 0.1 * jax.random.normal(kb1, (out_ch,), jnp.float32),
        "w2": 0.1 * jax.random.normal(kw2, (3, 3, out_ch, out_ch), jnp.float32),
        "b2": 0.1 * jax.random.normal(kb2, (out_ch,), jnp.float32),
    }

    fwd = jax.jit(conv_up_forward)
    ref_fn = jax.jit(conv_up_reference)

    out = jax.block_until_ready(fwd(params, x1, x2))
    ref = jax.block_until_ready(ref_fn(params, x1, x2))

    assert out.shape == (N, out_ch, 2 * H - 4, 2 * W - 4), out.shape
    max_err = float(jnp.max(jnp.abs(out - ref)))
    # bf16 matmul inputs with f32 accumulation -> relaxed tolerance.
    assert jnp.allclose(out, ref, atol=2e-2, rtol=2e-2), (
        f"mismatch vs reference (max abs err {max_err:.3e})")
    print("KERNEL_OK")
</pallas_src>

<mosaic_0001>
module attributes {stable_mosaic.version = 11 : i64} {
  func.func @_conv_up_fused_kernel(%arg0: i32, %arg1: memref<1x8x8x4xbf16, #tpu.memory_space<vmem>>, %arg2: memref<1x16x16x128xbf16, #tpu.memory_space<vmem>>, %arg3: memref<4x512xbf16, #tpu.memory_space<vmem>>, %arg4: memref<9x256x128xbf16, #tpu.memory_space<vmem>>, %arg5: memref<1x128xf32, #tpu.memory_space<vmem>>, %arg6: memref<9x128x128xbf16, #tpu.memory_space<vmem>>, %arg7: memref<1x128xf32, #tpu.memory_space<vmem>>, %arg8: memref<1x192x128xf32, #tpu.memory_space<vmem>>, %arg9: memref<8x2x16x128xbf16, #tpu.memory_space<vmem>>) attributes {dimension_semantics = [#tpu.dimension_semantics<parallel>], iteration_bounds = array<i64: 2>, scalar_prefetch = 0 : i64, scratch_operands = 1 : i64, tpu.core_type = #tpu.core_type<tc>, window_params = [{transform_indices = @transform_0, window_bounds = array<i64: 1, 8, 8, 4>}, {transform_indices = @transform_1, window_bounds = array<i64: 1, 16, 16, 128>}, {pipeline_mode = #tpu.pipeline_mode<synchronous>, transform_indices = @transform_2, window_bounds = array<i64: 4, 512>}, {pipeline_mode = #tpu.pipeline_mode<synchronous>, transform_indices = @transform_3, window_bounds = array<i64: 9, 256, 128>}, {pipeline_mode = #tpu.pipeline_mode<synchronous>, transform_indices = @transform_4, window_bounds = array<i64: 1, 128>}, {pipeline_mode = #tpu.pipeline_mode<synchronous>, transform_indices = @transform_5, window_bounds = array<i64: 9, 128, 128>}, {pipeline_mode = #tpu.pipeline_mode<synchronous>, transform_indices = @transform_6, window_bounds = array<i64: 1, 128>}, {transform_indices = @transform_7, window_bounds = array<i64: 1, 192, 128>}]} {
    %c0 = arith.constant 0 : index
    %c0_0 = arith.constant 0 : index
    %c0_1 = arith.constant 0 : index
    %c0_2 = arith.constant 0 : index
    %0 = vector.load %arg1[%c0, %c0_0, %c0_1, %c0_2] : memref<1x8x8x4xbf16, #tpu.memory_space<vmem>>, vector<1x8x8x4xbf16>
    %1 = vector.shape_cast %0 : vector<1x8x8x4xbf16> to vector<8x8x4xbf16>
    %2 = vector.shape_cast %1 : vector<8x8x4xbf16> to vector<64x4xbf16>
    %c0_3 = arith.constant 0 : index
    %c0_4 = arith.constant 0 : index
    %3 = vector.load %arg3[%c0_3, %c0_4] : memref<4x512xbf16, #tpu.memory_space<vmem>>, vector<4x512xbf16>
    %cst = arith.constant dense<0.000000e+00> : vector<64x512xf32>
    %4 = tpu.matmul %2, %3, %cst {dimension_numbers = #tpu.dot_dimension_numbers<[1], [0], [0], [1], [0, 0, 1, 1], [], []>} : vector<64x4xbf16>, vector<4x512xbf16>, vector<64x512xf32> -> vector<64x512xf32>
    %5 = vector.extract_strided_slice %4 {offsets = [0, 0], sizes = [64, 256], strides = [1, 1]} : vector<64x512xf32> to vector<64x256xf32>
    %6 = vector.shape_cast %5 : vector<64x256xf32> to vector<8x1x16x128xf32>
    %7 = arith.truncf %6 : vector<8x1x16x128xf32> to vector<8x1x16x128xbf16>
    %c0_5 = arith.constant 0 : index
    %c0_6 = arith.constant 0 : index
    %c0_7 = arith.constant 0 : index
    %c0_8 = arith.constant 0 : index
    %8 = vector.load %arg9[%c0_5, %c0_6, %c0_7, %c0_8] : memref<8x2x16x128xbf16, #tpu.memory_space<vmem>>, vector<8x1x16x128xbf16>
    tpu.vector_store %arg9[%c0_5, %c0_6, %c0_7, %c0_8], %7 {strides = array<i32>} : memref<8x2x16x128xbf16, #tpu.memory_space<vmem>>, vector<8x1x16x128xbf16>,
    %9 = vector.extract_strided_slice %4 {offsets = [0, 256], sizes = [64, 256], strides = [1, 1]} : vector<64x512xf32> to vector<64x256xf32>
    %10 = vector.shape_cast %9 : vector<64x256xf32> to vector<8x1x16x128xf32>
    %11 = arith.truncf %10 : vector<8x1x16x128xf32> to vector<8x1x16x128xbf16>
    %c0_9 = arith.constant 0 : index
    %c1 = arith.constant 1 : index
    %c0_10 = arith.constant 0 : index
    %c0_11 = arith.constant 0 : index
    %12 = vector.load %arg9[%c0_9, %c1, %c0_10, %c0_11] : memref<8x2x16x128xbf16, #tpu.memory_space<vmem>>, vector<8x1x16x128xbf16>
    tpu.vector_store %arg9[%c0_9, %c1, %c0_10, %c0_11], %11 {strides = array<i32>} : memref<8x2x16x128xbf16, #tpu.memory_space<vmem>>, vector<8x1x16x128xbf16>,
    %c0_12 = arith.constant 0 : index
    %c0_13 = arith.constant 0 : index
    %c0_14 = arith.constant 0 : index
    %c0_15 = arith.constant 0 : index
    %13 = vector.load %arg9[%c0_12, %c0_13, %c0_14, %c0_15] : memref<8x2x16x128xbf16, #tpu.memory_space<vmem>>, vector<8x2x16x128xbf16>
    %14 = vector.shape_cast %13 : vector<8x2x16x128xbf16> to vector<256x128xbf16>
    %c0_16 = arith.constant 0 : index
    %c0_17 = arith.constant 0 : index
    %c0_18 = arith.constant 0 : index
    %c0_19 = arith.constant 0 : index
    %15 = vector.load %arg2[%c0_16, %c0_17, %c0_18, %c0_19] : memref<1x16x16x128xbf16, #tpu.memory_space<vmem>>, vector<1x16x16x128xbf16>
    %16 = vector.shape_cast %15 : vector<1x16x16x128xbf16> to vector<16x16x128xbf16>
    %17 = vector.shape_cast %16 : vector<16x16x128xbf16> to vector<256x128xbf16>
    %18 = tpu.concatenate %14, %17 in 1 : vector<256x128xbf16>, vector<256x128xbf16> -> vector<256x256xbf16>
    %19 = vector.extract_strided_slice %18 {offsets = [0, 0], sizes = [222, 256], strides = [1, 1]} : vector<256x256xbf16> to vector<222x256xbf16>
    %c0_20 = arith.constant 0 : index
    %c0_21 = arith.constant 0 : index
    %c0_22 = arith.constant 0 : index
    %20 = vector.load %arg4[%c0_20, %c0_21, %c0_22] : memref<9x256x128xbf16, #tpu.memory_space<vmem>>, vector<1x256x128xbf16>
    %21 = vector.shape_cast %20 : vector<1x256x128xbf16> to vector<256x128xbf16>
    %cst_23 = arith.constant dense<0.000000e+00> : vector<222x128xf32>
    %22 = tpu.matmul %19, %21, %cst_23 {dimension_numbers = #tpu.dot_dimension_numbers<[1], [0], [0], [1], [0, 0, 1, 1], [], []>} : vector<222x256xbf16>, vector<256x128xbf16>, vector<222x128xf32> -> vector<222x128xf32>
    %23 = vector.extract_strided_slice %18 {offsets = [1, 0], sizes = [222, 256], strides = [1, 1]} : vector<256x256xbf16> to vector<222x256xbf16>
    %c1_24 = arith.constant 1 : index
    %c0_25 = arith.constant 0 : index
    %c0_26 = arith.constant 0 : index
    %24 = vector.load %arg4[%c1_24, %c0_25, %c0_26] : memref<9x256x128xbf16, #tpu.memory_space<vmem>>, vector<1x256x128xbf16>
    %25 = vector.shape_cast %24 : vector<1x256x128xbf16> to vector<256x128xbf16>
    %cst_27 = arith.constant dense<0.000000e+00> : vector<222x128xf32>
    %26 = tpu.matmul %23, %25, %cst_27 {dimension_numbers = #tpu.dot_dimension_numbers<[1], [0], [0], [1], [0, 0, 1, 1], [], []>} : vector<222x256xbf16>, vector<256x128xbf16>, vector<222x128xf32> -> vector<222x128xf32>
    %27 = arith.addf %22, %26 : vector<222x128xf32>
    %28 = vector.extract_strided_slice %18 {offsets = [2, 0], sizes = [222, 256], strides = [1, 1]} : vector<256x256xbf16> to vector<222x256xbf16>
    %c2 = arith.constant 2 : index
    %c0_28 = arith.constant 0 : index
    %c0_29 = arith.constant 0 : index
    %29 = vector.load %arg4[%c2, %c0_28, %c0_29] : memref<9x256x128xbf16, #tpu.memory_space<vmem>>, vector<1x256x128xbf16>
    %30 = vector.shape_cast %29 : vector<1x256x128xbf16> to vector<256x128xbf16>
    %cst_30 = arith.constant dense<0.000000e+00> : vector<222x128xf32>
    %31 = tpu.matmul %28, %30, %cst_30 {dimension_numbers = #tpu.dot_dimension_numbers<[1], [0], [0], [1], [0, 0, 1, 1], [], []>} : vector<222x256xbf16>, vector<256x128xbf16>, vector<222x128xf32> -> vector<222x128xf32>
    %32 = arith.addf %27, %31 : vector<222x128xf32>
    %33 = vector.extract_strided_slice %18 {offsets = [16, 0], sizes = [222, 256], strides = [1, 1]} : vector<256x256xbf16> to vector<222x256xbf16>
    %c3 = arith.constant 3 : index
    %c0_31 = arith.constant 0 : index
    %c0_32 = arith.constant 0 : index
    %34 = vector.load %arg4[%c3, %c0_31, %c0_32] : memref<9x256x128xbf16, #tpu.memory_space<vmem>>, vector<1x256x128xbf16>
    %35 = vector.shape_cast %34 : vector<1x256x128xbf16> to vector<256x128xbf16>
    %cst_33 = arith.constant dense<0.000000e+00> : vector<222x128xf32>
    %36 = tpu.matmul %33, %35, %cst_33 {dimension_numbers = #tpu.dot_dimension_numbers<[1], [0], [0], [1], [0, 0, 1, 1], [], []>} : vector<222x256xbf16>, vector<256x128xbf16>, vector<222x128xf32> -> vector<222x128xf32>
    %37 = arith.addf %32, %36 : vector<222x128xf32>
    %38 = vector.extract_strided_slice %18 {offsets = [17, 0], sizes = [222, 256], strides = [1, 1]} : vector<256x256xbf16> to vector<222x256xbf16>
    %c4 = arith.constant 4 : index
    %c0_34 = arith.constant 0 : index
    %c0_35 = arith.constant 0 : index
    %39 = vector.load %arg4[%c4, %c0_34, %c0_35] : memref<9x256x128xbf16, #tpu.memory_space<vmem>>, vector<1x256x128xbf16>
    %40 = vector.shape_cast %39 : vector<1x256x128xbf16> to vector<256x128xbf16>
    %cst_36 = arith.constant dense<0.000000e+00> : vector<222x128xf32>
    %41 = tpu.matmul %38, %40, %cst_36 {dimension_numbers = #tpu.dot_dimension_numbers<[1], [0], [0], [1], [0, 0, 1, 1], [], []>} : vector<222x256xbf16>, vector<256x128xbf16>, vector<222x128xf32> -> vector<222x128xf32>
    %42 = arith.addf %37, %41 : vector<222x128xf32>
    %43 = vector.extract_strided_slice %18 {offsets = [18, 0], sizes = [222, 256], strides = [1, 1]} : vector<256x256xbf16> to vector<222x256xbf16>
    %c5 = arith.constant 5 : index
    %c0_37 = arith.constant 0 : index
    %c0_38 = arith.constant 0 : index
    %44 = vector.load %arg4[%c5, %c0_37, %c0_38] : memref<9x256x128xbf16, #tpu.memory_space<vmem>>, vector<1x256x128xbf16>
    %45 = vector.shape_cast %44 : vector<1x256x128xbf16> to vector<256x128xbf16>
    %cst_39 = arith.constant dense<0.000000e+00> : vector<222x128xf32>
    %46 = tpu.matmul %43, %45, %cst_39 {dimension_numbers = #tpu.dot_dimension_numbers<[1], [0], [0], [1], [0, 0, 1, 1], [], []>} : vector<222x256xbf16>, vector<256x128xbf16>, vector<222x128xf32> -> vector<222x128xf32>
    %47 = arith.addf %42, %46 : vector<222x128xf32>
    %48 = vector.extract_strided_slice %18 {offsets = [32, 0], sizes = [222, 256], strides = [1, 1]} : vector<256x256xbf16> to vector<222x256xbf16>
    %c6 = arith.constant 6 : index
    %c0_40 = arith.constant 0 : index
    %c0_41 = arith.constant 0 : index
    %49 = vector.load %arg4[%c6, %c0_40, %c0_41] : memref<9x256x128xbf16, #tpu.memory_space<vmem>>, vector<1x256x128xbf16>
    %50 = vector.shape_cast %49 : vector<1x256x128xbf16> to vector<256x128xbf16>
    %cst_42 = arith.constant dense<0.000000e+00> : vector<222x128xf32>
    %51 = tpu.matmul %48, %50, %cst_42 {dimension_numbers = #tpu.dot_dimension_numbers<[1], [0], [0], [1], [0, 0, 1, 1], [], []>} : vector<222x256xbf16>, vector<256x128xbf16>, vector<222x128xf32> -> vector<222x128xf32>
    %52 = arith.addf %47, %51 : vector<222x128xf32>
    %53 = vector.extract_strided_slice %18 {offsets = [33, 0], sizes = [222, 256], strides = [1, 1]} : vector<256x256xbf16> to vector<222x256xbf16>
    %c7 = arith.constant 7 : index
    %c0_43 = arith.constant 0 : index
    %c0_44 = arith.constant 0 : index
    %54 = vector.load %arg4[%c7, %c0_43, %c0_44] : memref<9x256x128xbf16, #tpu.memory_space<vmem>>, vector<1x256x128xbf16>
    %55 = vector.shape_cast %54 : vector<1x256x128xbf16> to vector<256x128xbf16>
    %cst_45 = arith.constant dense<0.000000e+00> : vector<222x128xf32>
    %56 = tpu.matmul %53, %55, %cst_45 {dimension_numbers = #tpu.dot_dimension_numbers<[1], [0], [0], [1], [0, 0, 1, 1], [], []>} : vector<222x256xbf16>, vector<256x128xbf16>, vector<222x128xf32> -> vector<222x128xf32>
    %57 = arith.addf %52, %56 : vector<222x128xf32>
    %58 = vector.extract_strided_slice %18 {offsets = [34, 0], sizes = [222, 256], strides = [1, 1]} : vector<256x256xbf16> to vector<222x256xbf16>
    %c8 = arith.constant 8 : index
    %c0_46 = arith.constant 0 : index
    %c0_47 = arith.constant 0 : index
    %59 = vector.load %arg4[%c8, %c0_46, %c0_47] : memref<9x256x128xbf16, #tpu.memory_space<vmem>>, vector<1x256x128xbf16>
    %60 = vector.shape_cast %59 : vector<1x256x128xbf16> to vector<256x128xbf16>
    %cst_48 = arith.constant dense<0.000000e+00> : vector<222x128xf32>
    %61 = tpu.matmul %58, %60, %cst_48 {dimension_numbers = #tpu.dot_dimension_numbers<[1], [0], [0], [1], [0, 0, 1, 1], [], []>} : vector<222x256xbf16>, vector<256x128xbf16>, vector<222x128xf32> -> vector<222x128xf32>
    %62 = arith.addf %57, %61 : vector<222x128xf32>
    %c0_49 = arith.constant 0 : index
    %c0_50 = arith.constant 0 : index
    %63 = vector.load %arg5[%c0_49, %c0_50] : memref<1x128xf32, #tpu.memory_space<vmem>>, vector<1x128xf32>
    %64 = vector.broadcast %63 : vector<1x128xf32> to vector<222x128xf32>
    %65 = arith.addf %62, %64 : vector<222x128xf32>
    %cst_51 = arith.constant 0.000000e+00 : f32
    %66 = vector.broadcast %cst_51 : f32 to vector<222x128xf32>
    %67 = arith.maximumf %65, %66 : vector<222x128xf32>
    %68 = arith.truncf %67 : vector<222x128xf32> to vector<222x128xbf16>
    %69 = vector.extract_strided_slice %68 {offsets = [0, 0], sizes = [188, 128], strides = [1, 1]} : vector<222x128xbf16> to vector<188x128xbf16>
    %c0_52 = arith.constant 0 : index
    %c0_53 = arith.constant 0 : index
    %c0_54 = arith.constant 0 : index
    %70 = vector.load %arg6[%c0_52, %c0_53, %c0_54] : memref<9x128x128xbf16, #tpu.memory_space<vmem>>, vector<1x128x128xbf16>
    %71 = vector.shape_cast %70 : vector<1x128x128xbf16> to vector<128x128xbf16>
    %cst_55 = arith.constant dense<0.000000e+00> : vector<188x128xf32>
    %72 = tpu.matmul %69, %71, %cst_55 {dimension_numbers = #tpu.dot_dimension_numbers<[1], [0], [0], [1], [0, 0, 1, 1], [], []>} : vector<188x128xbf16>, vector<128x128xbf16>, vector<188x128xf32> -> vector<188x128xf32>
    %73 = vector.extract_strided_slice %68 {offsets = [1, 0], sizes = [188, 128], strides = [1, 1]} : vector<222x128xbf16> to vector<188x128xbf16>
    %c1_56 = arith.constant 1 : index
    %c0_57 = arith.constant 0 : index
    %c0_58 = arith.constant 0 : index
    %74 = vector.load %arg6[%c1_56, %c0_57, %c0_58] : memref<9x128x128xbf16, #tpu.memory_space<vmem>>, vector<1x128x128xbf16>
    %75 = vector.shape_cast %74 : vector<1x128x128xbf16> to vector<128x128xbf16>
    %cst_59 = arith.constant dense<0.000000e+00> : vector<188x128xf32>
    %76 = tpu.matmul %73, %75, %cst_59 {dimension_numbers = #tpu.dot_dimension_numbers<[1], [0], [0], [1], [0, 0, 1, 1], [], []>} : vector<188x128xbf16>, vector<128x128xbf16>, vector<188x128xf32> -> vector<188x128xf32>
    %77 = arith.addf %72, %76 : vector<188x128xf32>
    %78 = vector.extract_strided_slice %68 {offsets = [2, 0], sizes = [188, 128], strides = [1, 1]} : vector<222x128xbf16> to vector<188x128xbf16>
    %c2_60 = arith.constant 2 : index
    %c0_61 = arith.constant 0 : index
    %c0_62 = arith.constant 0 : index
    %79 = vector.load %arg6[%c2_60, %c0_61, %c0_62] : memref<9x128x128xbf16, #tpu.memory_space<vmem>>, vector<1x128x128xbf16>
    %80 = vector.shape_cast %79 : vector<1x128x128xbf16> to vector<128x128xbf16>
    %cst_63 = arith.constant dense<0.000000e+00> : vector<188x128xf32>
    %81 = tpu.matmul %78, %80, %cst_63 {dimension_numbers = #tpu.dot_dimension_numbers<[1], [0], [0], [1], [0, 0, 1, 1], [], []>} : vector<188x128xbf16>, vector<128x128xbf16>, vector<188x128xf32> -> vector<188x128xf32>
    %82 = arith.addf %77, %81 : vector<188x128xf32>
    %83 = vector.extract_strided_slice %68 {offsets = [16, 0], sizes = [188, 128], strides = [1, 1]} : vector<222x128xbf16> to vector<188x128xbf16>
    %c3_64 = arith.constant 3 : index
    %c0_65 = arith.constant 0 : index
    %c0_66 = arith.constant 0 : index
    %84 = vector.load %arg6[%c3_64, %c0_65, %c0_66] : memref<9x128x128xbf16, #tpu.memory_space<vmem>>, vector<1x128x128xbf16>
    %85 = vector.shape_cast %84 : vector<1x128x128xbf16> to vector<128x128xbf16>
    %cst_67 = arith.constant dense<0.000000e+00> : vector<188x128xf32>
    %86 = tpu.matmul %83, %85, %cst_67 {dimension_numbers = #tpu.dot_dimension_numbers<[1], [0], [0], [1], [0, 0, 1, 1], [], []>} : vector<188x128xbf16>, vector<128x128xbf16>, vector<188x128xf32> -> vector<188x128xf32>
    %87 = arith.addf %82, %86 : vector<188x128xf32>
    %88 = vector.extract_strided_slice %68 {offsets = [17, 0], sizes = [188, 128], strides = [1, 1]} : vector<222x128xbf16> to vector<188x128xbf16>
    %c4_68 = arith.constant 4 : index
    %c0_69 = arith.constant 0 : index
    %c0_70 = arith.constant 0 : index
    %89 = vector.load %arg6[%c4_68, %c0_69, %c0_70] : memref<9x128x128xbf16, #tpu.memory_space<vmem>>, vector<1x128x128xbf16>
    %90 = vector.shape_cast %89 : vector<1x128x128xbf16> to vector<128x128xbf16>
    %cst_71 = arith.constant dense<0.000000e+00> : vector<188x128xf32>
    %91 = tpu.matmul %88, %90, %cst_71 {dimension_numbers = #tpu.dot_dimension_numbers<[1], [0], [0], [1], [0, 0, 1, 1], [], []>} : vector<188x128xbf16>, vector<128x128xbf16>, vector<188x128xf32> -> vector<188x128xf32>
    %92 = arith.addf %87, %91 : vector<188x128xf32>
    %93 = vector.extract_strided_slice %68 {offsets = [18, 0], sizes = [188, 128], strides = [1, 1]} : vector<222x128xbf16> to vector<188x128xbf16>
    %c5_72 = arith.constant 5 : index
    %c0_73 = arith.constant 0 : index
    %c0_74 = arith.constant 0 : index
    %94 = vector.load %arg6[%c5_72, %c0_73, %c0_74] : memref<9x128x128xbf16, #tpu.memory_space<vmem>>, vector<1x128x128xbf16>
    %95 = vector.shape_cast %94 : vector<1x128x128xbf16> to vector<128x128xbf16>
    %cst_75 = arith.constant dense<0.000000e+00> : vector<188x128xf32>
    %96 = tpu.matmul %93, %95, %cst_75 {dimension_numbers = #tpu.dot_dimension_numbers<[1], [0], [0], [1], [0, 0, 1, 1], [], []>} : vector<188x128xbf16>, vector<128x128xbf16>, vector<188x128xf32> -> vector<188x128xf32>
    %97 = arith.addf %92, %96 : vector<188x128xf32>
    %98 = vector.extract_strided_slice %68 {offsets = [32, 0], sizes = [188, 128], strides = [1, 1]} : vector<222x128xbf16> to vector<188x128xbf16>
    %c6_76 = arith.constant 6 : index
    %c0_77 = arith.constant 0 : index
    %c0_78 = arith.constant 0 : index
    %99 = vector.load %arg6[%c6_76, %c0_77, %c0_78] : memref<9x128x128xbf16, #tpu.memory_space<vmem>>, vector<1x128x128xbf16>
    %100 = vector.shape_cast %99 : vector<1x128x128xbf16> to vector<128x128xbf16>
    %cst_79 = arith.constant dense<0.000000e+00> : vector<188x128xf32>
    %101 = tpu.matmul %98, %100, %cst_79 {dimension_numbers = #tpu.dot_dimension_numbers<[1], [0], [0], [1], [0, 0, 1, 1], [], []>} : vector<188x128xbf16>, vector<128x128xbf16>, vector<188x128xf32> -> vector<188x128xf32>
    %102 = arith.addf %97, %101 : vector<188x128xf32>
    %103 = vector.extract_strided_slice %68 {offsets = [33, 0], sizes = [188, 128], strides = [1, 1]} : vector<222x128xbf16> to vector<188x128xbf16>
    %c7_80 = arith.constant 7 : index
    %c0_81 = arith.constant 0 : index
    %c0_82 = arith.constant 0 : index
    %104 = vector.load %arg6[%c7_80, %c0_81, %c0_82] : memref<9x128x128xbf16, #tpu.memory_space<vmem>>, vector<1x128x128xbf16>
    %105 = vector.shape_cast %104 : vector<1x128x128xbf16> to vector<128x128xbf16>
    %cst_83 = arith.constant dense<0.000000e+00> : vector<188x128xf32>
    %106 = tpu.matmul %103, %105, %cst_83 {dimension_numbers = #tpu.dot_dimension_numbers<[1], [0], [0], [1], [0, 0, 1, 1], [], []>} : vector<188x128xbf16>, vector<128x128xbf16>, vector<188x128xf32> -> vector<188x128xf32>
    %107 = arith.addf %102, %106 : vector<188x128xf32>
    %108 = vector.extract_strided_slice %68 {offsets = [34, 0], sizes = [188, 128], strides = [1, 1]} : vector<222x128xbf16> to vector<188x128xbf16>
    %c8_84 = arith.constant 8 : index
    %c0_85 = arith.constant 0 : index
    %c0_86 = arith.constant 0 : index
    %109 = vector.load %arg6[%c8_84, %c0_85, %c0_86] : memref<9x128x128xbf16, #tpu.memory_space<vmem>>, vector<1x128x128xbf16>
    %110 = vector.shape_cast %109 : vector<1x128x128xbf16> to vector<128x128xbf16>
    %cst_87 = arith.constant dense<0.000000e+00> : vector<188x128xf32>
    %111 = tpu.matmul %108, %110, %cst_87 {dimension_numbers = #tpu.dot_dimension_numbers<[1], [0], [0], [1], [0, 0, 1, 1], [], []>} : vector<188x128xbf16>, vector<128x128xbf16>, vector<188x128xf32> -> vector<188x128xf32>
    %112 = arith.addf %107, %111 : vector<188x128xf32>
    %c0_88 = arith.constant 0 : index
    %c0_89 = arith.constant 0 : index
    %113 = vector.load %arg7[%c0_88, %c0_89] : memref<1x128xf32, #tpu.memory_space<vmem>>, vector<1x128xf32>
    %114 = vector.broadcast %113 : vector<1x128xf32> to vector<188x128xf32>
    %115 = arith.addf %112, %114 : vector<188x128xf32>
    %cst_90 = arith.constant 0.000000e+00 : f32
    %116 = vector.broadcast %cst_90 : f32 to vector<188x128xf32>
    %117 = arith.maximumf %115, %116 : vector<188x128xf32>
    %c0_91 = arith.constant 0 : index
    %c0_92 = arith.constant 0 : index
    %c0_93 = arith.constant 0 : index
    %118 = vector.load %arg8[%c0_91, %c0_92, %c0_93] : memref<1x192x128xf32, #tpu.memory_space<vmem>>, vector<1x188x128xf32>
    %119 = vector.shape_cast %118 : vector<1x188x128xf32> to vector<188x128xf32>
    %120 = vector.shape_cast %117 : vector<188x128xf32> to vector<1x188x128xf32>
    tpu.vector_store %arg8[%c0_91, %c0_92, %c0_93], %120 {strides = array<i32>} : memref<1x192x128xf32, #tpu.memory_space<vmem>>, vector<1x188x128xf32>,
    %cst_94 = arith.constant 0.000000e+00 : f32
    %121 = vector.broadcast %cst_94 : f32 to vector<4x128xf32>
    %c0_95 = arith.constant 0 : index
    %c188 = arith.constant 188 : index
    %c0_96 = arith.constant 0 : index
    %122 = vector.load %arg8[%c0_95, %c188, %c0_96] : memref<1x192x128xf32, #tpu.memory_space<vmem>>, vector<1x4x128xf32>
    %123 = vector.shape_cast %122 : vector<1x4x128xf32> to vector<4x128xf32>
    %124 = vector.shape_cast %121 : vector<4x128xf32> to vector<1x4x128xf32>
    tpu.vector_store %arg8[%c0_95, %c188, %c0_96], %124 {strides = array<i32>} : memref<1x192x128xf32, #tpu.memory_space<vmem>>, vector<1x4x128xf32>,
    return
  }
  func.func @transform_0(%arg0: i32) -> (i32, i32, i32, i32) {
    %c0_i32 = arith.constant 0 : i32
    %c0_i32_0 = arith.constant 0 : i32
    %c0_i32_1 = arith.constant 0 : i32
    %c0_i32_2 = arith.constant 0 : i32
    return %arg0, %c0_i32, %c0_i32_0, %c0_i32_1 : i32, i32, i32, i32
  }
  func.func @transform_1(%arg0: i32) -> (i32, i32, i32, i32) {
    %c0_i32 = arith.constant 0 : i32
    %c0_i32_0 = arith.constant 0 : i32
    %c0_i32_1 = arith.constant 0 : i32
    %c0_i32_2 = arith.constant 0 : i32
    return %arg0, %c0_i32, %c0_i32_0, %c0_i32_1 : i32, i32, i32, i32
  }
  func.func @transform_2(%arg0: i32) -> (i32, i32) {
    %c0_i32 = arith.constant 0 : i32
    %c0_i32_0 = arith.constant 0 : i32
    %c0_i32_1 = arith.constant 0 : i32
    return %c0_i32, %c0_i32_0 : i32, i32
  }
  func.func @transform_3(%arg0: i32) -> (i32, i32, i32) {
    %c0_i32 = arith.constant 0 : i32
    %c0_i32_0 = arith.constant 0 : i32
    %c0_i32_1 = arith.constant 0 : i32
    %c0_i32_2 = arith.constant 0 : i32
    return %c0_i32, %c0_i32_0, %c0_i32_1 : i32, i32, i32
  }
  func.func @transform_4(%arg0: i32) -> (i32, i32) {
    %c0_i32 = arith.constant 0 : i32
    %c0_i32_0 = arith.constant 0 : i32
    %c0_i32_1 = arith.constant 0 : i32
    return %c0_i32, %c0_i32_0 : i32, i32
  }
  func.func @transform_5(%arg0: i32) -> (i32, i32, i32) {
    %c0_i32 = arith.constant 0 : i32
    %c0_i32_0 = arith.constant 0 : i32
    %c0_i32_1 = arith.constant 0 : i32
    %c0_i32_2 = arith.constant 0 : i32
    return %c0_i32, %c0_i32_0, %c0_i32_1 : i32, i32, i32
  }
  func.func @transform_6(%arg0: i32) -> (i32, i32) {
    %c0_i32 = arith.constant 0 : i32
    %c0_i32_0 = arith.constant 0 : i32
    %c0_i32_1 = arith.constant 0 : i32
    return %c0_i32, %c0_i32_0 : i32, i32
  }
  func.func @transform_7(%arg0: i32) -> (i32, i32, i32) {
    %c0_i32 = arith.constant 0 : i32
    %c0_i32_0 = arith.constant 0 : i32
    %c0_i32_1 = arith.constant 0 : i32
    return %arg0, %c0_i32, %c0_i32_0 : i32, i32, i32
  }
}

</mosaic_0001>

<llo_original>
// kernel: conv_up_forward.1
$region0: #{conv_up_forward.1}
  #allocation0 [shape = 'u32[]', space=smem, size = 0x4, offset = 0x4, fixed_abs, tag = 'smem constant byte address 0x4 - core index']
  #allocation1 [shape = 'u32[144,128]{1,0:T(1,128)}', space=vmem, size = 0x12000, scoped, tag = 'internal scratch']
  #allocation2 [shape = 'bf16[8,2,16,128]{3,2,1,0:T(8,128)(2,1)}', space=vmem, size = 0x10000, scoped, tag = 'scratch operand']
  %s0 = inlined_call_operand.vmem [shape: bf16[2,8,8,4], index: 0, kind: input, shape index: {}]
  %s1 = inlined_call_operand.vmem [shape: bf16[2,16,16,128], index: 1, kind: input, shape index: {}]
  %s2 = inlined_call_operand.vmem [shape: bf16[4,512], index: 2, kind: input, shape index: {}]
  %s3 = inlined_call_operand.vmem [shape: bf16[9,256,128], index: 3, kind: input, shape index: {}]
  %s4 = inlined_call_operand.vmem [shape: f32[1,128], index: 4, kind: input, shape index: {}]
  %s5 = inlined_call_operand.vmem [shape: bf16[9,128,128], index: 5, kind: input, shape index: {}]
  %s6 = inlined_call_operand.vmem [shape: f32[1,128], index: 6, kind: input, shape index: {}]
  %s7 = inlined_call_operand.vmem [shape: f32[2,192,128], index: 7, kind: output, shape index: {}]
  %s8 = sld [smem:[#allocation0]]
  $region61: #{conv_up_forward.1} parent=0
    _
  %s10 = ssub.s32 1, %s8
  %s11 = scalar_select 0, %s10, %s8
  loop: start=0, step=1, limit=4
  $region2: #{conv_up_forward.1} parent=0 // loop_pre_header
    _
  $region3: #{conv_up_forward.1} parent=0 // loop_header
    %s13 = sphi 0, %s17
    %p14 = scmp.ge.s32.totalorder %s13, 4
    %s23 = sphi 0, %s25
    %s26 = sphi 0, %s23
    %s27 = sphi 0, %s26
    %s43 = sphi 0, %s27
    %s49 = sphi 0, %s51
    %s52 = sphi 0, %s49
    %s53 = sphi 0, %s52
    %s69 = sphi 0, %s53
    %s73 = sphi 0, %s73
    %s75 = sphi 0, %s73
    %s76 = sphi 0, %s75
    %s90 = sphi 0, %s76
    %s94 = sphi 0, %s94
    %s96 = sphi 0, %s94
    %s97 = sphi 0, %s96
    %s111 = sphi 0, %s97
    %s115 = sphi 0, %s115
    %s117 = sphi 0, %s115
    %s118 = sphi 0, %s117
    %s132 = sphi 0, %s118
    %s136 = sphi 0, %s136
    %s138 = sphi 0, %s136
    %s139 = sphi 0, %s138
    %s153 = sphi 0, %s139
    %s157 = sphi 0, %s157
    %s159 = sphi 0, %s157
    %s160 = sphi 0, %s159
    %s174 = sphi 0, %s160
    %s180 = sphi 0, %s182
    %s183 = sphi 0, %s180
    %s184 = sphi 0, %s183
    %s200 = sphi 0, %s184
  $region4: #{conv_up_forward.1} parent=0 // loop_header_branch
    %16 = sbr.rel (%p14) target = $region8
  $region5: #{conv_up_forward.1} parent=0 // loop_body
    %s18 = ssub.s32 %s13, 1
    %s19 = ssub.s32 %s13, 2
    %s20 = sadd.s32 %s13, 1
    %s21 = ssub.s32 %s13, %s20
    %p22 = scmp.eq.s32.totalorder %s21, 0
    %s24 = sadd.s32 %s23, 1
    %s25 = scalar_select %p22, %s23, %s24
    %p28 = pneg %p22
    %p29 = scmp.eq.s32.totalorder %s13, 1
    %p30 = por %p28, %p29
    %p31 = scmp.ne.s32.totalorder %s23, %s26
    %p32 = scmp.eq.s32.totalorder %s13, 0
    %p33 = por %p31, %p32
    %p34 = scmp.ne.s32.totalorder %s23, %s26
    %p35 = scmp.eq.s32.totalorder %s18, 1
    %p36 = por %p34, %p35
    %p37 = scmp.ne.s32.totalorder %s26, %s27
    %p38 = scmp.eq.s32.totalorder %s18, 0
    %p39 = por %p37, %p38
    %p40 = scmp.ne.s32.totalorder %s26, %s27
    %p41 = scmp.eq.s32.totalorder %s19, 1
    %p42 = por %p40, %p41
    %p44 = scmp.ne.s32.totalorder %s27, %s43
    %p45 = scmp.eq.s32.totalorder %s19, 0
    %p46 = por %p44, %p45
    %s47 = ssub.s32 %s13, %s20
    %p48 = scmp.eq.s32.totalorder %s47, 0
    %s50 = sadd.s32 %s49, 1
    %s51 = scalar_select %p48, %s49, %s50
    %p54 = pneg %p48
    %p55 = scmp.eq.s32.totalorder %s13, 1
    %p56 = por %p54, %p55
    %p57 = scmp.ne.s32.totalorder %s49, %s52
    %p58 = scmp.eq.s32.totalorder %s13, 0
    %p59 = por %p57, %p58
    %p60 = scmp.ne.s32.totalorder %s49, %s52
    %p61 = scmp.eq.s32.totalorder %s18, 1
    %p62 = por %p60, %p61
    %p63 = scmp.ne.s32.totalorder %s52, %s53
    %p64 = scmp.eq.s32.totalorder %s18, 0
    %p65 = por %p63, %p64
    %p66 = scmp.ne.s32.totalorder %s52, %s53
    %p67 = scmp.eq.s32.totalorder %s19, 1
    %p68 = por %p66, %p67
    %p70 = scmp.ne.s32.totalorder %s53, %s69
    %p71 = scmp.eq.s32.totalorder %s19, 0
    %p72 = por %p70, %p71
    %s74 = sadd.s32 %s73, 1
    %p77 = scmp.eq.s32.totalorder %s13, 1
    %p78 = scmp.ne.s32.totalorder %s73, %s75
    %p79 = scmp.eq.s32.totalorder %s13, 0
    %p80 = por %p78, %p79
    %p81 = scmp.ne.s32.totalorder %s73, %s75
    %p82 = scmp.eq.s32.totalorder %s18, 1
    %p83 = por %p81, %p82
    %p84 = scmp.ne.s32.totalorder %s75, %s76
    %p85 = scmp.eq.s32.totalorder %s18, 0
    %p86 = por %p84, %p85
    %p87 = scmp.ne.s32.totalorder %s75, %s76
    %p88 = scmp.eq.s32.totalorder %s19, 1
    %p89 = por %p87, %p88
    %p91 = scmp.ne.s32.totalorder %s76, %s90
    %p92 = scmp.eq.s32.totalorder %s19, 0
    %p93 = por %p91, %p92
    %s95 = sadd.s32 %s94, 1
    %p98 = scmp.eq.s32.totalorder %s13, 1
    %p99 = scmp.ne.s32.totalorder %s94, %s96
    %p100 = scmp.eq.s32.totalorder %s13, 0
    %p101 = por %p99, %p100
    %p102 = scmp.ne.s32.totalorder %s94, %s96
    %p103 = scmp.eq.s32.totalorder %s18, 1
    %p104 = por %p102, %p103
    %p105 = scmp.ne.s32.totalorder %s96, %s97
    %p106 = scmp.eq.s32.totalorder %s18, 0
    %p107 = por %p105, %p106
    %p108 = scmp.ne.s32.totalorder %s96, %s97
    %p109 = scmp.eq.s32.totalorder %s19, 1
    %p110 = por %p108, %p109
    %p112 = scmp.ne.s32.totalorder %s97, %s111
    %p113 = scmp.eq.s32.totalorder %s19, 0
    %p114 = por %p112, %p113
    %s116 = sadd.s32 %s115, 1
    %p119 = scmp.eq.s32.totalorder %s13, 1
    %p120 = scmp.ne.s32.totalorder %s115, %s117
    %p121 = scmp.eq.s32.totalorder %s13, 0
    %p122 = por %p120, %p121
    %p123 = scmp.ne.s32.totalorder %s115, %s117
    %p124 = scmp.eq.s32.totalorder %s18, 1
    %p125 = por %p123, %p124
    %p126 = scmp.ne.s32.totalorder %s117, %s118
    %p127 = scmp.eq.s32.totalorder %s18, 0
    %p128 = por %p126, %p127
    %p129 = scmp.ne.s32.totalorder %s117, %s118
    %p130 = scmp.eq.s32.totalorder %s19, 1
    %p131 = por %p129, %p130
    %p133 = scmp.ne.s32.totalorder %s118, %s132
    %p134 = scmp.eq.s32.totalorder %s19, 0
    %p135 = por %p133, %p134
    %s137 = sadd.s32 %s136, 1
    %p140 = scmp.eq.s32.totalorder %s13, 1
    %p141 = scmp.ne.s32.totalorder %s136, %s138
    %p142 = scmp.eq.s32.totalorder %s13, 0
    %p143 = por %p141, %p142
    %p144 = scmp.ne.s32.totalorder %s136, %s138
    %p145 = scmp.eq.s32.totalorder %s18, 1
    %p146 = por %p144, %p145
    %p147 = scmp.ne.s32.totalorder %s138, %s139
    %p148 = scmp.eq.s32.totalorder %s18, 0
    %p149 = por %p147, %p148
    %p150 = scmp.ne.s32.totalorder %s138, %s139
    %p151 = scmp.eq.s32.totalorder %s19, 1
    %p152 = por %p150, %p151
    %p154 = scmp.ne.s32.totalorder %s139, %s153
    %p155 = scmp.eq.s32.totalorder %s19, 0
    %p156 = por %p154, %p155
    %s158 = sadd.s32 %s157, 1
    %p161 = scmp.eq.s32.totalorder %s13, 1
    %p162 = scmp.ne.s32.totalorder %s157, %s159
    %p163 = scmp.eq.s32.totalorder %s13, 0
    %p164 = por %p162, %p163
    %p165 = scmp.ne.s32.totalorder %s157, %s159
    %p166 = scmp.eq.s32.totalorder %s18, 1
    %p167 = por %p165, %p166
    %p168 = scmp.ne.s32.totalorder %s159, %s160
    %p169 = scmp.eq.s32.totalorder %s18, 0
    %p170 = por %p168, %p169
    %p171 = scmp.ne.s32.totalorder %s159, %s160
    %p172 = scmp.eq.s32.totalorder %s19, 1
    %p173 = por %p171, %p172
    %p175 = scmp.ne.s32.totalorder %s160, %s174
    %p176 = scmp.eq.s32.totalorder %s19, 0
    %p177 = por %p175, %p176
    %s178 = ssub.s32 %s13, %s20
    %p179 = scmp.eq.s32.totalorder %s178, 0
    %s181 = sadd.s32 %s180, 1
    %s182 = scalar_select %p179, %s180, %s181
    %p185 = pneg %p179
    %p186 = scmp.eq.s32.totalorder %s13, 1
    %p187 = por %p185, %p186
    %p188 = scmp.ne.s32.totalorder %s180, %s183
    %p189 = scmp.eq.s32.totalorder %s13, 0
    %p190 = por %p188, %p189
    %p191 = scmp.ne.s32.totalorder %s180, %s183
    %p192 = scmp.eq.s32.totalorder %s18, 1
    %p193 = por %p191, %p192
    %p194 = scmp.ne.s32.totalorder %s183, %s184
    %p195 = scmp.eq.s32.totalorder %s18, 0
    %p196 = por %p194, %p195
    %p197 = scmp.ne.s32.totalorder %s183, %s184
    %p198 = scmp.eq.s32.totalorder %s19, 1
    %p199 = por %p197, %p198
    %p201 = scmp.ne.s32.totalorder %s184, %s200
    %p202 = scmp.eq.s32.totalorder %s19, 0
    %p203 = por %p201, %p202
    %p204 = scmp.le.s32.totalorder 1, %s13
    %p205 = scmp.lt.s32.totalorder %s13, 3
    %p206 = pnand %p204, %p205
    %p207 = pneg %p206
    // Predicated region
    $region9: #{conv_up_forward.1} parent=5 // pred_check
      _
    $region10: #{conv_up_forward.1} parent=5 // pred_check_branch
      %209 = sbr.rel (%p206) target = $region12
    $region11: #{conv_up_forward.1} parent=5 // pred_region
      %s210 = ssub.s32 %s13, 1
      // Predicated region
      $region13: #{conv_up_forward.1} parent=11 // pred_check
        %p211 = pneg %p86
      $region14: #{conv_up_forward.1} parent=11 // pred_check_branch
        %213 = sbr.rel (%p211) target = $region16
      $region15: #{conv_up_forward.1} parent=11 // pred_region
        _
      $region16: #{conv_up_forward.1} parent=11 // pred_fallthru
        _
      // Predicated region
      $region17: #{conv_up_forward.1} parent=11 // pred_check
        %p214 = pneg %p107
      $region18: #{conv_up_forward.1} parent=11 // pred_check_branch
        %216 = sbr.rel (%p214) target = $region20
      $region19: #{conv_up_forward.1} parent=11 // pred_region
        _
      $region20: #{conv_up_forward.1} parent=11 // pred_fallthru
        _
      // Predicated region
      $region21: #{conv_up_forward.1} parent=11 // pred_check
        %p217 = pneg %p128
      $region22: #{conv_up_forward.1} parent=11 // pred_check_branch
        %219 = sbr.rel (%p217) target = $region24
      $region23: #{conv_up_forward.1} parent=11 // pred_region
        _
      $region24: #{conv_up_forward.1} parent=11 // pred_fallthru
        _
      // Predicated region
      $region25: #{conv_up_forward.1} parent=11 // pred_check
        %p220 = pneg %p149
      $region26: #{conv_up_forward.1} parent=11 // pred_check_branch
        %222 = sbr.rel (%p220) target = $region28
      $region27: #{conv_up_forward.1} parent=11 // pred_region
        _
      $region28: #{conv_up_forward.1} parent=11 // pred_fallthru
        _
      // Predicated region
      $region29: #{conv_up_forward.1} parent=11 // pred_check
        %p223 = pneg %p170
      $region30: #{conv_up_forward.1} parent=11 // pred_check_branch
        %225 = sbr.rel (%p223) target = $region32
      $region31: #{conv_up_forward.1} parent=11 // pred_region
        _
      $region32: #{conv_up_forward.1} parent=11 // pred_fallthru
        _
    $region12: #{conv_up_forward.1} parent=5 // pred_fallthru
      _
    %p226 = scmp.lt.s32.totalorder %s13, 2
    // Predicated region
    $region33: #{conv_up_forward.1} parent=5 // pred_check
      %p227 = pneg %p226
    $region34: #{conv_up_forward.1} parent=5 // pred_check_branch
      %229 = sbr.rel (%p227) target = $region36
    $region35: #{conv_up_forward.1} parent=5 // pred_region
      // Predicated region
      $region37: #{conv_up_forward.1} parent=35 // pred_check
        %p230 = pneg %p33
      $region38: #{conv_up_forward.1} parent=35 // pred_check_branch
        %232 = sbr.rel (%p230) target = $region40
      $region39: #{conv_up_forward.1} parent=35 // pred_region
        %p233 = scmp.lt.s32.totalorder %s13, 1
        %s234 = scalar_select %p233, %s13, 1
        %s235 = smul.addr %s234, 8
        %s236 = smul.addr %s235, 4
        %s237 = scalar_lea.vmem %s0, %s236
      $region40: #{conv_up_forward.1} parent=35 // pred_fallthru
        _
      // Predicated region
      $region41: #{conv_up_forward.1} parent=35 // pred_check
        %p238 = pneg %p59
      $region42: #{conv_up_forward.1} parent=35 // pred_check_branch
        %240 = sbr.rel (%p238) target = $region44
      $region43: #{conv_up_forward.1} parent=35 // pred_region
        %p241 = scmp.lt.s32.totalorder %s13, 1
        %s242 = scalar_select %p241, %s13, 1
        %s243 = smul.addr %s242, 32
        %s244 = smul.addr %s243, 4
        %s245 = scalar_lea.vmem %s1, %s244
      $region44: #{conv_up_forward.1} parent=35 // pred_fallthru
        _
    $region36: #{conv_up_forward.1} parent=5 // pred_fallthru
      _
    %p246 = scmp.le.s32.totalorder 1, %s13
    %p247 = scmp.lt.s32.totalorder %s13, 3
    %p248 = pnand %p246, %p247
    %p249 = pneg %p248
    // Predicated region
    $region45: #{conv_up_forward.1} parent=5 // pred_check
      _
    $region46: #{conv_up_forward.1} parent=5 // pred_check_branch
      %251 = sbr.rel (%p248) target = $region48
    $region47: #{conv_up_forward.1} parent=5 // pred_region
      %s252 = ssub.s32 %s13, 1
      %p253 = scmp.lt.s32.totalorder %s18, 1
      %s254 = scalar_select %p253, %s18, 1
      %s255 = smul.addr %s254, 8
      %s256 = smul.addr %s255, 4
      %s257 = scalar_lea.vmem %s0, %s256
      %p258 = pneg %p39
      %p259 = pneg %p36
      %p260 = scmp.lt.s32.totalorder %s18, 1
      %s261 = scalar_select %p260, %s18, 1
      %s262 = smul.addr %s261, 32
      %s263 = smul.addr %s262, 4
      %s264 = scalar_lea.vmem %s1, %s263
      %p265 = pneg %p65
      %p266 = pneg %p62
      %p267 = pneg %p86
      %p268 = pneg %p83
      %p269 = pneg %p107
      %p270 = pneg %p104
      %p271 = pneg %p128
      %p272 = pneg %p125
      %p273 = pneg %p149
      %p274 = pneg %p146
      %p275 = pneg %p170
      %p276 = pneg %p167
      %p277 = pneg %p196
      %p278 = pneg %p193
      %p279 = scmp.lt.s32.totalorder %s18, 1
      %s280 = scalar_select %p279, %s18, 1
      %s281 = smul.addr %s280, 24
      %s282 = smul.addr %s281, 8
      %s283 = scalar_lea.vmem %s7, %s282
      %p284 = scmp.lt.s32.totalorder %s18, 1
      %s285 = scalar_select %p284, %s18, 1
      %s286 = smul.addr %s285, 8
      %s287 = smul.addr %s286, 4
      %s288 = scalar_lea.vmem %s0, %s287
      %p289 = scmp.lt.s32.totalorder %s18, 1
      %s290 = scalar_select %p289, %s18, 1
      %s291 = smul.addr %s290, 32
      %s292 = smul.addr %s291, 4
      %s293 = scalar_lea.vmem %s1, %s292
      %p294 = scmp.lt.s32.totalorder %s18, 1
      %s295 = scalar_select %p294, %s18, 1
      %s296 = smul.addr %s295, 24
      %s297 = smul.addr %s296, 8
      %s298 = scalar_lea.vmem %s7, %s297
      %v300 = vld [vmem:[%s288] sm:$0xf]
      %v301 = vld [vmem:[%s288 + $0x4] sm:$0xf]
      %v302 = vld [vmem:[%s288 + $0x8] sm:$0xf]
      %v303 = vld [vmem:[%s288 + $0xc] sm:$0xf]
      %v304 = vld [vmem:[%s288 + $0x10] sm:$0xf]
      %v305 = vld [vmem:[%s288 + $0x14] sm:$0xf]
      %v306 = vld [vmem:[%s288 + $0x18] sm:$0xf]
      %v307 = vld [vmem:[%s288 + $0x1c] sm:$0xf]
      %v308 = vld [vmem:[%s2] sm:$0xff]
      %v317 = vunpack.c.l.b16 %v300
      %v318 = vunpack.c.l.b16 %v301
      %v319 = vunpack.c.l.b16 %v302
      %v320 = vunpack.c.l.b16 %v303
      %v321 = vunpack.c.l.b16 %v304
      %v322 = vunpack.c.l.b16 %v305
      %v323 = vunpack.c.l.b16 %v306
      %v324 = vunpack.c.l.b16 %v307
      %v325 = vpack.c.b16 %v318, %v317
      %v326 = vpack.c.b16 %v320, %v319
      %v327 = vpack.c.b16 %v322, %v321
      %v328 = vpack.c.b16 %v324, %v323
      %v330 = vcombine.high %v308, %v308
      %v332 = vunpack.c.l.s4 1983009808
      %v333 = vunpack.c.0.s8 %v332
      %v334 = vlaneseq
      %v335 = vshrl.u32 %v334, 7
      %v336 = vsub.s32 %v333, %v335
      %v337 = vrot.slane %v308, %v336
      %v339 = vunpack.c.l.s4 1983009808
      %v340 = vunpack.c.0.s8 %v339
      %v341 = vlaneseq
      %v342 = vshrl.u32 %v341, 7
      %v343 = vsub.s32 %v340, %v342
      %v344 = vrot.slane %v330, %v343
      %v345 = vcombine.high %v337, %v337
      %v346 = vcombine.high %v344, %v344
      %vm347 = vcmask 31744
      %v349 = vsel %vm347, %v325, 0
      %v352 = vsel %vm347, %v326, 0
      %v355 = vsel %vm347, %v327, 0
      %v358 = vsel %vm347, %v328, 0
      %vm360 = vcmask 1041408
      %v362 = vsel %vm360, %v337, 0
      %v365 = vsel %vm360, %v345, 0
      %v368 = vsel %vm360, %v344, 0
      %v371 = vsel %vm360, %v346, 0
      %373 = vmatprep.subr.bf16.mxu0 0
      %374 = vmatpush1.bf16.msra.mxu0 0
      %375 = vmatprep.subr.bf16.mxu0 0
      %376 = vmatpush1.bf16.msra.mxu0 0
      %377 = vmatprep.subr.bf16.mxu0 0
      %378 = vmatpush1.bf16.msra.mxu0 0
      %379 = vmatprep.subr.bf16.mxu0 0
      %380 = vmatpush1.bf16.msra.mxu0 0
      %381 = vmatprep.subr.bf16.mxu0 0
      %382 = vmatpush1.bf16.msra.mxu0 0
      %383 = vmatprep.subr.bf16.mxu0 0
      %384 = vmatpush1.bf16.msra.mxu0 0
      %385 = vmatprep.subr.bf16.mxu0 0
      %386 = vmatpush1.bf16.msra.mxu0 0
      %387 = vmatprep.subr.bf16.mxu0 %v365
      %388 = vmatpush1.bf16.msra.mxu0 %v362
      %389 = vmatprep.subr.bf16.mxu0 0
      %390 = vmatpush2.bf16.msra.mxu0 0
      %391 = vmatprep.subr.bf16.mxu0 0
      %392 = vmatpush2.bf16.msra.mxu0 0
      %393 = vmatprep.subr.bf16.mxu0 0
      %394 = vmatpush2.bf16.msra.mxu0 0
      %395 = vmatprep.subr.bf16.mxu0 0
      %396 = vmatpush2.bf16.msra.mxu0 0
      %397 = vmatprep.subr.bf16.mxu0 0
      %398 = vmatpush2.bf16.msra.mxu0 0
      %399 = vmatprep.subr.bf16.mxu0 0
      %400 = vmatpush2.bf16.msra.mxu0 0
      %401 = vmatprep.subr.bf16.mxu0 0
      %402 = vmatpush2.bf16.msra.mxu0 0
      %403 = vmatprep.subr.bf16.mxu0 0
      %404 = vmatpush2.bf16.msra.mxu0 0
      %405 = vmatprep.mubr.bf16.mxu0 0
      %406 = vmatmul.mubr.bf16.gmra.mxu0 %v349
      %v407 = vpop.f32.mrf.mxu0
      %v408 = vadd.f32 0.0, %v407
      %v409 = vpop.f32.mrf.mxu0
      %v410 = vadd.f32 0.0, %v409
      %v411 = vpop.f32.mrf.mxu0
      %v412 = vadd.f32 0.0, %v411
      %v413 = vpop.f32.mrf.mxu0
      %v414 = vadd.f32 0.0, %v413
      %415 = vmatprep.mubr.bf16.mxu0 0
      %416 = vmatmul.mubr.bf16.gmra.mxu0 %v352
      %v417 = vpop.f32.mrf.mxu0
      %v418 = vadd.f32 0.0, %v417
      %v419 = vpop.f32.mrf.mxu0
      %v420 = vadd.f32 0.0, %v419
      %v421 = vpop.f32.mrf.mxu0
      %v422 = vadd.f32 0.0, %v421
      %v423 = vpop.f32.mrf.mxu0
      %v424 = vadd.f32 0.0, %v423
      %425 = vmatprep.mubr.bf16.mxu0 0
      %426 = vmatmul.mubr.bf16.gmra.mxu0 %v355
      %v427 = vpop.f32.mrf.mxu0
      %v428 = vadd.f32 0.0, %v427
      %v429 = vpop.f32.mrf.mxu0
      %v430 = vadd.f32 0.0, %v429
      %v431 = vpop.f32.mrf.mxu0
      %v432 = vadd.f32 0.0, %v431
      %v433 = vpop.f32.mrf.mxu0
      %v434 = vadd.f32 0.0, %v433
      %435 = vmatprep.mubr.bf16.mxu0 0
      %436 = vmatmul.mubr.bf16.gmra.mxu0 %v358
      %v437 = vpop.f32.mrf.mxu0
      %v438 = vadd.f32 0.0, %v437
      %v439 = vpop.f32.mrf.mxu0
      %v440 = vadd.f32 0.0, %v439
      %v441 = vpop.f32.mrf.mxu0
      %v442 = vadd.f32 0.0, %v441
      %v443 = vpop.f32.mrf.mxu0
      %v444 = vadd.f32 0.0, %v443
      %445 = vdwg.mxu0
      %446 = vmatprep.subr.bf16.mxu0 0
      %447 = vmatpush1.bf16.msra.mxu0 0
      %448 = vmatprep.subr.bf16.mxu0 0
      %449 = vmatpush1.bf16.msra.mxu0 0
      %450 = vmatprep.subr.bf16.mxu0 0
      %451 = vmatpush1.bf16.msra.mxu0 0
      %452 = vmatprep.subr.bf16.mxu0 0
      %453 = vmatpush1.bf16.msra.mxu0 0
      %454 = vmatprep.subr.bf16.mxu0 0
      %455 = vmatpush1.bf16.msra.mxu0 0
      %456 = vmatprep.subr.bf16.mxu0 0
      %457 = vmatpush1.bf16.msra.mxu0 0
      %458 = vmatprep.subr.bf16.mxu0 0
      %459 = vmatpush1.bf16.msra.mxu0 0
      %460 = vmatprep.subr.bf16.mxu0 %v371
      %461 = vmatpush1.bf16.msra.mxu0 %v368
      %462 = vmatprep.subr.bf16.mxu0 0
      %463 = vmatpush2.bf16.msra.mxu0 0
      %464 = vmatprep.subr.bf16.mxu0 0
      %465 = vmatpush2.bf16.msra.mxu0 0
      %466 = vmatprep.subr.bf16.mxu0 0
      %467 = vmatpush2.bf16.msra.mxu0 0
      %468 = vmatprep.subr.bf16.mxu0 0
      %469 = vmatpush2.bf16.msra.mxu0 0
      %470 = vmatprep.subr.bf16.mxu0 0
      %471 = vmatpush2.bf16.msra.mxu0 0
      %472 = vmatprep.subr.bf16.mxu0 0
      %473 = vmatpush2.bf16.msra.mxu0 0
      %474 = vmatprep.subr.bf16.mxu0 0
      %475 = vmatpush2.bf16.msra.mxu0 0
      %476 = vmatprep.subr.bf16.mxu0 0
      %477 = vmatpush2.bf16.msra.mxu0 0
      %478 = vmatprep.mubr.bf16.mxu0 0
      %479 = vmatmul.mubr.bf16.gmra.mxu0 %v349
      %v480 = vpop.f32.mrf.mxu0
      %v481 = vadd.f32 0.0, %v480
      %v482 = vpop.f32.mrf.mxu0
      %v483 = vadd.f32 0.0, %v482
      %v484 = vpop.f32.mrf.mxu0
      %v485 = vadd.f32 0.0, %v484
      %v486 = vpop.f32.mrf.mxu0
      %v487 = vadd.f32 0.0, %v486
      %488 = vmatprep.mubr.bf16.mxu0 0
      %489 = vmatmul.mubr.bf16.gmra.mxu0 %v352
      %v490 = vpop.f32.mrf.mxu0
      %v491 = vadd.f32 0.0, %v490
      %v492 = vpop.f32.mrf.mxu0
      %v493 = vadd.f32 0.0, %v492
      %v494 = vpop.f32.mrf.mxu0
      %v495 = vadd.f32 0.0, %v494
      %v496 = vpop.f32.mrf.mxu0
      %v497 = vadd.f32 0.0, %v496
      %498 = vmatprep.mubr.bf16.mxu0 0
      %499 = vmatmul.mubr.bf16.gmra.mxu0 %v355
      %v500 = vpop.f32.mrf.mxu0
      %v501 = vadd.f32 0.0, %v500
      %v502 = vpop.f32.mrf.mxu0
      %v503 = vadd.f32 0.0, %v502
      %v504 = vpop.f32.mrf.mxu0
      %v505 = vadd.f32 0.0, %v504
      %v506 = vpop.f32.mrf.mxu0
      %v507 = vadd.f32 0.0, %v506
      %508 = vmatprep.mubr.bf16.mxu0 0
      %509 = vmatmul.mubr.bf16.gmra.mxu0 %v358
      %v510 = vpop.f32.mrf.mxu0
      %v511 = vadd.f32 0.0, %v510
      %v512 = vpop.f32.mrf.mxu0
      %v513 = vadd.f32 0.0, %v512
      %v514 = vpop.f32.mrf.mxu0
      %v515 = vadd.f32 0.0, %v514
      %v516 = vpop.f32.mrf.mxu0
      %v517 = vadd.f32 0.0, %v516
      %518 = vdwg.mxu0
      %v535 = vcombine.low %v408, %v410
      %v536 = vcombine.high %v408, %v410
      %v537 = vcombine.low %v412, %v414
      %v538 = vcombine.high %v412, %v414
      %v539 = vcombine.low %v418, %v420
      %v540 = vcombine.high %v418, %v420
      %v541 = vcombine.low %v422, %v424
      %v542 = vcombine.high %v422, %v424
      %v543 = vcombine.low %v428, %v430
      %v544 = vcombine.high %v428, %v430
      %v545 = vcombine.low %v432, %v434
      %v546 = vcombine.high %v432, %v434
      %v547 = vcombine.low %v438, %v440
      %v548 = vcombine.high %v438, %v440
      %v549 = vcombine.low %v442, %v444
      %v550 = vcombine.high %v442, %v444
      %v568 = vunpack.c.l.s4 1935823168
      %v569 = vunpack.c.0.s8 %v568
      %v570 = vlaneseq
      %v571 = vshrl.u32 %v570, 7
      %v572 = vsub.s32 %v569, %v571
      %v573 = vrot.slane %v535, %v572
      %v575 = vunpack.c.l.s4 1935823168
      %v576 = vunpack.c.0.s8 %v575
      %v577 = vlaneseq
      %v578 = vshrl.u32 %v577, 7
      %v579 = vsub.s32 %v576, %v578
      %v580 = vrot.slane %v536, %v579
      %v582 = vunpack.c.l.s4 1935823168
      %v583 = vunpack.c.0.s8 %v582
      %v584 = vlaneseq
      %v585 = vshrl.u32 %v584, 7
      %v586 = vsub.s32 %v583, %v585
      %v587 = vrot.slane %v537, %v586
      %v589 = vunpack.c.l.s4 1935823168
      %v590 = vunpack.c.0.s8 %v589
      %v591 = vlaneseq
      %v592 = vshrl.u32 %v591, 7
      %v593 = vsub.s32 %v590, %v592
      %v594 = vrot.slane %v538, %v593
      %v596 = vunpack.c.l.s4 1935823168
      %v597 = vunpack.c.0.s8 %v596
      %v598 = vlaneseq
      %v599 = vshrl.u32 %v598, 7
      %v600 = vsub.s32 %v597, %v599
      %v601 = vrot.slane %v539, %v600
      %v603 = vunpack.c.l.s4 1935823168
      %v604 = vunpack.c.0.s8 %v603
      %v605 = vlaneseq
      %v606 = vshrl.u32 %v605, 7
      %v607 = vsub.s32 %v604, %v606
      %v608 = vrot.slane %v540, %v607
      %v610 = vunpack.c.l.s4 1935823168
      %v611 = vunpack.c.0.s8 %v610
      %v612 = vlaneseq
      %v613 = vshrl.u32 %v612, 7
      %v614 = vsub.s32 %v611, %v613
      %v615 = vrot.slane %v541, %v614
      %v617 = vunpack.c.l.s4 1935823168
      %v618 = vunpack.c.0.s8 %v617
      %v619 = vlaneseq
      %v620 = vshrl.u32 %v619, 7
      %v621 = vsub.s32 %v618, %v620
      %v622 = vrot.slane %v542, %v621
      %v624 = vunpack.c.l.s4 1935823168
      %v625 = vunpack.c.0.s8 %v624
      %v626 = vlaneseq
      %v627 = vshrl.u32 %v626, 7
      %v628 = vsub.s32 %v625, %v627
      %v629 = vrot.slane %v543, %v628
      %v631 = vunpack.c.l.s4 1935823168
      %v632 = vunpack.c.0.s8 %v631
      %v633 = vlaneseq
      %v634 = vshrl.u32 %v633, 7
      %v635 = vsub.s32 %v632, %v634
      %v636 = vrot.slane %v544, %v635
      %v638 = vunpack.c.l.s4 1935823168
      %v639 = vunpack.c.0.s8 %v638
      %v640 = vlaneseq
      %v641 = vshrl.u32 %v640, 7
      %v642 = vsub.s32 %v639, %v641
      %v643 = vrot.slane %v545, %v642
      %v645 = vunpack.c.l.s4 1935823168
      %v646 = vunpack.c.0.s8 %v645
      %v647 = vlaneseq
      %v648 = vshrl.u32 %v647, 7
      %v649 = vsub.s32 %v646, %v648
      %v650 = vrot.slane %v546, %v649
      %v652 = vunpack.c.l.s4 1935823168
      %v653 = vunpack.c.0.s8 %v652
      %v654 = vlaneseq
      %v655 = vshrl.u32 %v654, 7
      %v656 = vsub.s32 %v653, %v655
      %v657 = vrot.slane %v547, %v656
      %v659 = vunpack.c.l.s4 1935823168
      %v660 = vunpack.c.0.s8 %v659
      %v661 = vlaneseq
      %v662 = vshrl.u32 %v661, 7
      %v663 = vsub.s32 %v660, %v662
      %v664 = vrot.slane %v548, %v663
      %v666 = vunpack.c.l.s4 1935823168
      %v667 = vunpack.c.0.s8 %v666
      %v668 = vlaneseq
      %v669 = vshrl.u32 %v668, 7
      %v670 = vsub.s32 %v667, %v669
      %v671 = vrot.slane %v549, %v670
      %v673 = vunpack.c.l.s4 1935823168
      %v674 = vunpack.c.0.s8 %v673
      %v675 = vlaneseq
      %v676 = vshrl.u32 %v675, 7
      %v677 = vsub.s32 %v674, %v676
      %v678 = vrot.slane %v550, %v677
      %v679 = vpack.c.bf16 %v580, %v573
      %v680 = vpack.c.bf16 %v594, %v587
      %v681 = vpack.c.bf16 %v608, %v601
      %v682 = vpack.c.bf16 %v622, %v615
      %v683 = vpack.c.bf16 %v636, %v629
      %v684 = vpack.c.bf16 %v650, %v643
      %v685 = vpack.c.bf16 %v664, %v657
      %v686 = vpack.c.bf16 %v678, %v671
      %v695 = vunpack.c.l.b16 %v679
      %v696 = vunpack.c.h.b16 %v679
      %v697 = vunpack.c.l.b16 %v680
      %v698 = vunpack.c.h.b16 %v680
      %v699 = vunpack.c.l.b16 %v681
      %v700 = vunpack.c.h.b16 %v681
      %v701 = vunpack.c.l.b16 %v682
      %v702 = vunpack.c.h.b16 %v682
      %v703 = vunpack.c.l.b16 %v683
      %v704 = vunpack.c.h.b16 %v683
      %v705 = vunpack.c.l.b16 %v684
      %v706 = vunpack.c.h.b16 %v684
      %v707 = vunpack.c.l.b16 %v685
      %v708 = vunpack.c.h.b16 %v685
      %v709 = vunpack.c.l.b16 %v686
      %v710 = vunpack.c.h.b16 %v686
      %v711 = vpack.c.b16 %v695, %v695
      %v712 = vpack.c.b16 %v696, %v696
      %v713 = vpack.c.b16 %v697, %v697
      %v714 = vpack.c.b16 %v698, %v698
      %v715 = vpack.c.b16 %v699, %v699
      %v716 = vpack.c.b16 %v700, %v700
      %v717 = vpack.c.b16 %v701, %v701
      %v718 = vpack.c.b16 %v702, %v702
      %v719 = vpack.c.b16 %v703, %v703
      %v720 = vpack.c.b16 %v704, %v704
      %v721 = vpack.c.b16 %v705, %v705
      %v722 = vpack.c.b16 %v706, %v706
      %v723 = vpack.c.b16 %v707, %v707
      %v724 = vpack.c.b16 %v708, %v708
      %v725 = vpack.c.b16 %v709, %v709
      %v726 = vpack.c.b16 %v710, %v710
      %743 = vst [vmem:[#allocation2] sm:$0xf] %v711
      %744 = vst [vmem:[#allocation2 + $0x4] sm:$0xf] %v712
      %745 = vst [vmem:[#allocation2 + $0x10] sm:$0xf] %v713
      %746 = vst [vmem:[#allocation2 + $0x14] sm:$0xf] %v714
      %747 = vst [vmem:[#allocation2 + $0x20] sm:$0xf] %v715
      %748 = vst [vmem:[#allocation2 + $0x24] sm:$0xf] %v716
      %749 = vst [vmem:[#allocation2 + $0x30] sm:$0xf] %v717
      %750 = vst [vmem:[#allocation2 + $0x34] sm:$0xf] %v718
      %751 = vst [vmem:[#allocation2 + $0x40] sm:$0xf] %v719
      %752 = vst [vmem:[#allocation2 + $0x44] sm:$0xf] %v720
      %753 = vst [vmem:[#allocation2 + $0x50] sm:$0xf] %v721
      %754 = vst [vmem:[#allocation2 + $0x54] sm:$0xf] %v722
      %755 = vst [vmem:[#allocation2 + $0x60] sm:$0xf] %v723
      %756 = vst [vmem:[#allocation2 + $0x64] sm:$0xf] %v724
      %757 = vst [vmem:[#allocation2 + $0x70] sm:$0xf] %v725
      %758 = vst [vmem:[#allocation2 + $0x74] sm:$0xf] %v726
      %v775 = vcombine.low %v481, %v483
      %v776 = vcombine.high %v481, %v483
      %v777 = vcombine.low %v485, %v487
      %v778 = vcombine.high %v485, %v487
      %v779 = vcombine.low %v491, %v493
      %v780 = vcombine.high %v491, %v493
      %v781 = vcombine.low %v495, %v497
      %v782 = vcombine.high %v495, %v497
      %v783 = vcombine.low %v501, %v503
      %v784 = vcombine.high %v501, %v503
      %v785 = vcombine.low %v505, %v507
      %v786 = vcombine.high %v505, %v507
      %v787 = vcombine.low %v511, %v513
      %v788 = vcombine.high %v511, %v513
      %v789 = vcombine.low %v515, %v517
      %v790 = vcombine.high %v515, %v517
      %v808 = vunpack.c.l.s4 1935823168
      %v809 = vunpack.c.0.s8 %v808
      %v810 = vlaneseq
      %v811 = vshrl.u32 %v810, 7
      %v812 = vsub.s32 %v809, %v811
      %v813 = vrot.slane %v775, %v812
      %v815 = vunpack.c.l.s4 1935823168
      %v816 = vunpack.c.0.s8 %v815
      %v817 = vlaneseq
      %v818 = vshrl.u32 %v817, 7
      %v819 = vsub.s32 %v816, %v818
      %v820 = vrot.slane %v776, %v819
      %v822 = vunpack.c.l.s4 1935823168
      %v823 = vunpack.c.0.s8 %v822
      %v824 = vlaneseq
      %v825 = vshrl.u32 %v824, 7
      %v826 = vsub.s32 %v823, %v825
      %v827 = vrot.slane %v777, %v826
      %v829 = vunpack.c.l.s4 1935823168
      %v830 = vunpack.c.0.s8 %v829
      %v831 = vlaneseq
      %v832 = vshrl.u32 %v831, 7
      %v833 = vsub.s32 %v830, %v832
      %v834 = vrot.slane %v778, %v833
      %v836 = vunpack.c.l.s4 1935823168
      %v837 = vunpack.c.0.s8 %v836
      %v838 = vlaneseq
      %v839 = vshrl.u32 %v838, 7
      %v840 = vsub.s32 %v837, %v839
      %v841 = vrot.slane %v779, %v840
      %v843 = vunpack.c.l.s4 1935823168
      %v844 = vunpack.c.0.s8 %v843
      %v845 = vlaneseq
      %v846 = vshrl.u32 %v845, 7
      %v847 = vsub.s32 %v844, %v846
      %v848 = vrot.slane %v780, %v847
      %v850 = vunpack.c.l.s4 1935823168
      %v851 = vunpack.c.0.s8 %v850
      %v852 = vlaneseq
      %v853 = vshrl.u32 %v852, 7
      %v854 = vsub.s32 %v851, %v853
      %v855 = vrot.slane %v781, %v854
      %v857 = vunpack.c.l.s4 1935823168
      %v858 = vunpack.c.0.s8 %v857
      %v859 = vlaneseq
      %v860 = vshrl.u32 %v859, 7
      %v861 = vsub.s32 %v858, %v860
      %v862 = vrot.slane %v782, %v861
      %v864 = vunpack.c.l.s4 1935823168
      %v865 = vunpack.c.0.s8 %v864
      %v866 = vlaneseq
      %v867 = vshrl.u32 %v866, 7
      %v868 = vsub.s32 %v865, %v867
      %v869 = vrot.slane %v783, %v868
      %v871 = vunpack.c.l.s4 1935823168
      %v872 = vunpack.c.0.s8 %v871
      %v873 = vlaneseq
      %v874 = vshrl.u32 %v873, 7
      %v875 = vsub.s32 %v872, %v874
      %v876 = vrot.slane %v784, %v875
      %v878 = vunpack.c.l.s4 1935823168
      %v879 = vunpack.c.0.s8 %v878
      %v880 = vlaneseq
      %v881 = vshrl.u32 %v880, 7
      %v882 = vsub.s32 %v879, %v881
      %v883 = vrot.slane %v785, %v882
      %v885 = vunpack.c.l.s4 1935823168
      %v886 = vunpack.c.0.s8 %v885
      %v887 = vlaneseq
      %v888 = vshrl.u32 %v887, 7
      %v889 = vsub.s32 %v886, %v888
      %v890 = vrot.slane %v786, %v889
      %v892 = vunpack.c.l.s4 1935823168
      %v893 = vunpack.c.0.s8 %v892
      %v894 = vlaneseq
      %v895 = vshrl.u32 %v894, 7
      %v896 = vsub.s32 %v893, %v895
      %v897 = vrot.slane %v787, %v896
      %v899 = vunpack.c.l.s4 1935823168
      %v900 = vunpack.c.0.s8 %v899
      %v901 = vlaneseq
      %v902 = vshrl.u32 %v901, 7
      %v903 = vsub.s32 %v900, %v902
      %v904 = vrot.slane %v788, %v903
      %v906 = vunpack.c.l.s4 1935823168
      %v907 = vunpack.c.0.s8 %v906
      %v908 = vlaneseq
      %v909 = vshrl.u32 %v908, 7
      %v910 = vsub.s32 %v907, %v909
      %v911 = vrot.slane %v789, %v910
      %v913 = vunpack.c.l.s4 1935823168
      %v914 = vunpack.c.0.s8 %v913
      %v915 = vlaneseq
      %v916 = vshrl.u32 %v915, 7
      %v917 = vsub.s32 %v914, %v916
      %v918 = vrot.slane %v790, %v917
      %v919 = vpack.c.bf16 %v820, %v813
      %v920 = vpack.c.bf16 %v834, %v827
      %v921 = vpack.c.bf16 %v848, %v841
      %v922 = vpack.c.bf16 %v862, %v855
      %v923 = vpack.c.bf16 %v876, %v869
      %v924 = vpack.c.bf16 %v890, %v883
      %v925 = vpack.c.bf16 %v904, %v897
      %v926 = vpack.c.bf16 %v918, %v911
      %v935 = vunpack.c.l.b16 %v919
      %v936 = vunpack.c.h.b16 %v919
      %v937 = vunpack.c.l.b16 %v920
      %v938 = vunpack.c.h.b16 %v920
      %v939 = vunpack.c.l.b16 %v921
      %v940 = vunpack.c.h.b16 %v921
      %v941 = vunpack.c.l.b16 %v922
      %v942 = vunpack.c.h.b16 %v922
      %v943 = vunpack.c.l.b16 %v923
      %v944 = vunpack.c.h.b16 %v923
      %v945 = vunpack.c.l.b16 %v924
      %v946 = vunpack.c.h.b16 %v924
      %v947 = vunpack.c.l.b16 %v925
      %v948 = vunpack.c.h.b16 %v925
      %v949 = vunpack.c.l.b16 %v926
      %v950 = vunpack.c.h.b16 %v926
      %v951 = vpack.c.b16 %v935, %v935
      %v952 = vpack.c.b16 %v936, %v936
      %v953 = vpack.c.b16 %v937, %v937
      %v954 = vpack.c.b16 %v938, %v938
      %v955 = vpack.c.b16 %v939, %v939
      %v956 = vpack.c.b16 %v940, %v940
      %v957 = vpack.c.b16 %v941, %v941
      %v958 = vpack.c.b16 %v942, %v942
      %v959 = vpack.c.b16 %v943, %v943
      %v960 = vpack.c.b16 %v944, %v944
      %v961 = vpack.c.b16 %v945, %v945
      %v962 = vpack.c.b16 %v946, %v946
      %v963 = vpack.c.b16 %v947, %v947
      %v964 = vpack.c.b16 %v948, %v948
      %v965 = vpack.c.b16 %v949, %v949
      %v966 = vpack.c.b16 %v950, %v950
      %s983 = scalar_lea.vmem [#allocation2], 8
      %984 = vst [vmem:[%s983] sm:$0xf] %v951
      %985 = vst [vmem:[%s983 + $0x4] sm:$0xf] %v952
      %986 = vst [vmem:[%s983 + $0x10] sm:$0xf] %v953
      %987 = vst [vmem:[%s983 + $0x14] sm:$0xf] %v954
      %988 = vst [vmem:[%s983 + $0x20] sm:$0xf] %v955
      %989 = vst [vmem:[%s983 + $0x24] sm:$0xf] %v956
      %990 = vst [vmem:[%s983 + $0x30] sm:$0xf] %v957
      %991 = vst [vmem:[%s983 + $0x34] sm:$0xf] %v958
      %992 = vst [vmem:[%s983 + $0x40] sm:$0xf] %v959
      %993 = vst [vmem:[%s983 + $0x44] sm:$0xf] %v960
      %994 = vst [vmem:[%s983 + $0x50] sm:$0xf] %v961
      %995 = vst [vmem:[%s983 + $0x54] sm:$0xf] %v962
      %996 = vst [vmem:[%s983 + $0x60] sm:$0xf] %v963
      %997 = vst [vmem:[%s983 + $0x64] sm:$0xf] %v964
      %998 = vst [vmem:[%s983 + $0x70] sm:$0xf] %v965
      %999 = vst [vmem:[%s983 + $0x74] sm:$0xf] %v966
      %v1000 = vld [vmem:[#allocation2] sm:$0xf]
      %v1001 = vld [vmem:[#allocation2 + $0x4] sm:$0xf]
      %v1002 = vld [vmem:[#allocation2 + $0x8] sm:$0xf]
      %v1003 = vld [vmem:[#allocation2 + $0xc] sm:$0xf]
      %v1004 = vld [vmem:[#allocation2 + $0x10] sm:$0xf]
      %v1005 = vld [vmem:[#allocation2 + $0x14] sm:$0xf]
      %v1006 = vld [vmem:[#allocation2 + $0x18] sm:$0xf]
      %v1007 = vld [vmem:[#allocation2 + $0x1c] sm:$0xf]
      %v1008 = vld [vmem:[#allocation2 + $0x20] sm:$0xf]
      %v1009 = vld [vmem:[#allocation2 + $0x24] sm:$0xf]
      %v1010 = vld [vmem:[#allocation2 + $0x28] sm:$0xf]
      %v1011 = vld [vmem:[#allocation2 + $0x2c] sm:$0xf]
      %v1012 = vld [vmem:[#allocation2 + $0x30] sm:$0xf]
      %v1013 = vld [vmem:[#allocation2 + $0x34] sm:$0xf]
      %v1014 = vld [vmem:[#allocation2 + $0x38] sm:$0xf]
      %v1015 = vld [vmem:[#allocation2 + $0x3c] sm:$0xf]
      %v1016 = vld [vmem:[#allocation2 + $0x40] sm:$0xf]
      %v1017 = vld [vmem:[#allocation2 + $0x44] sm:$0xf]
      %v1018 = vld [vmem:[#allocation2 + $0x48] sm:$0xf]
      %v1019 = vld [vmem:[#allocation2 + $0x4c] sm:$0xf]
      %v1020 = vld [vmem:[#allocation2 + $0x50] sm:$0xf]
      %v1021 = vld [vmem:[#allocation2 + $0x54] sm:$0xf]
      %v1022 = vld [vmem:[#allocation2 + $0x58] sm:$0xf]
      %v1023 = vld [vmem:[#allocation2 + $0x5c] sm:$0xf]
      %v1024 = vld [vmem:[#allocation2 + $0x60] sm:$0xf]
      %v1025 = vld [vmem:[#allocation2 + $0x64] sm:$0xf]
      %v1026 = vld [vmem:[#allocation2 + $0x68] sm:$0xf]
      %v1027 = vld [vmem:[#allocation2 + $0x6c] sm:$0xf]
      %v1028 = vld [vmem:[#allocation2 + $0x70] sm:$0xf]
      %v1029 = vld [vmem:[#allocation2 + $0x74] sm:$0xf]
      %v1030 = vld [vmem:[#allocation2 + $0x78] sm:$0xf]
      %v1031 = vld [vmem:[#allocation2 + $0x7c] sm:$0xf]
      %v1032 = vld [vmem:[%s293] sm:$0xf]
      %v1033 = vld [vmem:[%s293 + $0x4] sm:$0xf]
      %v1034 = vld [vmem:[%s293 + $0x8] sm:$0xf]
      %v1035 = vld [vmem:[%s293 + $0xc] sm:$0xf]
      %v1036 = vld [vmem:[%s293 + $0x10] sm:$0xf]
      %v1037 = vld [vmem:[%s293 + $0x14] sm:$0xf]
      %v1038 = vld [vmem:[%s293 + $0x18] sm:$0xf]
      %v1039 = vld [vmem:[%s293 + $0x1c] sm:$0xf]
      %v1040 = vld [vmem:[%s293 + $0x20] sm:$0xf]
      %v1041 = vld [vmem:[%s293 + $0x24] sm:$0xf]
      %v1042 = vld [vmem:[%s293 + $0x28] sm:$0xf]
      %v1043 = vld [vmem:[%s293 + $0x2c] sm:$0xf]
      %v1044 = vld [vmem:[%s293 + $0x30] sm:$0xf]
      %v1045 = vld [vmem:[%s293 + $0x34] sm:$0xf]
      %v1046 = vld [vmem:[%s293 + $0x38] sm:$0xf]
      %v1047 = vld [vmem:[%s293 + $0x3c] sm:$0xf]
      %v1048 = vld [vmem:[%s293 + $0x40] sm:$0xf]
      %v1049 = vld [vmem:[%s293 + $0x44] sm:$0xf]
      %v1050 = vld [vmem:[%s293 + $0x48] sm:$0xf]
      %v1051 = vld [vmem:[%s293 + $0x4c] sm:$0xf]
      %v1052 = vld [vmem:[%s293 + $0x50] sm:$0xf]
      %v1053 = vld [vmem:[%s293 + $0x54] sm:$0xf]
      %v1054 = vld [vmem:[%s293 + $0x58] sm:$0xf]
      %v1055 = vld [vmem:[%s293 + $0x5c] sm:$0xf]
      %v1056 = vld [vmem:[%s293 + $0x60] sm:$0xf]
      %v1057 = vld [vmem:[%s293 + $0x64] sm:$0xf]
      %v1058 = vld [vmem:[%s293 + $0x68] sm:$0xf]
      %v1059 = vld [vmem:[%s293 + $0x6c] sm:$0xf]
      %v1060 = vld [vmem:[%s293 + $0x70] sm:$0xf]
      %v1061 = vld [vmem:[%s293 + $0x74] sm:$0xf]
      %v1062 = vld [vmem:[%s293 + $0x78] sm:$0xf]
      %v1063 = vld [vmem:[%s293 + $0x7c] sm:$0xf]
      %v1096 = vunpack.c.l.b16 %v1000
      %v1097 = vunpack.c.l.b16 %v1001
      %v1098 = vunpack.c.l.b16 %v1002
      %v1099 = vunpack.c.l.b16 %v1003
      %v1100 = vunpack.c.l.b16 %v1004
      %v1101 = vunpack.c.l.b16 %v1005
      %v1102 = vunpack.c.l.b16 %v1006
      %v1103 = vunpack.c.l.b16 %v1007
      %v1104 = vunpack.c.l.b16 %v1008
      %v1105 = vunpack.c.l.b16 %v1009
      %v1106 = vunpack.c.l.b16 %v1010
      %v1107 = vunpack.c.l.b16 %v1011
      %v1108 = vunpack.c.l.b16 %v1012
      %v1109 = vunpack.c.l.b16 %v1013
      %v1110 = vunpack.c.l.b16 %v1014
      %v1111 = vunpack.c.l.b16 %v1015
      %v1112 = vunpack.c.l.b16 %v1016
      %v1113 = vunpack.c.l.b16 %v1017
      %v1114 = vunpack.c.l.b16 %v1018
      %v1115 = vunpack.c.l.b16 %v1019
      %v1116 = vunpack.c.l.b16 %v1020
      %v1117 = vunpack.c.l.b16 %v1021
      %v1118 = vunpack.c.l.b16 %v1022
      %v1119 = vunpack.c.l.b16 %v1023
      %v1120 = vunpack.c.l.b16 %v1024
      %v1121 = vunpack.c.l.b16 %v1025
      %v1122 = vunpack.c.l.b16 %v1026
      %v1123 = vunpack.c.l.b16 %v1027
      %v1124 = vunpack.c.l.b16 %v1028
      %v1125 = vunpack.c.l.b16 %v1029
      %v1126 = vunpack.c.l.b16 %v1030
      %v1127 = vunpack.c.l.b16 %v1031
      %v1128 = vpack.c.b16 %v1097, %v1096
      %v1129 = vpack.c.b16 %v1099, %v1098
      %v1130 = vpack.c.b16 %v1101, %v1100
      %v1131 = vpack.c.b16 %v1103, %v1102
      %v1132 = vpack.c.b16 %v1105, %v1104
      %v1133 = vpack.c.b16 %v1107, %v1106
      %v1134 = vpack.c.b16 %v1109, %v1108
      %v1135 = vpack.c.b16 %v1111, %v1110
      %v1136 = vpack.c.b16 %v1113, %v1112
      %v1137 = vpack.c.b16 %v1115, %v1114
      %v1138 = vpack.c.b16 %v1117, %v1116
      %v1139 = vpack.c.b16 %v1119, %v1118
      %v1140 = vpack.c.b16 %v1121, %v1120
      %v1141 = vpack.c.b16 %v1123, %v1122
      %v1142 = vpack.c.b16 %v1125, %v1124
      %v1143 = vpack.c.b16 %v1127, %v1126
      %v1192 = vunpack.c.l.b16 %v1032
      %v1193 = vunpack.c.l.b16 %v1033
      %v1194 = vunpack.c.l.b16 %v1034
      %v1195 = vunpack.c.l.b16 %v1035
      %v1196 = vunpack.c.l.b16 %v1036
      %v1197 = vunpack.c.l.b16 %v1037
      %v1198 = vunpack.c.l.b16 %v1038
      %v1199 = vunpack.c.l.b16 %v1039
      %v1200 = vunpack.c.l.b16 %v1040
      %v1201 = vunpack.c.l.b16 %v1041
      %v1202 = vunpack.c.l.b16 %v1042
      %v1203 = vunpack.c.l.b16 %v1043
      %v1204 = vunpack.c.l.b16 %v1044
      %v1205 = vunpack.c.l.b16 %v1045
      %v1206 = vunpack.c.l.b16 %v1046
      %v1207 = vunpack.c.l.b16 %v1047
      %v1208 = vunpack.c.l.b16 %v1048
      %v1209 = vunpack.c.l.b16 %v1049
      %v1210 = vunpack.c.l.b16 %v1050
      %v1211 = vunpack.c.l.b16 %v1051
      %v1212 = vunpack.c.l.b16 %v1052
      %v1213 = vunpack.c.l.b16 %v1053
      %v1214 = vunpack.c.l.b16 %v1054
      %v1215 = vunpack.c.l.b16 %v1055
      %v1216 = vunpack.c.l.b16 %v1056
      %v1217 = vunpack.c.l.b16 %v1057
      %v1218 = vunpack.c.l.b16 %v1058
      %v1219 = vunpack.c.l.b16 %v1059
      %v1220 = vunpack.c.l.b16 %v1060
      %v1221 = vunpack.c.l.b16 %v1061
      %v1222 = vunpack.c.l.b16 %v1062
      %v1223 = vunpack.c.l.b16 %v1063
      %v1224 = vpack.c.b16 %v1193, %v1192
      %v1225 = vpack.c.b16 %v1195, %v1194
      %v1226 = vpack.c.b16 %v1197, %v1196
      %v1227 = vpack.c.b16 %v1199, %v1198
      %v1228 = vpack.c.b16 %v1201, %v1200
      %v1229 = vpack.c.b16 %v1203, %v1202
      %v1230 = vpack.c.b16 %v1205, %v1204
      %v1231 = vpack.c.b16 %v1207, %v1206
      %v1232 = vpack.c.b16 %v1209, %v1208
      %v1233 = vpack.c.b16 %v1211, %v1210
      %v1234 = vpack.c.b16 %v1213, %v1212
      %v1235 = vpack.c.b16 %v1215, %v1214
      %v1236 = vpack.c.b16 %v1217, %v1216
      %v1237 = vpack.c.b16 %v1219, %v1218
      %v1238 = vpack.c.b16 %v1221, %v1220
      %v1239 = vpack.c.b16 %v1223, %v1222
      %v1256 = vld [vmem:[%s3] sm:$0xf]
      %v1257 = vld [vmem:[%s3 + $0x4] sm:$0xf]
      %v1258 = vld [vmem:[%s3 + $0x8] sm:$0xf]
      %v1259 = vld [vmem:[%s3 + $0xc] sm:$0xf]
      %v1260 = vld [vmem:[%s3 + $0x10] sm:$0xf]
      %v1261 = vld [vmem:[%s3 + $0x14] sm:$0xf]
      %v1262 = vld [vmem:[%s3 + $0x18] sm:$0xf]
      %v1263 = vld [vmem:[%s3 + $0x1c] sm:$0xf]
      %v1264 = vld [vmem:[%s3 + $0x20] sm:$0xf]
      %v1265 = vld [vmem:[%s3 + $0x24] sm:$0xf]
      %v1266 = vld [vmem:[%s3 + $0x28] sm:$0xf]
      %v1267 = vld [vmem:[%s3 + $0x2c] sm:$0xf]
      %v1268 = vld [vmem:[%s3 + $0x30] sm:$0xf]
      %v1269 = vld [vmem:[%s3 + $0x34] sm:$0xf]
      %v1270 = vld [vmem:[%s3 + $0x38] sm:$0xf]
      %v1271 = vld [vmem:[%s3 + $0x3c] sm:$0xf]
      %v1272 = vld [vmem:[%s3 + $0x40] sm:$0xf]
      %v1273 = vld [vmem:[%s3 + $0x44] sm:$0xf]
      %v1274 = vld [vmem:[%s3 + $0x48] sm:$0xf]
      %v1275 = vld [vmem:[%s3 + $0x4c] sm:$0xf]
      %v1276 = vld [vmem:[%s3 + $0x50] sm:$0xf]
      %v1277 = vld [vmem:[%s3 + $0x54] sm:$0xf]
      %v1278 = vld [vmem:[%s3 + $0x58] sm:$0xf]
      %v1279 = vld [vmem:[%s3 + $0x5c] sm:$0xf]
      %v1280 = vld [vmem:[%s3 + $0x60] sm:$0xf]
      %v1281 = vld [vmem:[%s3 + $0x64] sm:$0xf]
      %v1282 = vld [vmem:[%s3 + $0x68] sm:$0xf]
      %v1283 = vld [vmem:[%s3 + $0x6c] sm:$0xf]
      %v1284 = vld [vmem:[%s3 + $0x70] sm:$0xf]
      %v1285 = vld [vmem:[%s3 + $0x74] sm:$0xf]
      %v1286 = vld [vmem:[%s3 + $0x78] sm:$0xf]
      %v1287 = vld [vmem:[%s3 + $0x7c] sm:$0xf]
      %s1288 = scalar_lea.vmem %s3, 128
      %v1289 = vld [vmem:[%s1288] sm:$0xf]
      %v1290 = vld [vmem:[%s1288 + $0x4] sm:$0xf]
      %v1291 = vld [vmem:[%s1288 + $0x8] sm:$0xf]
      %v1292 = vld [vmem:[%s1288 + $0xc] sm:$0xf]
      %v1293 = vld [vmem:[%s1288 + $0x10] sm:$0xf]
      %v1294 = vld [vmem:[%s1288 + $0x14] sm:$0xf]
      %v1295 = vld [vmem:[%s1288 + $0x18] sm:$0xf]
      %v1296 = vld [vmem:[%s1288 + $0x1c] sm:$0xf]
      %v1297 = vld [vmem:[%s1288 + $0x20] sm:$0xf]
      %v1298 = vld [vmem:[%s1288 + $0x24] sm:$0xf]
      %v1299 = vld [vmem:[%s1288 + $0x28] sm:$0xf]
      %v1300 = vld [vmem:[%s1288 + $0x2c] sm:$0xf]
      %v1301 = vld [vmem:[%s1288 + $0x30] sm:$0xf]
      %v1302 = vld [vmem:[%s1288 + $0x34] sm:$0xf]
      %v1303 = vld [vmem:[%s1288 + $0x38] sm:$0xf]
      %v1304 = vld [vmem:[%s1288 + $0x3c] sm:$0xf]
      %v1305 = vld [vmem:[%s1288 + $0x40] sm:$0xf]
      %v1306 = vld [vmem:[%s1288 + $0x44] sm:$0xf]
      %v1307 = vld [vmem:[%s1288 + $0x48] sm:$0xf]
      %v1308 = vld [vmem:[%s1288 + $0x4c] sm:$0xf]
      %v1309 = vld [vmem:[%s1288 + $0x50] sm:$0xf]
      %v1310 = vld [vmem:[%s1288 + $0x54] sm:$0xf]
      %v1311 = vld [vmem:[%s1288 + $0x58] sm:$0xf]
      %v1312 = vld [vmem:[%s1288 + $0x5c] sm:$0xf]
      %v1313 = vld [vmem:[%s1288 + $0x60] sm:$0xf]
      %v1314 = vld [vmem:[%s1288 + $0x64] sm:$0xf]
      %v1315 = vld [vmem:[%s1288 + $0x68] sm:$0xf]
      %v1316 = vld [vmem:[%s1288 + $0x6c] sm:$0xf]
      %v1317 = vld [vmem:[%s1288 + $0x70] sm:$0xf]
      %v1318 = vld [vmem:[%s1288 + $0x74] sm:$0xf]
      %v1319 = vld [vmem:[%s1288 + $0x78] sm:$0xf]
      %v1320 = vld [vmem:[%s1288 + $0x7c] sm:$0xf]
      %vm1321 = vsmask.f32 7424
      %v1323 = vshrl.u32 %v1128, 16
      %v1325 = vshll.u32 %v1128, 16
      %v1327 = vrot.slane %v1325, 1
      %v1328 = vor.u32 %v1323, %v1327
      %v1330 = vshll.u32 %v1129, 16
      %v1332 = vrot.slane %v1330, 1
      %v1333 = vsel %vm1321, %v1328, %v1332
      %v1335 = vshrl.u32 %v1224, 16
      %v1337 = vshll.u32 %v1224, 16
      %v1339 = vrot.slane %v1337, 1
      %v1340 = vor.u32 %v1335, %v1339
      %v1342 = vshll.u32 %v1225, 16
      %v1344 = vrot.slane %v1342, 1
      %v1345 = vsel %vm1321, %v1340, %v1344
      %v1346 = vshrl.u32 %v1129, 16
      %v1348 = vor.u32 %v1346, %v1332
      %v1350 = vshll.u32 %v1130, 16
      %v1352 = vrot.slane %v1350, 1
      %v1353 = vsel %vm1321, %v1348, %v1352
      %v1354 = vshrl.u32 %v1225, 16
      %v1356 = vor.u32 %v1354, %v1344
      %v1358 = vshll.u32 %v1226, 16
      %v1360 = vrot.slane %v1358, 1
      %v1361 = vsel %vm1321, %v1356, %v1360
      %v1362 = vshrl.u32 %v1130, 16
      %v1364 = vor.u32 %v1362, %v1352
      %v1366 = vshll.u32 %v1131, 16
      %v1368 = vrot.slane %v1366, 1
      %v1369 = vsel %vm1321, %v1364, %v1368
      %v1370 = vshrl.u32 %v1226, 16
      %v1372 = vor.u32 %v1370, %v1360
      %v1374 = vshll.u32 %v1227, 16
      %v1376 = vrot.slane %v1374, 1
      %v1377 = vsel %vm1321, %v1372, %v1376
      %v1378 = vshrl.u32 %v1131, 16
      %v1380 = vor.u32 %v1378, %v1368
      %v1382 = vshll.u32 %v1132, 16
      %v1384 = vrot.slane %v1382, 1
      %v1385 = vsel %vm1321, %v1380, %v1384
      %v1386 = vshrl.u32 %v1227, 16
      %v1388 = vor.u32 %v1386, %v1376
      %v1390 = vshll.u32 %v1228, 16
      %v1392 = vrot.slane %v1390, 1
      %v1393 = vsel %vm1321, %v1388, %v1392
      %v1394 = vshrl.u32 %v1132, 16
      %v1396 = vor.u32 %v1394, %v1384
      %v1398 = vshll.u32 %v1133, 16
      %v1400 = vrot.slane %v1398, 1
      %v1401 = vsel %vm1321, %v1396, %v1400
      %v1402 = vshrl.u32 %v1228, 16
      %v1404 = vor.u32 %v1402, %v1392
      %v1406 = vshll.u32 %v1229, 16
      %v1408 = vrot.slane %v1406, 1
      %v1409 = vsel %vm1321, %v1404, %v1408
      %v1410 = vshrl.u32 %v1133, 16
      %v1412 = vor.u32 %v1410, %v1400
      %v1414 = vshll.u32 %v1134, 16
      %v1416 = vrot.slane %v1414, 1
      %v1417 = vsel %vm1321, %v1412, %v1416
      %v1418 = vshrl.u32 %v1229, 16
      %v1420 = vor.u32 %v1418, %v1408
      %v1422 = vshll.u32 %v1230, 16
      %v1424 = vrot.slane %v1422, 1
      %v1425 = vsel %vm1321, %v1420, %v1424
      %v1426 = vshrl.u32 %v1134, 16
      %v1428 = vor.u32 %v1426, %v1416
      %v1430 = vshll.u32 %v1135, 16
      %v1432 = vrot.slane %v1430, 1
      %v1433 = vsel %vm1321, %v1428, %v1432
      %v1434 = vshrl.u32 %v1230, 16
      %v1436 = vor.u32 %v1434, %v1424
      %v1438 = vshll.u32 %v1231, 16
      %v1440 = vrot.slane %v1438, 1
      %v1441 = vsel %vm1321, %v1436, %v1440
      %v1442 = vshrl.u32 %v1135, 16
      %v1444 = vor.u32 %v1442, %v1432
      %v1446 = vshll.u32 %v1136, 16
      %v1448 = vrot.slane %v1446, 1
      %v1449 = vsel %vm1321, %v1444, %v1448
      %v1450 = vshrl.u32 %v1231, 16
      %v1452 = vor.u32 %v1450, %v1440
      %v1454 = vshll.u32 %v1232, 16
      %v1456 = vrot.slane %v1454, 1
      %v1457 = vsel %vm1321, %v1452, %v1456
      %v1458 = vshrl.u32 %v1136, 16
      %v1460 = vor.u32 %v1458, %v1448
      %v1462 = vshll.u32 %v1137, 16
      %v1464 = vrot.slane %v1462, 1
      %v1465 = vsel %vm1321, %v1460, %v1464
      %v1466 = vshrl.u32 %v1232, 16
      %v1468 = vor.u32 %v1466, %v1456
      %v1470 = vshll.u32 %v1233, 16
      %v1472 = vrot.slane %v1470, 1
      %v1473 = vsel %vm1321, %v1468, %v1472
      %v1474 = vshrl.u32 %v1137, 16
      %v1476 = vor.u32 %v1474, %v1464
      %v1478 = vshll.u32 %v1138, 16
      %v1480 = vrot.slane %v1478, 1
      %v1481 = vsel %vm1321, %v1476, %v1480
      %v1482 = vshrl.u32 %v1233, 16
      %v1484 = vor.u32 %v1482, %v1472
      %v1486 = vshll.u32 %v1234, 16
      %v1488 = vrot.slane %v1486, 1
      %v1489 = vsel %vm1321, %v1484, %v1488
      %v1490 = vshrl.u32 %v1138, 16
      %v1492 = vor.u32 %v1490, %v1480
      %v1494 = vshll.u32 %v1139, 16
      %v1496 = vrot.slane %v1494, 1
      %v1497 = vsel %vm1321, %v1492, %v1496
      %v1498 = vshrl.u32 %v1234, 16
      %v1500 = vor.u32 %v1498, %v1488
      %v1502 = vshll.u32 %v1235, 16
      %v1504 = vrot.slane %v1502, 1
      %v1505 = vsel %vm1321, %v1500, %v1504
      %v1506 = vshrl.u32 %v1139, 16
      %v1508 = vor.u32 %v1506, %v1496
      %v1510 = vshll.u32 %v1140, 16
      %v1512 = vrot.slane %v1510, 1
      %v1513 = vsel %vm1321, %v1508, %v1512
      %v1514 = vshrl.u32 %v1235, 16
      %v1516 = vor.u32 %v1514, %v1504
      %v1518 = vshll.u32 %v1236, 16
      %v1520 = vrot.slane %v1518, 1
      %v1521 = vsel %vm1321, %v1516, %v1520
      %v1522 = vshrl.u32 %v1140, 16
      %v1524 = vor.u32 %v1522, %v1512
      %v1526 = vshll.u32 %v1141, 16
      %v1528 = vrot.slane %v1526, 1
      %v1529 = vsel %vm1321, %v1524, %v1528
      %v1530 = vshrl.u32 %v1236, 16
      %v1532 = vor.u32 %v1530, %v1520
      %v1534 = vshll.u32 %v1237, 16
      %v1536 = vrot.slane %v1534, 1
      %v1537 = vsel %vm1321, %v1532, %v1536
      %v1538 = vshrl.u32 %v1141, 16
      %v1540 = vor.u32 %v1538, %v1528
      %v1541 = vshrl.u32 %v1237, 16
      %v1543 = vor.u32 %v1541, %v1536
      %v1604 = vunpack.c.l.b16 %v1289
      %v1605 = vunpack.c.l.b16 %v1290
      %v1606 = vunpack.c.l.b16 %v1291
      %v1607 = vunpack.c.l.b16 %v1292
      %v1608 = vunpack.c.l.b16 %v1293
      %v1609 = vunpack.c.l.b16 %v1294
      %v1610 = vunpack.c.l.b16 %v1295
      %v1611 = vunpack.c.l.b16 %v1296
      %v1612 = vunpack.c.l.b16 %v1297
      %v1613 = vunpack.c.l.b16 %v1298
      %v1614 = vunpack.c.l.b16 %v1299
      %v1615 = vunpack.c.l.b16 %v1300
      %v1616 = vunpack.c.l.b16 %v1301
      %v1617 = vunpack.c.l.b16 %v1302
      %v1618 = vunpack.c.l.b16 %v1303
      %v1619 = vunpack.c.l.b16 %v1304
      %v1620 = vunpack.c.l.b16 %v1305
      %v1621 = vunpack.c.l.b16 %v1306
      %v1622 = vunpack.c.l.b16 %v1307
      %v1623 = vunpack.c.l.b16 %v1308
      %v1624 = vunpack.c.l.b16 %v1309
      %v1625 = vunpack.c.l.b16 %v1310
      %v1626 = vunpack.c.l.b16 %v1311
      %v1627 = vunpack.c.l.b16 %v1312
      %v1628 = vunpack.c.l.b16 %v1313
      %v1629 = vunpack.c.l.b16 %v1314
      %v1630 = vunpack.c.l.b16 %v1315
      %v1631 = vunpack.c.l.b16 %v1316
      %v1632 = vunpack.c.l.b16 %v1317
      %v1633 = vunpack.c.l.b16 %v1318
      %v1634 = vunpack.c.l.b16 %v1319
      %v1635 = vunpack.c.l.b16 %v1320
      %v1636 = vpack.c.b16 %v1605, %v1604
      %v1637 = vpack.c.b16 %v1607, %v1606
      %v1638 = vpack.c.b16 %v1609, %v1608
      %v1639 = vpack.c.b16 %v1611, %v1610
      %v1640 = vpack.c.b16 %v1613, %v1612
      %v1641 = vpack.c.b16 %v1615, %v1614
      %v1642 = vpack.c.b16 %v1617, %v1616
      %v1643 = vpack.c.b16 %v1619, %v1618
      %v1644 = vpack.c.b16 %v1621, %v1620
      %v1645 = vpack.c.b16 %v1623, %v1622
      %v1646 = vpack.c.b16 %v1625, %v1624
      %v1647 = vpack.c.b16 %v1627, %v1626
      %v1648 = vpack.c.b16 %v1629, %v1628
      %v1649 = vpack.c.b16 %v1631, %v1630
      %v1650 = vpack.c.b16 %v1633, %v1632
      %v1651 = vpack.c.b16 %v1635, %v1634
      %1668 = vmatprep.subr.bf16.mxu0 0
      %1669 = vmatpush1.bf16.msra.mxu0 %v1643
      %1670 = vmatprep.subr.bf16.mxu0 0
      %1671 = vmatpush1.bf16.msra.mxu0 %v1642
      %1672 = vmatprep.subr.bf16.mxu0 0
      %1673 = vmatpush1.bf16.msra.mxu0 %v1641
      %1674 = vmatprep.subr.bf16.mxu0 0
      %1675 = vmatpush1.bf16.msra.mxu0 %v1640
      %1676 = vmatprep.subr.bf16.mxu0 0
      %1677 = vmatpush1.bf16.msra.mxu0 %v1639
      %1678 = vmatprep.subr.bf16.mxu0 0
      %1679 = vmatpush1.bf16.msra.mxu0 %v1638
      %1680 = vmatprep.subr.bf16.mxu0 0
      %1681 = vmatpush1.bf16.msra.mxu0 %v1637
      %1682 = vmatprep.subr.bf16.mxu0 0
      %1683 = vmatpush1.bf16.msra.mxu0 %v1636
      %1684 = vmatprep.subr.bf16.mxu0 0
      %1685 = vmatpush2.bf16.msra.mxu0 %v1651
      %1686 = vmatprep.subr.bf16.mxu0 0
      %1687 = vmatpush2.bf16.msra.mxu0 %v1650
      %1688 = vmatprep.subr.bf16.mxu0 0
      %1689 = vmatpush2.bf16.msra.mxu0 %v1649
      %1690 = vmatprep.subr.bf16.mxu0 0
      %1691 = vmatpush2.bf16.msra.mxu0 %v1648
      %1692 = vmatprep.subr.bf16.mxu0 0
      %1693 = vmatpush2.bf16.msra.mxu0 %v1647
      %1694 = vmatprep.subr.bf16.mxu0 0
      %1695 = vmatpush2.bf16.msra.mxu0 %v1646
      %1696 = vmatprep.subr.bf16.mxu0 0
      %1697 = vmatpush2.bf16.msra.mxu0 %v1645
      %1698 = vmatprep.subr.bf16.mxu0 0
      %1699 = vmatpush2.bf16.msra.mxu0 %v1644
      %1700 = vmatprep.mubr.bf16.mxu0 %v1345
      %1701 = vmatmul.mubr.bf16.gmra.mxu0 %v1333
      %v1702 = vpop.f32.mrf.mxu0
      %v1703 = vadd.f32 0.0, %v1702
      %v1704 = vpop.f32.mrf.mxu0
      %v1705 = vpop.f32.mrf.mxu0
      %v1706 = vadd.f32 0.0, %v1705
      %v1707 = vpop.f32.mrf.mxu0
      %1708 = vmatprep.mubr.bf16.mxu0 %v1361
      %1709 = vmatmul.mubr.bf16.gmra.mxu0 %v1353
      %v1710 = vpop.f32.mrf.mxu0
      %v1711 = vadd.f32 0.0, %v1710
      %v1712 = vpop.f32.mrf.mxu0
      %v1713 = vpop.f32.mrf.mxu0
      %v1714 = vadd.f32 0.0, %v1713
      %v1715 = vpop.f32.mrf.mxu0
      %1716 = vmatprep.mubr.bf16.mxu0 %v1377
      %1717 = vmatmul.mubr.bf16.gmra.mxu0 %v1369
      %v1718 = vpop.f32.mrf.mxu0
      %v1719 = vadd.f32 0.0, %v1718
      %v1720 = vpop.f32.mrf.mxu0
      %v1721 = vpop.f32.mrf.mxu0
      %v1722 = vadd.f32 0.0, %v1721
      %v1723 = vpop.f32.mrf.mxu0
      %1724 = vmatprep.mubr.bf16.mxu0 %v1393
      %1725 = vmatmul.mubr.bf16.gmra.mxu0 %v1385
      %v1726 = vpop.f32.mrf.mxu0
      %v1727 = vadd.f32 0.0, %v1726
      %v1728 = vpop.f32.mrf.mxu0
      %v1729 = vpop.f32.mrf.mxu0
      %v1730 = vadd.f32 0.0, %v1729
      %v1731 = vpop.f32.mrf.mxu0
      %1732 = vmatprep.mubr.bf16.mxu0 %v1409
      %1733 = vmatmul.mubr.bf16.gmra.mxu0 %v1401
      %v1734 = vpop.f32.mrf.mxu0
      %v1735 = vadd.f32 0.0, %v1734
      %v1736 = vpop.f32.mrf.mxu0
      %v1737 = vpop.f32.mrf.mxu0
      %v1738 = vadd.f32 0.0, %v1737
      %v1739 = vpop.f32.mrf.mxu0
      %1740 = vmatprep.mubr.bf16.mxu0 %v1425
      %1741 = vmatmul.mubr.bf16.gmra.mxu0 %v1417
      %v1742 = vpop.f32.mrf.mxu0
      %v1743 = vadd.f32 0.0, %v1742
      %v1744 = vpop.f32.mrf.mxu0
      %v1745 = vpop.f32.mrf.mxu0
      %v1746 = vadd.f32 0.0, %v1745
      %v1747 = vpop.f32.mrf.mxu0
      %1748 = vmatprep.mubr.bf16.mxu0 %v1441
      %1749 = vmatmul.mubr.bf16.gmra.mxu0 %v1433
      %v1750 = vpop.f32.mrf.mxu0
      %v1751 = vadd.f32 0.0, %v1750
      %v1752 = vpop.f32.mrf.mxu0
      %v1753 = vpop.f32.mrf.mxu0
      %v1754 = vadd.f32 0.0, %v1753
      %v1755 = vpop.f32.mrf.mxu0
      %1756 = vmatprep.mubr.bf16.mxu0 %v1457
      %1757 = vmatmul.mubr.bf16.gmra.mxu0 %v1449
      %v1758 = vpop.f32.mrf.mxu0
      %v1759 = vadd.f32 0.0, %v1758
      %v1760 = vpop.f32.mrf.mxu0
      %v1761 = vpop.f32.mrf.mxu0
      %v1762 = vadd.f32 0.0, %v1761
      %v1763 = vpop.f32.mrf.mxu0
      %1764 = vmatprep.mubr.bf16.mxu0 %v1473
      %1765 = vmatmul.mubr.bf16.gmra.mxu0 %v1465
      %v1766 = vpop.f32.mrf.mxu0
      %v1767 = vadd.f32 0.0, %v1766
      %v1768 = vpop.f32.mrf.mxu0
      %v1769 = vpop.f32.mrf.mxu0
      %v1770 = vadd.f32 0.0, %v1769
      %v1771 = vpop.f32.mrf.mxu0
      %1772 = vmatprep.mubr.bf16.mxu0 %v1489
      %1773 = vmatmul.mubr.bf16.gmra.mxu0 %v1481
      %v1774 = vpop.f32.mrf.mxu0
      %v1775 = vadd.f32 0.0, %v1774
      %v1776 = vpop.f32.mrf.mxu0
      %v1777 = vpop.f32.mrf.mxu0
      %v1778 = vadd.f32 0.0, %v1777
      %v1779 = vpop.f32.mrf.mxu0
      %1780 = vmatprep.mubr.bf16.mxu0 %v1505
      %1781 = vmatmul.mubr.bf16.gmra.mxu0 %v1497
      %v1782 = vpop.f32.mrf.mxu0
      %v1783 = vadd.f32 0.0, %v1782
      %v1784 = vpop.f32.mrf.mxu0
      %v1785 = vpop.f32.mrf.mxu0
      %v1786 = vadd.f32 0.0, %v1785
      %v1787 = vpop.f32.mrf.mxu0
      %1788 = vmatprep.mubr.bf16.mxu0 %v1521
      %1789 = vmatmul.mubr.bf16.gmra.mxu0 %v1513
      %v1790 = vpop.f32.mrf.mxu0
      %v1791 = vadd.f32 0.0, %v1790
      %v1792 = vpop.f32.mrf.mxu0
      %v1793 = vpop.f32.mrf.mxu0
      %v1794 = vadd.f32 0.0, %v1793
      %v1795 = vpop.f32.mrf.mxu0
      %1796 = vmatprep.mubr.bf16.mxu0 %v1537
      %1797 = vmatmul.mubr.bf16.gmra.mxu0 %v1529
      %v1798 = vpop.f32.mrf.mxu0
      %v1799 = vadd.f32 0.0, %v1798
      %v1800 = vpop.f32.mrf.mxu0
      %v1801 = vpop.f32.mrf.mxu0
      %v1802 = vadd.f32 0.0, %v1801
      %v1803 = vpop.f32.mrf.mxu0
      %1804 = vmatprep.mubr.bf16.mxu0 %v1543
      %1805 = vmatmul.mubr.bf16.gmra.mxu0 %v1540
      %v1806 = vpop.f32.mrf.mxu0
      %v1807 = vadd.f32 0.0, %v1806
      %v1808 = vpop.f32.mrf.mxu0
      %v1809 = vpop.f32.mrf.mxu0
      %v1810 = vadd.f32 0.0, %v1809
      %v1811 = vpop.f32.mrf.mxu0
      %1812 = vdwg.mxu0
      %v1845 = vunpack.c.l.b16 %v1256
      %v1846 = vunpack.c.l.b16 %v1257
      %v1847 = vunpack.c.l.b16 %v1258
      %v1848 = vunpack.c.l.b16 %v1259
      %v1849 = vunpack.c.l.b16 %v1260
      %v1850 = vunpack.c.l.b16 %v1261
      %v1851 = vunpack.c.l.b16 %v1262
      %v1852 = vunpack.c.l.b16 %v1263
      %v1853 = vunpack.c.l.b16 %v1264
      %v1854 = vunpack.c.l.b16 %v1265
      %v1855 = vunpack.c.l.b16 %v1266
      %v1856 = vunpack.c.l.b16 %v1267
      %v1857 = vunpack.c.l.b16 %v1268
      %v1858 = vunpack.c.l.b16 %v1269
      %v1859 = vunpack.c.l.b16 %v1270
      %v1860 = vunpack.c.l.b16 %v1271
      %v1861 = vunpack.c.l.b16 %v1272
      %v1862 = vunpack.c.l.b16 %v1273
      %v1863 = vunpack.c.l.b16 %v1274
      %v1864 = vunpack.c.l.b16 %v1275
      %v1865 = vunpack.c.l.b16 %v1276
      %v1866 = vunpack.c.l.b16 %v1277
      %v1867 = vunpack.c.l.b16 %v1278
      %v1868 = vunpack.c.l.b16 %v1279
      %v1869 = vunpack.c.l.b16 %v1280
      %v1870 = vunpack.c.l.b16 %v1281
      %v1871 = vunpack.c.l.b16 %v1282
      %v1872 = vunpack.c.l.b16 %v1283
      %v1873 = vunpack.c.l.b16 %v1284
      %v1874 = vunpack.c.l.b16 %v1285
      %v1875 = vunpack.c.l.b16 %v1286
      %v1876 = vunpack.c.l.b16 %v1287
      %v1877 = vpack.c.b16 %v1846, %v1845
      %v1878 = vpack.c.b16 %v1848, %v1847
      %v1879 = vpack.c.b16 %v1850, %v1849
      %v1880 = vpack.c.b16 %v1852, %v1851
      %v1881 = vpack.c.b16 %v1854, %v1853
      %v1882 = vpack.c.b16 %v1856, %v1855
      %v1883 = vpack.c.b16 %v1858, %v1857
      %v1884 = vpack.c.b16 %v1860, %v1859
      %v1885 = vpack.c.b16 %v1862, %v1861
      %v1886 = vpack.c.b16 %v1864, %v1863
      %v1887 = vpack.c.b16 %v1866, %v1865
      %v1888 = vpack.c.b16 %v1868, %v1867
      %v1889 = vpack.c.b16 %v1870, %v1869
      %v1890 = vpack.c.b16 %v1872, %v1871
      %v1891 = vpack.c.b16 %v1874, %v1873
      %v1892 = vpack.c.b16 %v1876, %v1875
      %1909 = vmatprep.subr.bf16.mxu0 0
      %1910 = vmatpush1.bf16.msra.mxu0 %v1884
      %1911 = vmatprep.subr.bf16.mxu0 0
      %1912 = vmatpush1.bf16.msra.mxu0 %v1883
      %1913 = vmatprep.subr.bf16.mxu0 0
      %1914 = vmatpush1.bf16.msra.mxu0 %v1882
      %1915 = vmatprep.subr.bf16.mxu0 0
      %1916 = vmatpush1.bf16.msra.mxu0 %v1881
      %1917 = vmatprep.subr.bf16.mxu0 0
      %1918 = vmatpush1.bf16.msra.mxu0 %v1880
      %1919 = vmatprep.subr.bf16.mxu0 0
      %1920 = vmatpush1.bf16.msra.mxu0 %v1879
      %1921 = vmatprep.subr.bf16.mxu0 0
      %1922 = vmatpush1.bf16.msra.mxu0 %v1878
      %1923 = vmatprep.subr.bf16.mxu0 0
      %1924 = vmatpush1.bf16.msra.mxu0 %v1877
      %1925 = vmatprep.subr.bf16.mxu0 0
      %1926 = vmatpush2.bf16.msra.mxu0 %v1892
      %1927 = vmatprep.subr.bf16.mxu0 0
      %1928 = vmatpush2.bf16.msra.mxu0 %v1891
      %1929 = vmatprep.subr.bf16.mxu0 0
      %1930 = vmatpush2.bf16.msra.mxu0 %v1890
      %1931 = vmatprep.subr.bf16.mxu0 0
      %1932 = vmatpush2.bf16.msra.mxu0 %v1889
      %1933 = vmatprep.subr.bf16.mxu0 0
      %1934 = vmatpush2.bf16.msra.mxu0 %v1888
      %1935 = vmatprep.subr.bf16.mxu0 0
      %1936 = vmatpush2.bf16.msra.mxu0 %v1887
      %1937 = vmatprep.subr.bf16.mxu0 0
      %1938 = vmatpush2.bf16.msra.mxu0 %v1886
      %1939 = vmatprep.subr.bf16.mxu0 0
      %1940 = vmatpush2.bf16.msra.mxu0 %v1885
      %1941 = vmatprep.mubr.bf16.mxu0 %v1224
      %1942 = vmatmul.mubr.bf16.gmra.mxu0 %v1128
      %v1943 = vpop.f32.mrf.mxu0
      %v1944 = vadd.f32 %v1703, %v1943
      %v1945 = vpop.f32.mrf.mxu0
      %v1946 = vpop.f32.mrf.mxu0
      %v1947 = vadd.f32 %v1706, %v1946
      %v1948 = vpop.f32.mrf.mxu0
      %1949 = vmatprep.mubr.bf16.mxu0 %v1225
      %1950 = vmatmul.mubr.bf16.gmra.mxu0 %v1129
      %v1951 = vpop.f32.mrf.mxu0
      %v1952 = vadd.f32 %v1711, %v1951
      %v1953 = vpop.f32.mrf.mxu0
      %v1954 = vpop.f32.mrf.mxu0
      %v1955 = vadd.f32 %v1714, %v1954
      %v1956 = vpop.f32.mrf.mxu0
      %1957 = vmatprep.mubr.bf16.mxu0 %v1226
      %1958 = vmatmul.mubr.bf16.gmra.mxu0 %v1130
      %v1959 = vpop.f32.mrf.mxu0
      %v1960 = vadd.f32 %v1719, %v1959
      %v1961 = vpop.f32.mrf.mxu0
      %v1962 = vpop.f32.mrf.mxu0
      %v1963 = vadd.f32 %v1722, %v1962
      %v1964 = vpop.f32.mrf.mxu0
      %1965 = vmatprep.mubr.bf16.mxu0 %v1227
      %1966 = vmatmul.mubr.bf16.gmra.mxu0 %v1131
      %v1967 = vpop.f32.mrf.mxu0
      %v1968 = vadd.f32 %v1727, %v1967
      %v1969 = vpop.f32.mrf.mxu0
      %v1970 = vpop.f32.mrf.mxu0
      %v1971 = vadd.f32 %v1730, %v1970
      %v1972 = vpop.f32.mrf.mxu0
      %1973 = vmatprep.mubr.bf16.mxu0 %v1228
      %1974 = vmatmul.mubr.bf16.gmra.mxu0 %v1132
      %v1975 = vpop.f32.mrf.mxu0
      %v1976 = vadd.f32 %v1735, %v1975
      %v1977 = vpop.f32.mrf.mxu0
      %v1978 = vpop.f32.mrf.mxu0
      %v1979 = vadd.f32 %v1738, %v1978
      %v1980 = vpop.f32.mrf.mxu0
      %1981 = vmatprep.mubr.bf16.mxu0 %v1229
      %1982 = vmatmul.mubr.bf16.gmra.mxu0 %v1133
      %v1983 = vpop.f32.mrf.mxu0
      %v1984 = vadd.f32 %v1743, %v1983
      %v1985 = vpop.f32.mrf.mxu0
      %v1986 = vpop.f32.mrf.mxu0
      %v1987 = vadd.f32 %v1746, %v1986
      %v1988 = vpop.f32.mrf.mxu0
      %1989 = vmatprep.mubr.bf16.mxu0 %v1230
      %1990 = vmatmul.mubr.bf16.gmra.mxu0 %v1134
      %v1991 = vpop.f32.mrf.mxu0
      %v1992 = vadd.f32 %v1751, %v1991
      %v1993 = vpop.f32.mrf.mxu0
      %v1994 = vpop.f32.mrf.mxu0
      %v1995 = vadd.f32 %v1754, %v1994
      %v1996 = vpop.f32.mrf.mxu0
      %1997 = vmatprep.mubr.bf16.mxu0 %v1231
      %1998 = vmatmul.mubr.bf16.gmra.mxu0 %v1135
      %v1999 = vpop.f32.mrf.mxu0
      %v2000 = vadd.f32 %v1759, %v1999
      %v2001 = vpop.f32.mrf.mxu0
      %v2002 = vpop.f32.mrf.mxu0
      %v2003 = vadd.f32 %v1762, %v2002
      %v2004 = vpop.f32.mrf.mxu0
      %2005 = vmatprep.mubr.bf16.mxu0 %v1232
      %2006 = vmatmul.mubr.bf16.gmra.mxu0 %v1136
      %v2007 = vpop.f32.mrf.mxu0
      %v2008 = vadd.f32 %v1767, %v2007
      %v2009 = vpop.f32.mrf.mxu0
      %v2010 = vpop.f32.mrf.mxu0
      %v2011 = vadd.f32 %v1770, %v2010
      %v2012 = vpop.f32.mrf.mxu0
      %2013 = vmatprep.mubr.bf16.mxu0 %v1233
      %2014 = vmatmul.mubr.bf16.gmra.mxu0 %v1137
      %v2015 = vpop.f32.mrf.mxu0
      %v2016 = vadd.f32 %v1775, %v2015
      %v2017 = vpop.f32.mrf.mxu0
      %v2018 = vpop.f32.mrf.mxu0
      %v2019 = vadd.f32 %v1778, %v2018
      %v2020 = vpop.f32.mrf.mxu0
      %2021 = vmatprep.mubr.bf16.mxu0 %v1234
      %2022 = vmatmul.mubr.bf16.gmra.mxu0 %v1138
      %v2023 = vpop.f32.mrf.mxu0
      %v2024 = vadd.f32 %v1783, %v2023
      %v2025 = vpop.f32.mrf.mxu0
      %v2026 = vpop.f32.mrf.mxu0
      %v2027 = vadd.f32 %v1786, %v2026
      %v2028 = vpop.f32.mrf.mxu0
      %2029 = vmatprep.mubr.bf16.mxu0 %v1235
      %2030 = vmatmul.mubr.bf16.gmra.mxu0 %v1139
      %v2031 = vpop.f32.mrf.mxu0
      %v2032 = vadd.f32 %v1791, %v2031
      %v2033 = vpop.f32.mrf.mxu0
      %v2034 = vpop.f32.mrf.mxu0
      %v2035 = vadd.f32 %v1794, %v2034
      %v2036 = vpop.f32.mrf.mxu0
      %2037 = vmatprep.mubr.bf16.mxu0 %v1236
      %2038 = vmatmul.mubr.bf16.gmra.mxu0 %v1140
      %v2039 = vpop.f32.mrf.mxu0
      %v2040 = vadd.f32 %v1799, %v2039
      %v2041 = vpop.f32.mrf.mxu0
      %v2042 = vpop.f32.mrf.mxu0
      %v2043 = vadd.f32 %v1802, %v2042
      %v2044 = vpop.f32.mrf.mxu0
      %2045 = vmatprep.mubr.bf16.mxu0 %v1237
      %2046 = vmatmul.mubr.bf16.gmra.mxu0 %v1141
      %v2047 = vpop.f32.mrf.mxu0
      %v2048 = vadd.f32 %v1807, %v2047
      %v2049 = vpop.f32.mrf.mxu0
      %v2050 = vpop.f32.mrf.mxu0
      %v2051 = vadd.f32 %v1810, %v2050
      %v2052 = vpop.f32.mrf.mxu0
      %2053 = vdwg.mxu0
      %s2054 = scalar_lea.vmem %s3, 256
      %v2055 = vld [vmem:[%s2054] sm:$0xf]
      %v2056 = vld [vmem:[%s2054 + $0x4] sm:$0xf]
      %v2057 = vld [vmem:[%s2054 + $0x8] sm:$0xf]
      %v2058 = vld [vmem:[%s2054 + $0xc] sm:$0xf]
      %v2059 = vld [vmem:[%s2054 + $0x10] sm:$0xf]
      %v2060 = vld [vmem:[%s2054 + $0x14] sm:$0xf]
      %v2061 = vld [vmem:[%s2054 + $0x18] sm:$0xf]
      %v2062 = vld [vmem:[%s2054 + $0x1c] sm:$0xf]
      %v2063 = vld [vmem:[%s2054 + $0x20] sm:$0xf]
      %v2064 = vld [vmem:[%s2054 + $0x24] sm:$0xf]
      %v2065 = vld [vmem:[%s2054 + $0x28] sm:$0xf]
      %v2066 = vld [vmem:[%s2054 + $0x2c] sm:$0xf]
      %v2067 = vld [vmem:[%s2054 + $0x30] sm:$0xf]
      %v2068 = vld [vmem:[%s2054 + $0x34] sm:$0xf]
      %v2069 = vld [vmem:[%s2054 + $0x38] sm:$0xf]
      %v2070 = vld [vmem:[%s2054 + $0x3c] sm:$0xf]
      %v2071 = vld [vmem:[%s2054 + $0x40] sm:$0xf]
      %v2072 = vld [vmem:[%s2054 + $0x44] sm:$0xf]
      %v2073 = vld [vmem:[%s2054 + $0x48] sm:$0xf]
      %v2074 = vld [vmem:[%s2054 + $0x4c] sm:$0xf]
      %v2075 = vld [vmem:[%s2054 + $0x50] sm:$0xf]
      %v2076 = vld [vmem:[%s2054 + $0x54] sm:$0xf]
      %v2077 = vld [vmem:[%s2054 + $0x58] sm:$0xf]
      %v2078 = vld [vmem:[%s2054 + $0x5c] sm:$0xf]
      %v2079 = vld [vmem:[%s2054 + $0x60] sm:$0xf]
      %v2080 = vld [vmem:[%s2054 + $0x64] sm:$0xf]
      %v2081 = vld [vmem:[%s2054 + $0x68] sm:$0xf]
      %v2082 = vld [vmem:[%s2054 + $0x6c] sm:$0xf]
      %v2083 = vld [vmem:[%s2054 + $0x70] sm:$0xf]
      %v2084 = vld [vmem:[%s2054 + $0x74] sm:$0xf]
      %v2085 = vld [vmem:[%s2054 + $0x78] sm:$0xf]
      %v2086 = vld [vmem:[%s2054 + $0x7c] sm:$0xf]
      %vm2087 = vcmask 1046528
      %v2088 = vrot.slane %v1128, 1
      %v2089 = vrot.slane %v1129, 1
      %v2090 = vsel %vm2087, %v2088, %v2089
      %v2091 = vrot.slane %v1224, 1
      %v2092 = vrot.slane %v1225, 1
      %v2093 = vsel %vm2087, %v2091, %v2092
      %v2094 = vrot.slane %v1130, 1
      %v2095 = vsel %vm2087, %v2089, %v2094
      %v2096 = vrot.slane %v1226, 1
      %v2097 = vsel %vm2087, %v2092, %v2096
      %v2098 = vrot.slane %v1131, 1
      %v2099 = vsel %vm2087, %v2094, %v2098
      %v2100 = vrot.slane %v1227, 1
      %v2101 = vsel %vm2087, %v2096, %v2100
      %v2102 = vrot.slane %v1132, 1
      %v2103 = vsel %vm2087, %v2098, %v2102
      %v2104 = vrot.slane %v1228, 1
      %v2105 = vsel %vm2087, %v2100, %v2104
      %v2106 = vrot.slane %v1133, 1
      %v2107 = vsel %vm2087, %v2102, %v2106
      %v2108 = vrot.slane %v1229, 1
      %v2109 = vsel %vm2087, %v2104, %v2108
      %v2110 = vrot.slane %v1134, 1
      %v2111 = vsel %vm2087, %v2106, %v2110
      %v2112 = vrot.slane %v1230, 1
      %v2113 = vsel %vm2087, %v2108, %v2112
      %v2114 = vrot.slane %v1135, 1
      %v2115 = vsel %vm2087, %v2110, %v2114
      %v2116 = vrot.slane %v1231, 1
      %v2117 = vsel %vm2087, %v2112, %v2116
      %v2118 = vrot.slane %v1136, 1
      %v2119 = vsel %vm2087, %v2114, %v2118
      %v2120 = vrot.slane %v1232, 1
      %v2121 = vsel %vm2087, %v2116, %v2120
      %v2122 = vrot.slane %v1137, 1
      %v2123 = vsel %vm2087, %v2118, %v2122
      %v2124 = vrot.slane %v1233, 1
      %v2125 = vsel %vm2087, %v2120, %v2124
      %v2126 = vrot.slane %v1138, 1
      %v2127 = vsel %vm2087, %v2122, %v2126
      %v2128 = vrot.slane %v1234, 1
      %v2129 = vsel %vm2087, %v2124, %v2128
      %v2130 = vrot.slane %v1139, 1
      %v2131 = vsel %vm2087, %v2126, %v2130
      %v2132 = vrot.slane %v1235, 1
      %v2133 = vsel %vm2087, %v2128, %v2132
      %v2134 = vrot.slane %v1140, 1
      %v2135 = vsel %vm2087, %v2130, %v2134
      %v2136 = vrot.slane %v1236, 1
      %v2137 = vsel %vm2087, %v2132, %v2136
      %v2138 = vrot.slane %v1141, 1
      %v2139 = vsel %vm2087, %v2134, %v2138
      %v2140 = vrot.slane %v1237, 1
      %v2141 = vsel %vm2087, %v2136, %v2140
      %v2202 = vunpack.c.l.b16 %v2055
      %v2203 = vunpack.c.l.b16 %v2056
      %v2204 = vunpack.c.l.b16 %v2057
      %v2205 = vunpack.c.l.b16 %v2058
      %v2206 = vunpack.c.l.b16 %v2059
      %v2207 = vunpack.c.l.b16 %v2060
      %v2208 = vunpack.c.l.b16 %v2061
      %v2209 = vunpack.c.l.b16 %v2062
      %v2210 = vunpack.c.l.b16 %v2063
      %v2211 = vunpack.c.l.b16 %v2064
      %v2212 = vunpack.c.l.b16 %v2065
      %v2213 = vunpack.c.l.b16 %v2066
      %v2214 = vunpack.c.l.b16 %v2067
      %v2215 = vunpack.c.l.b16 %v2068
      %v2216 = vunpack.c.l.b16 %v2069
      %v2217 = vunpack.c.l.b16 %v2070
      %v2218 = vunpack.c.l.b16 %v2071
      %v2219 = vunpack.c.l.b16 %v2072
      %v2220 = vunpack.c.l.b16 %v2073
      %v2221 = vunpack.c.l.b16 %v2074
      %v2222 = vunpack.c.l.b16 %v2075
      %v2223 = vunpack.c.l.b16 %v2076
      %v2224 = vunpack.c.l.b16 %v2077
      %v2225 = vunpack.c.l.b16 %v2078
      %v2226 = vunpack.c.l.b16 %v2079
      %v2227 = vunpack.c.l.b16 %v2080
      %v2228 = vunpack.c.l.b16 %v2081
      %v2229 = vunpack.c.l.b16 %v2082
      %v2230 = vunpack.c.l.b16 %v2083
      %v2231 = vunpack.c.l.b16 %v2084
      %v2232 = vunpack.c.l.b16 %v2085
      %v2233 = vunpack.c.l.b16 %v2086
      %v2234 = vpack.c.b16 %v2203, %v2202
      %v2235 = vpack.c.b16 %v2205, %v2204
      %v2236 = vpack.c.b16 %v2207, %v2206
      %v2237 = vpack.c.b16 %v2209, %v2208
      %v2238 = vpack.c.b16 %v2211, %v2210
      %v2239 = vpack.c.b16 %v2213, %v2212
      %v2240 = vpack.c.b16 %v2215, %v2214
      %v2241 = vpack.c.b16 %v2217, %v2216
      %v2242 = vpack.c.b16 %v2219, %v2218
      %v2243 = vpack.c.b16 %v2221, %v2220
      %v2244 = vpack.c.b16 %v2223, %v2222
      %v2245 = vpack.c.b16 %v2225, %v2224
      %v2246 = vpack.c.b16 %v2227, %v2226
      %v2247 = vpack.c.b16 %v2229, %v2228
      %v2248 = vpack.c.b16 %v2231, %v2230
      %v2249 = vpack.c.b16 %v2233, %v2232
      %2266 = vmatprep.subr.bf16.mxu0 0
      %2267 = vmatpush1.bf16.msra.mxu0 %v2241
      %2268 = vmatprep.subr.bf16.mxu0 0
      %2269 = vmatpush1.bf16.msra.mxu0 %v2240
      %2270 = vmatprep.subr.bf16.mxu0 0
      %2271 = vmatpush1.bf16.msra.mxu0 %v2239
      %2272 = vmatprep.subr.bf16.mxu0 0
      %2273 = vmatpush1.bf16.msra.mxu0 %v2238
      %2274 = vmatprep.subr.bf16.mxu0 0
      %2275 = vmatpush1.bf16.msra.mxu0 %v2237
      %2276 = vmatprep.subr.bf16.mxu0 0
      %2277 = vmatpush1.bf16.msra.mxu0 %v2236
      %2278 = vmatprep.subr.bf16.mxu0 0
      %2279 = vmatpush1.bf16.msra.mxu0 %v2235
      %2280 = vmatprep.subr.bf16.mxu0 0
      %2281 = vmatpush1.bf16.msra.mxu0 %v2234
      %2282 = vmatprep.subr.bf16.mxu0 0
      %2283 = vmatpush2.bf16.msra.mxu0 %v2249
      %2284 = vmatprep.subr.bf16.mxu0 0
      %2285 = vmatpush2.bf16.msra.mxu0 %v2248
      %2286 = vmatprep.subr.bf16.mxu0 0
      %2287 = vmatpush2.bf16.msra.mxu0 %v2247
      %2288 = vmatprep.subr.bf16.mxu0 0
      %2289 = vmatpush2.bf16.msra.mxu0 %v2246
      %2290 = vmatprep.subr.bf16.mxu0 0
      %2291 = vmatpush2.bf16.msra.mxu0 %v2245
      %2292 = vmatprep.subr.bf16.mxu0 0
      %2293 = vmatpush2.bf16.msra.mxu0 %v2244
      %2294 = vmatprep.subr.bf16.mxu0 0
      %2295 = vmatpush2.bf16.msra.mxu0 %v2243
      %2296 = vmatprep.subr.bf16.mxu0 0
      %2297 = vmatpush2.bf16.msra.mxu0 %v2242
      %2298 = vmatprep.mubr.bf16.mxu0 %v2093
      %2299 = vmatmul.mubr.bf16.gmra.mxu0 %v2090
      %v2300 = vpop.f32.mrf.mxu0
      %v2301 = vadd.f32 0.0, %v2300
      %v2302 = vpop.f32.mrf.mxu0
      %v2303 = vpop.f32.mrf.mxu0
      %v2304 = vadd.f32 0.0, %v2303
      %v2305 = vpop.f32.mrf.mxu0
      %2306 = vmatprep.mubr.bf16.mxu0 %v2097
      %2307 = vmatmul.mubr.bf16.gmra.mxu0 %v2095
      %v2308 = vpop.f32.mrf.mxu0
      %v2309 = vadd.f32 0.0, %v2308
      %v2310 = vpop.f32.mrf.mxu0
      %v2311 = vpop.f32.mrf.mxu0
      %v2312 = vadd.f32 0.0, %v2311
      %v2313 = vpop.f32.mrf.mxu0
      %2314 = vmatprep.mubr.bf16.mxu0 %v2101
      %2315 = vmatmul.mubr.bf16.gmra.mxu0 %v2099
      %v2316 = vpop.f32.mrf.mxu0
      %v2317 = vadd.f32 0.0, %v2316
      %v2318 = vpop.f32.mrf.mxu0
      %v2319 = vpop.f32.mrf.mxu0
      %v2320 = vadd.f32 0.0, %v2319
      %v2321 = vpop.f32.mrf.mxu0
      %2322 = vmatprep.mubr.bf16.mxu0 %v2105
      %2323 = vmatmul.mubr.bf16.gmra.mxu0 %v2103
      %v2324 = vpop.f32.mrf.mxu0
      %v2325 = vadd.f32 0.0, %v2324
      %v2326 = vpop.f32.mrf.mxu0
      %v2327 = vpop.f32.mrf.mxu0
      %v2328 = vadd.f32 0.0, %v2327
      %v2329 = vpop.f32.mrf.mxu0
      %2330 = vmatprep.mubr.bf16.mxu0 %v2109
      %2331 = vmatmul.mubr.bf16.gmra.mxu0 %v2107
      %v2332 = vpop.f32.mrf.mxu0
      %v2333 = vadd.f32 0.0, %v2332
      %v2334 = vpop.f32.mrf.mxu0
      %v2335 = vpop.f32.mrf.mxu0
      %v2336 = vadd.f32 0.0, %v2335
      %v2337 = vpop.f32.mrf.mxu0
      %2338 = vmatprep.mubr.bf16.mxu0 %v2113
      %2339 = vmatmul.mubr.bf16.gmra.mxu0 %v2111
      %v2340 = vpop.f32.mrf.mxu0
      %v2341 = vadd.f32 0.0, %v2340
      %v2342 = vpop.f32.mrf.mxu0
      %v2343 = vpop.f32.mrf.mxu0
      %v2344 = vadd.f32 0.0, %v2343
      %v2345 = vpop.f32.mrf.mxu0
      %2346 = vmatprep.mubr.bf16.mxu0 %v2117
      %2347 = vmatmul.mubr.bf16.gmra.mxu0 %v2115
      %v2348 = vpop.f32.mrf.mxu0
      %v2349 = vadd.f32 0.0, %v2348
      %v2350 = vpop.f32.mrf.mxu0
      %v2351 = vpop.f32.mrf.mxu0
      %v2352 = vadd.f32 0.0, %v2351
      %v2353 = vpop.f32.mrf.mxu0
      %2354 = vmatprep.mubr.bf16.mxu0 %v2121
      %2355 = vmatmul.mubr.bf16.gmra.mxu0 %v2119
      %v2356 = vpop.f32.mrf.mxu0
      %v2357 = vadd.f32 0.0, %v2356
      %v2358 = vpop.f32.mrf.mxu0
      %v2359 = vpop.f32.mrf.mxu0
      %v2360 = vadd.f32 0.0, %v2359
      %v2361 = vpop.f32.mrf.mxu0
      %2362 = vmatprep.mubr.bf16.mxu0 %v2125
      %2363 = vmatmul.mubr.bf16.gmra.mxu0 %v2123
      %v2364 = vpop.f32.mrf.mxu0
      %v2365 = vadd.f32 0.0, %v2364
      %v2366 = vpop.f32.mrf.mxu0
      %v2367 = vpop.f32.mrf.mxu0
      %v2368 = vadd.f32 0.0, %v2367
      %v2369 = vpop.f32.mrf.mxu0
      %2370 = vmatprep.mubr.bf16.mxu0 %v2129
      %2371 = vmatmul.mubr.bf16.gmra.mxu0 %v2127
      %v2372 = vpop.f32.mrf.mxu0
      %v2373 = vadd.f32 0.0, %v2372
      %v2374 = vpop.f32.mrf.mxu0
      %v2375 = vpop.f32.mrf.mxu0
      %v2376 = vadd.f32 0.0, %v2375
      %v2377 = vpop.f32.mrf.mxu0
      %2378 = vmatprep.mubr.bf16.mxu0 %v2133
      %2379 = vmatmul.mubr.bf16.gmra.mxu0 %v2131
      %v2380 = vpop.f32.mrf.mxu0
      %v2381 = vadd.f32 0.0, %v2380
      %v2382 = vpop.f32.mrf.mxu0
      %v2383 = vpop.f32.mrf.mxu0
      %v2384 = vadd.f32 0.0, %v2383
      %v2385 = vpop.f32.mrf.mxu0
      %2386 = vmatprep.mubr.bf16.mxu0 %v2137
      %2387 = vmatmul.mubr.bf16.gmra.mxu0 %v2135
      %v2388 = vpop.f32.mrf.mxu0
      %v2389 = vadd.f32 0.0, %v2388
      %v2390 = vpop.f32.mrf.mxu0
      %v2391 = vpop.f32.mrf.mxu0
      %v2392 = vadd.f32 0.0, %v2391
      %v2393 = vpop.f32.mrf.mxu0
      %2394 = vmatprep.mubr.bf16.mxu0 %v2141
      %2395 = vmatmul.mubr.bf16.gmra.mxu0 %v2139
      %v2396 = vpop.f32.mrf.mxu0
      %v2397 = vadd.f32 0.0, %v2396
      %v2398 = vpop.f32.mrf.mxu0
      %v2399 = vpop.f32.mrf.mxu0
      %v2400 = vadd.f32 0.0, %v2399
      %v2401 = vpop.f32.mrf.mxu0
      %2402 = vmatprep.mubr.bf16.mxu0 %v2140
      %2403 = vmatmul.mubr.bf16.gmra.mxu0 %v2138
      %v2404 = vpop.f32.mrf.mxu0
      %v2405 = vadd.f32 0.0, %v2404
      %v2406 = vpop.f32.mrf.mxu0
      %v2407 = vpop.f32.mrf.mxu0
      %v2408 = vadd.f32 0.0, %v2407
      %v2409 = vpop.f32.mrf.mxu0
      %2410 = vdwg.mxu0
      %v2411 = vadd.f32 %v1944, %v2301
      %v2412 = vadd.f32 %v1947, %v2304
      %v2413 = vadd.f32 %v1952, %v2309
      %v2414 = vadd.f32 %v1955, %v2312
      %v2415 = vadd.f32 %v1960, %v2317
      %v2416 = vadd.f32 %v1963, %v2320
      %v2417 = vadd.f32 %v1968, %v2325
      %v2418 = vadd.f32 %v1971, %v2328
      %v2419 = vadd.f32 %v1976, %v2333
      %v2420 = vadd.f32 %v1979, %v2336
      %v2421 = vadd.f32 %v1984, %v2341
      %v2422 = vadd.f32 %v1987, %v2344
      %v2423 = vadd.f32 %v1992, %v2349
      %v2424 = vadd.f32 %v1995, %v2352
      %v2425 = vadd.f32 %v2000, %v2357
      %v2426 = vadd.f32 %v2003, %v2360
      %v2427 = vadd.f32 %v2008, %v2365
      %v2428 = vadd.f32 %v2011, %v2368
      %v2429 = vadd.f32 %v2016, %v2373
      %v2430 = vadd.f32 %v2019, %v2376
      %v2431 = vadd.f32 %v2024, %v2381
      %v2432 = vadd.f32 %v2027, %v2384
      %v2433 = vadd.f32 %v2032, %v2389
      %v2434 = vadd.f32 %v2035, %v2392
      %v2435 = vadd.f32 %v2040, %v2397
      %v2436 = vadd.f32 %v2043, %v2400
      %v2437 = vadd.f32 %v2048, %v2405
      %v2438 = vadd.f32 %v2051, %v2408
      %s2439 = scalar_lea.vmem %s3, 384
      %v2440 = vld [vmem:[%s2439] sm:$0xf]
      %v2441 = vld [vmem:[%s2439 + $0x4] sm:$0xf]
      %v2442 = vld [vmem:[%s2439 + $0x8] sm:$0xf]
      %v2443 = vld [vmem:[%s2439 + $0xc] sm:$0xf]
      %v2444 = vld [vmem:[%s2439 + $0x10] sm:$0xf]
      %v2445 = vld [vmem:[%s2439 + $0x14] sm:$0xf]
      %v2446 = vld [vmem:[%s2439 + $0x18] sm:$0xf]
      %v2447 = vld [vmem:[%s2439 + $0x1c] sm:$0xf]
      %v2448 = vld [vmem:[%s2439 + $0x20] sm:$0xf]
      %v2449 = vld [vmem:[%s2439 + $0x24] sm:$0xf]
      %v2450 = vld [vmem:[%s2439 + $0x28] sm:$0xf]
      %v2451 = vld [vmem:[%s2439 + $0x2c] sm:$0xf]
      %v2452 = vld [vmem:[%s2439 + $0x30] sm:$0xf]
      %v2453 = vld [vmem:[%s2439 + $0x34] sm:$0xf]
      %v2454 = vld [vmem:[%s2439 + $0x38] sm:$0xf]
      %v2455 = vld [vmem:[%s2439 + $0x3c] sm:$0xf]
      %v2456 = vld [vmem:[%s2439 + $0x40] sm:$0xf]
      %v2457 = vld [vmem:[%s2439 + $0x44] sm:$0xf]
      %v2458 = vld [vmem:[%s2439 + $0x48] sm:$0xf]
      %v2459 = vld [vmem:[%s2439 + $0x4c] sm:$0xf]
      %v2460 = vld [vmem:[%s2439 + $0x50] sm:$0xf]
      %v2461 = vld [vmem:[%s2439 + $0x54] sm:$0xf]
      %v2462 = vld [vmem:[%s2439 + $0x58] sm:$0xf]
      %v2463 = vld [vmem:[%s2439 + $0x5c] sm:$0xf]
      %v2464 = vld [vmem:[%s2439 + $0x60] sm:$0xf]
      %v2465 = vld [vmem:[%s2439 + $0x64] sm:$0xf]
      %v2466 = vld [vmem:[%s2439 + $0x68] sm:$0xf]
      %v2467 = vld [vmem:[%s2439 + $0x6c] sm:$0xf]
      %v2468 = vld [vmem:[%s2439 + $0x70] sm:$0xf]
      %v2469 = vld [vmem:[%s2439 + $0x74] sm:$0xf]
      %v2470 = vld [vmem:[%s2439 + $0x78] sm:$0xf]
      %v2471 = vld [vmem:[%s2439 + $0x7c] sm:$0xf]
      %v2504 = vunpack.c.l.b16 %v2440
      %v2505 = vunpack.c.l.b16 %v2441
      %v2506 = vunpack.c.l.b16 %v2442
      %v2507 = vunpack.c.l.b16 %v2443
      %v2508 = vunpack.c.l.b16 %v2444
      %v2509 = vunpack.c.l.b16 %v2445
      %v2510 = vunpack.c.l.b16 %v2446
      %v2511 = vunpack.c.l.b16 %v2447
      %v2512 = vunpack.c.l.b16 %v2448
      %v2513 = vunpack.c.l.b16 %v2449
      %v2514 = vunpack.c.l.b16 %v2450
      %v2515 = vunpack.c.l.b16 %v2451
      %v2516 = vunpack.c.l.b16 %v2452
      %v2517 = vunpack.c.l.b16 %v2453
      %v2518 = vunpack.c.l.b16 %v2454
      %v2519 = vunpack.c.l.b16 %v2455
      %v2520 = vunpack.c.l.b16 %v2456
      %v2521 = vunpack.c.l.b16 %v2457
      %v2522 = vunpack.c.l.b16 %v2458
      %v2523 = vunpack.c.l.b16 %v2459
      %v2524 = vunpack.c.l.b16 %v2460
      %v2525 = vunpack.c.l.b16 %v2461
      %v2526 = vunpack.c.l.b16 %v2462
      %v2527 = vunpack.c.l.b16 %v2463
      %v2528 = vunpack.c.l.b16 %v2464
      %v2529 = vunpack.c.l.b16 %v2465
      %v2530 = vunpack.c.l.b16 %v2466
      %v2531 = vunpack.c.l.b16 %v2467
      %v2532 = vunpack.c.l.b16 %v2468
      %v2533 = vunpack.c.l.b16 %v2469
      %v2534 = vunpack.c.l.b16 %v2470
      %v2535 = vunpack.c.l.b16 %v2471
      %v2536 = vpack.c.b16 %v2505, %v2504
      %v2537 = vpack.c.b16 %v2507, %v2506
      %v2538 = vpack.c.b16 %v2509, %v2508
      %v2539 = vpack.c.b16 %v2511, %v2510
      %v2540 = vpack.c.b16 %v2513, %v2512
      %v2541 = vpack.c.b16 %v2515, %v2514
      %v2542 = vpack.c.b16 %v2517, %v2516
      %v2543 = vpack.c.b16 %v2519, %v2518
      %v2544 = vpack.c.b16 %v2521, %v2520
      %v2545 = vpack.c.b16 %v2523, %v2522
      %v2546 = vpack.c.b16 %v2525, %v2524
      %v2547 = vpack.c.b16 %v2527, %v2526
      %v2548 = vpack.c.b16 %v2529, %v2528
      %v2549 = vpack.c.b16 %v2531, %v2530
      %v2550 = vpack.c.b16 %v2533, %v2532
      %v2551 = vpack.c.b16 %v2535, %v2534
      %2568 = vmatprep.subr.bf16.mxu0 0
      %2569 = vmatpush1.bf16.msra.mxu0 %v2543
      %2570 = vmatprep.subr.bf16.mxu0 0
      %2571 = vmatpush1.bf16.msra.mxu0 %v2542
      %2572 = vmatprep.subr.bf16.mxu0 0
      %2573 = vmatpush1.bf16.msra.mxu0 %v2541
      %2574 = vmatprep.subr.bf16.mxu0 0
      %2575 = vmatpush1.bf16.msra.mxu0 %v2540
      %2576 = vmatprep.subr.bf16.mxu0 0
      %2577 = vmatpush1.bf16.msra.mxu0 %v2539
      %2578 = vmatprep.subr.bf16.mxu0 0
      %2579 = vmatpush1.bf16.msra.mxu0 %v2538
      %2580 = vmatprep.subr.bf16.mxu0 0
      %2581 = vmatpush1.bf16.msra.mxu0 %v2537
      %2582 = vmatprep.subr.bf16.mxu0 0
      %2583 = vmatpush1.bf16.msra.mxu0 %v2536
      %2584 = vmatprep.subr.bf16.mxu0 0
      %2585 = vmatpush2.bf16.msra.mxu0 %v2551
      %2586 = vmatprep.subr.bf16.mxu0 0
      %2587 = vmatpush2.bf16.msra.mxu0 %v2550
      %2588 = vmatprep.subr.bf16.mxu0 0
      %2589 = vmatpush2.bf16.msra.mxu0 %v2549
      %2590 = vmatprep.subr.bf16.mxu0 0
      %2591 = vmatpush2.bf16.msra.mxu0 %v2548
      %2592 = vmatprep.subr.bf16.mxu0 0
      %2593 = vmatpush2.bf16.msra.mxu0 %v2547
      %2594 = vmatprep.subr.bf16.mxu0 0
      %2595 = vmatpush2.bf16.msra.mxu0 %v2546
      %2596 = vmatprep.subr.bf16.mxu0 0
      %2597 = vmatpush2.bf16.msra.mxu0 %v2545
      %2598 = vmatprep.subr.bf16.mxu0 0
      %2599 = vmatpush2.bf16.msra.mxu0 %v2544
      %2600 = vmatprep.mubr.bf16.mxu0 %v1225
      %2601 = vmatmul.mubr.bf16.gmra.mxu0 %v1129
      %v2602 = vpop.f32.mrf.mxu0
      %v2603 = vadd.f32 0.0, %v2602
      %v2604 = vpop.f32.mrf.mxu0
      %v2605 = vpop.f32.mrf.mxu0
      %v2606 = vadd.f32 0.0, %v2605
      %v2607 = vpop.f32.mrf.mxu0
      %2608 = vmatprep.mubr.bf16.mxu0 %v1226
      %2609 = vmatmul.mubr.bf16.gmra.mxu0 %v1130
      %v2610 = vpop.f32.mrf.mxu0
      %v2611 = vadd.f32 0.0, %v2610
      %v2612 = vpop.f32.mrf.mxu0
      %v2613 = vpop.f32.mrf.mxu0
      %v2614 = vadd.f32 0.0, %v2613
      %v2615 = vpop.f32.mrf.mxu0
      %2616 = vmatprep.mubr.bf16.mxu0 %v1227
      %2617 = vmatmul.mubr.bf16.gmra.mxu0 %v1131
      %v2618 = vpop.f32.mrf.mxu0
      %v2619 = vadd.f32 0.0, %v2618
      %v2620 = vpop.f32.mrf.mxu0
      %v2621 = vpop.f32.mrf.mxu0
      %v2622 = vadd.f32 0.0, %v2621
      %v2623 = vpop.f32.mrf.mxu0
      %2624 = vmatprep.mubr.bf16.mxu0 %v1228
      %2625 = vmatmul.mubr.bf16.gmra.mxu0 %v1132
      %v2626 = vpop.f32.mrf.mxu0
      %v2627 = vadd.f32 0.0, %v2626
      %v2628 = vpop.f32.mrf.mxu0
      %v2629 = vpop.f32.mrf.mxu0
      %v2630 = vadd.f32 0.0, %v2629
      %v2631 = vpop.f32.mrf.mxu0
      %2632 = vmatprep.mubr.bf16.mxu0 %v1229
      %2633 = vmatmul.mubr.bf16.gmra.mxu0 %v1133
      %v2634 = vpop.f32.mrf.mxu0
      %v2635 = vadd.f32 0.0, %v2634
      %v2636 = vpop.f32.mrf.mxu0
      %v2637 = vpop.f32.mrf.mxu0
      %v2638 = vadd.f32 0.0, %v2637
      %v2639 = vpop.f32.mrf.mxu0
      %2640 = vmatprep.mubr.bf16.mxu0 %v1230
      %2641 = vmatmul.mubr.bf16.gmra.mxu0 %v1134
      %v2642 = vpop.f32.mrf.mxu0
      %v2643 = vadd.f32 0.0, %v2642
      %v2644 = vpop.f32.mrf.mxu0
      %v2645 = vpop.f32.mrf.mxu0
      %v2646 = vadd.f32 0.0, %v2645
      %v2647 = vpop.f32.mrf.mxu0
      %2648 = vmatprep.mubr.bf16.mxu0 %v1231
      %2649 = vmatmul.mubr.bf16.gmra.mxu0 %v1135
      %v2650 = vpop.f32.mrf.mxu0
      %v2651 = vadd.f32 0.0, %v2650
      %v2652 = vpop.f32.mrf.mxu0
      %v2653 = vpop.f32.mrf.mxu0
      %v2654 = vadd.f32 0.0, %v2653
      %v2655 = vpop.f32.mrf.mxu0
      %2656 = vmatprep.mubr.bf16.mxu0 %v1232
      %2657 = vmatmul.mubr.bf16.gmra.mxu0 %v1136
      %v2658 = vpop.f32.mrf.mxu0
      %v2659 = vadd.f32 0.0, %v2658
      %v2660 = vpop.f32.mrf.mxu0
      %v2661 = vpop.f32.mrf.mxu0
      %v2662 = vadd.f32 0.0, %v2661
      %v2663 = vpop.f32.mrf.mxu0
      %2664 = vmatprep.mubr.bf16.mxu0 %v1233
      %2665 = vmatmul.mubr.bf16.gmra.mxu0 %v1137
      %v2666 = vpop.f32.mrf.mxu0
      %v2667 = vadd.f32 0.0, %v2666
      %v2668 = vpop.f32.mrf.mxu0
      %v2669 = vpop.f32.mrf.mxu0
      %v2670 = vadd.f32 0.0, %v2669
      %v2671 = vpop.f32.mrf.mxu0
      %2672 = vmatprep.mubr.bf16.mxu0 %v1234
      %2673 = vmatmul.mubr.bf16.gmra.mxu0 %v1138
      %v2674 = vpop.f32.mrf.mxu0
      %v2675 = vadd.f32 0.0, %v2674
      %v2676 = vpop.f32.mrf.mxu0
      %v2677 = vpop.f32.mrf.mxu0
      %v2678 = vadd.f32 0.0, %v2677
      %v2679 = vpop.f32.mrf.mxu0
      %2680 = vmatprep.mubr.bf16.mxu0 %v1235
      %2681 = vmatmul.mubr.bf16.gmra.mxu0 %v1139
      %v2682 = vpop.f32.mrf.mxu0
      %v2683 = vadd.f32 0.0, %v2682
      %v2684 = vpop.f32.mrf.mxu0
      %v2685 = vpop.f32.mrf.mxu0
      %v2686 = vadd.f32 0.0, %v2685
      %v2687 = vpop.f32.mrf.mxu0
      %2688 = vmatprep.mubr.bf16.mxu0 %v1236
      %2689 = vmatmul.mubr.bf16.gmra.mxu0 %v1140
      %v2690 = vpop.f32.mrf.mxu0
      %v2691 = vadd.f32 0.0, %v2690
      %v2692 = vpop.f32.mrf.mxu0
      %v2693 = vpop.f32.mrf.mxu0
      %v2694 = vadd.f32 0.0, %v2693
      %v2695 = vpop.f32.mrf.mxu0
      %2696 = vmatprep.mubr.bf16.mxu0 %v1237
      %2697 = vmatmul.mubr.bf16.gmra.mxu0 %v1141
      %v2698 = vpop.f32.mrf.mxu0
      %v2699 = vadd.f32 0.0, %v2698
      %v2700 = vpop.f32.mrf.mxu0
      %v2701 = vpop.f32.mrf.mxu0
      %v2702 = vadd.f32 0.0, %v2701
      %v2703 = vpop.f32.mrf.mxu0
      %2704 = vmatprep.mubr.bf16.mxu0 %v1238
      %2705 = vmatmul.mubr.bf16.gmra.mxu0 %v1142
      %v2706 = vpop.f32.mrf.mxu0
      %v2707 = vadd.f32 0.0, %v2706
      %v2708 = vpop.f32.mrf.mxu0
      %v2709 = vpop.f32.mrf.mxu0
      %v2710 = vadd.f32 0.0, %v2709
      %v2711 = vpop.f32.mrf.mxu0
      %2712 = vdwg.mxu0
      %v2713 = vadd.f32 %v2411, %v2603
      %v2714 = vadd.f32 %v2412, %v2606
      %v2715 = vadd.f32 %v2413, %v2611
      %v2716 = vadd.f32 %v2414, %v2614
      %v2717 = vadd.f32 %v2415, %v2619
      %v2718 = vadd.f32 %v2416, %v2622
      %v2719 = vadd.f32 %v2417, %v2627
      %v2720 = vadd.f32 %v2418, %v2630
      %v2721 = vadd.f32 %v2419, %v2635
      %v2722 = vadd.f32 %v2420, %v2638
      %v2723 = vadd.f32 %v2421, %v2643
      %v2724 = vadd.f32 %v2422, %v2646
      %v2725 = vadd.f32 %v2423, %v2651
      %v2726 = vadd.f32 %v2424, %v2654
      %v2727 = vadd.f32 %v2425, %v2659
      %v2728 = vadd.f32 %v2426, %v2662
      %v2729 = vadd.f32 %v2427, %v2667
      %v2730 = vadd.f32 %v2428, %v2670
      %v2731 = vadd.f32 %v2429, %v2675
      %v2732 = vadd.f32 %v2430, %v2678
      %v2733 = vadd.f32 %v2431, %v2683
      %v2734 = vadd.f32 %v2432, %v2686
      %v2735 = vadd.f32 %v2433, %v2691
      %v2736 = vadd.f32 %v2434, %v2694
      %v2737 = vadd.f32 %v2435, %v2699
      %v2738 = vadd.f32 %v2436, %v2702
      %v2739 = vadd.f32 %v2437, %v2707
      %v2740 = vadd.f32 %v2438, %v2710
      %s2741 = scalar_lea.vmem %s3, 512
      %v2742 = vld [vmem:[%s2741] sm:$0xf]
      %v2743 = vld [vmem:[%s2741 + $0x4] sm:$0xf]
      %v2744 = vld [vmem:[%s2741 + $0x8] sm:$0xf]
      %v2745 = vld [vmem:[%s2741 + $0xc] sm:$0xf]
      %v2746 = vld [vmem:[%s2741 + $0x10] sm:$0xf]
      %v2747 = vld [vmem:[%s2741 + $0x14] sm:$0xf]
      %v2748 = vld [vmem:[%s2741 + $0x18] sm:$0xf]
      %v2749 = vld [vmem:[%s2741 + $0x1c] sm:$0xf]
      %v2750 = vld [vmem:[%s2741 + $0x20] sm:$0xf]
      %v2751 = vld [vmem:[%s2741 + $0x24] sm:$0xf]
      %v2752 = vld [vmem:[%s2741 + $0x28] sm:$0xf]
      %v2753 = vld [vmem:[%s2741 + $0x2c] sm:$0xf]
      %v2754 = vld [vmem:[%s2741 + $0x30] sm:$0xf]
      %v2755 = vld [vmem:[%s2741 + $0x34] sm:$0xf]
      %v2756 = vld [vmem:[%s2741 + $0x38] sm:$0xf]
      %v2757 = vld [vmem:[%s2741 + $0x3c] sm:$0xf]
      %v2758 = vld [vmem:[%s2741 + $0x40] sm:$0xf]
      %v2759 = vld [vmem:[%s2741 + $0x44] sm:$0xf]
      %v2760 = vld [vmem:[%s2741 + $0x48] sm:$0xf]
      %v2761 = vld [vmem:[%s2741 + $0x4c] sm:$0xf]
      %v2762 = vld [vmem:[%s2741 + $0x50] sm:$0xf]
      %v2763 = vld [vmem:[%s2741 + $0x54] sm:$0xf]
      %v2764 = vld [vmem:[%s2741 + $0x58] sm:$0xf]
      %v2765 = vld [vmem:[%s2741 + $0x5c] sm:$0xf]
      %v2766 = vld [vmem:[%s2741 + $0x60] sm:$0xf]
      %v2767 = vld [vmem:[%s2741 + $0x64] sm:$0xf]
      %v2768 = vld [vmem:[%s2741 + $0x68] sm:$0xf]
      %v2769 = vld [vmem:[%s2741 + $0x6c] sm:$0xf]
      %v2770 = vld [vmem:[%s2741 + $0x70] sm:$0xf]
      %v2771 = vld [vmem:[%s2741 + $0x74] sm:$0xf]
      %v2772 = vld [vmem:[%s2741 + $0x78] sm:$0xf]
      %v2773 = vld [vmem:[%s2741 + $0x7c] sm:$0xf]
      %v2775 = vshll.u32 %v1142, 16
      %v2777 = vrot.slane %v2775, 1
      %v2778 = vsel %vm1321, %v1540, %v2777
      %v2780 = vshll.u32 %v1238, 16
      %v2782 = vrot.slane %v2780, 1
      %v2783 = vsel %vm1321, %v1543, %v2782
      %v2784 = vshrl.u32 %v1142, 16
      %v2786 = vor.u32 %v2784, %v2777
      %v2787 = vshrl.u32 %v1238, 16
      %v2789 = vor.u32 %v2787, %v2782
      %v2826 = vunpack.c.l.b16 %v2742
      %v2827 = vunpack.c.l.b16 %v2743
      %v2828 = vunpack.c.l.b16 %v2744
      %v2829 = vunpack.c.l.b16 %v2745
      %v2830 = vunpack.c.l.b16 %v2746
      %v2831 = vunpack.c.l.b16 %v2747
      %v2832 = vunpack.c.l.b16 %v2748
      %v2833 = vunpack.c.l.b16 %v2749
      %v2834 = vunpack.c.l.b16 %v2750
      %v2835 = vunpack.c.l.b16 %v2751
      %v2836 = vunpack.c.l.b16 %v2752
      %v2837 = vunpack.c.l.b16 %v2753
      %v2838 = vunpack.c.l.b16 %v2754
      %v2839 = vunpack.c.l.b16 %v2755
      %v2840 = vunpack.c.l.b16 %v2756
      %v2841 = vunpack.c.l.b16 %v2757
      %v2842 = vunpack.c.l.b16 %v2758
      %v2843 = vunpack.c.l.b16 %v2759
      %v2844 = vunpack.c.l.b16 %v2760
      %v2845 = vunpack.c.l.b16 %v2761
      %v2846 = vunpack.c.l.b16 %v2762
      %v2847 = vunpack.c.l.b16 %v2763
      %v2848 = vunpack.c.l.b16 %v2764
      %v2849 = vunpack.c.l.b16 %v2765
      %v2850 = vunpack.c.l.b16 %v2766
      %v2851 = vunpack.c.l.b16 %v2767
      %v2852 = vunpack.c.l.b16 %v2768
      %v2853 = vunpack.c.l.b16 %v2769
      %v2854 = vunpack.c.l.b16 %v2770
      %v2855 = vunpack.c.l.b16 %v2771
      %v2856 = vunpack.c.l.b16 %v2772
      %v2857 = vunpack.c.l.b16 %v2773
      %v2858 = vpack.c.b16 %v2827, %v2826
      %v2859 = vpack.c.b16 %v2829, %v2828
      %v2860 = vpack.c.b16 %v2831, %v2830
      %v2861 = vpack.c.b16 %v2833, %v2832
      %v2862 = vpack.c.b16 %v2835, %v2834
      %v2863 = vpack.c.b16 %v2837, %v2836
      %v2864 = vpack.c.b16 %v2839, %v2838
      %v2865 = vpack.c.b16 %v2841, %v2840
      %v2866 = vpack.c.b16 %v2843, %v2842
      %v2867 = vpack.c.b16 %v2845, %v2844
      %v2868 = vpack.c.b16 %v2847, %v2846
      %v2869 = vpack.c.b16 %v2849, %v2848
      %v2870 = vpack.c.b16 %v2851, %v2850
      %v2871 = vpack.c.b16 %v2853, %v2852
      %v2872 = vpack.c.b16 %v2855, %v2854
      %v2873 = vpack.c.b16 %v2857, %v2856
      %2890 = vmatprep.subr.bf16.mxu0 0
      %2891 = vmatpush1.bf16.msra.mxu0 %v2865
      %2892 = vmatprep.subr.bf16.mxu0 0
      %2893 = vmatpush1.bf16.msra.mxu0 %v2864
      %2894 = vmatprep.subr.bf16.mxu0 0
      %2895 = vmatpush1.bf16.msra.mxu0 %v2863
      %2896 = vmatprep.subr.bf16.mxu0 0
      %2897 = vmatpush1.bf16.msra.mxu0 %v2862
      %2898 = vmatprep.subr.bf16.mxu0 0
      %2899 = vmatpush1.bf16.msra.mxu0 %v2861
      %2900 = vmatprep.subr.bf16.mxu0 0
      %2901 = vmatpush1.bf16.msra.mxu0 %v2860
      %2902 = vmatprep.subr.bf16.mxu0 0
      %2903 = vmatpush1.bf16.msra.mxu0 %v2859
      %2904 = vmatprep.subr.bf16.mxu0 0
      %2905 = vmatpush1.bf16.msra.mxu0 %v2858
      %2906 = vmatprep.subr.bf16.mxu0 0
      %2907 = vmatpush2.bf16.msra.mxu0 %v2873
      %2908 = vmatprep.subr.bf16.mxu0 0
      %2909 = vmatpush2.bf16.msra.mxu0 %v2872
      %2910 = vmatprep.subr.bf16.mxu0 0
      %2911 = vmatpush2.bf16.msra.mxu0 %v2871
      %2912 = vmatprep.subr.bf16.mxu0 0
      %2913 = vmatpush2.bf16.msra.mxu0 %v2870
      %2914 = vmatprep.subr.bf16.mxu0 0
      %2915 = vmatpush2.bf16.msra.mxu0 %v2869
      %2916 = vmatprep.subr.bf16.mxu0 0
      %2917 = vmatpush2.bf16.msra.mxu0 %v2868
      %2918 = vmatprep.subr.bf16.mxu0 0
      %2919 = vmatpush2.bf16.msra.mxu0 %v2867
      %2920 = vmatprep.subr.bf16.mxu0 0
      %2921 = vmatpush2.bf16.msra.mxu0 %v2866
      %2922 = vmatprep.mubr.bf16.mxu0 %v1361
      %2923 = vmatmul.mubr.bf16.gmra.mxu0 %v1353
      %v2924 = vpop.f32.mrf.mxu0
      %v2925 = vadd.f32 0.0, %v2924
      %v2926 = vpop.f32.mrf.mxu0
      %v2927 = vpop.f32.mrf.mxu0
      %v2928 = vadd.f32 0.0, %v2927
      %v2929 = vpop.f32.mrf.mxu0
      %2930 = vmatprep.mubr.bf16.mxu0 %v1377
      %2931 = vmatmul.mubr.bf16.gmra.mxu0 %v1369
      %v2932 = vpop.f32.mrf.mxu0
      %v2933 = vadd.f32 0.0, %v2932
      %v2934 = vpop.f32.mrf.mxu0
      %v2935 = vpop.f32.mrf.mxu0
      %v2936 = vadd.f32 0.0, %v2935
      %v2937 = vpop.f32.mrf.mxu0
      %2938 = vmatprep.mubr.bf16.mxu0 %v1393
      %2939 = vmatmul.mubr.bf16.gmra.mxu0 %v1385
      %v2940 = vpop.f32.mrf.mxu0
      %v2941 = vadd.f32 0.0, %v2940
      %v2942 = vpop.f32.mrf.mxu0
      %v2943 = vpop.f32.mrf.mxu0
      %v2944 = vadd.f32 0.0, %v2943
      %v2945 = vpop.f32.mrf.mxu0
      %2946 = vmatprep.mubr.bf16.mxu0 %v1409
      %2947 = vmatmul.mubr.bf16.gmra.mxu0 %v1401
      %v2948 = vpop.f32.mrf.mxu0
      %v2949 = vadd.f32 0.0, %v2948
      %v2950 = vpop.f32.mrf.mxu0
      %v2951 = vpop.f32.mrf.mxu0
      %v2952 = vadd.f32 0.0, %v2951
      %v2953 = vpop.f32.mrf.mxu0
      %2954 = vmatprep.mubr.bf16.mxu0 %v1425
      %2955 = vmatmul.mubr.bf16.gmra.mxu0 %v1417
      %v2956 = vpop.f32.mrf.mxu0
      %v2957 = vadd.f32 0.0, %v2956
      %v2958 = vpop.f32.mrf.mxu0
      %v2959 = vpop.f32.mrf.mxu0
      %v2960 = vadd.f32 0.0, %v2959
      %v2961 = vpop.f32.mrf.mxu0
      %2962 = vmatprep.mubr.bf16.mxu0 %v1441
      %2963 = vmatmul.mubr.bf16.gmra.mxu0 %v1433
      %v2964 = vpop.f32.mrf.mxu0
      %v2965 = vadd.f32 0.0, %v2964
      %v2966 = vpop.f32.mrf.mxu0
      %v2967 = vpop.f32.mrf.mxu0
      %v2968 = vadd.f32 0.0, %v2967
      %v2969 = vpop.f32.mrf.mxu0
      %2970 = vmatprep.mubr.bf16.mxu0 %v1457
      %2971 = vmatmul.mubr.bf16.gmra.mxu0 %v1449
      %v2972 = vpop.f32.mrf.mxu0
      %v2973 = vadd.f32 0.0, %v2972
      %v2974 = vpop.f32.mrf.mxu0
      %v2975 = vpop.f32.mrf.mxu0
      %v2976 = vadd.f32 0.0, %v2975
      %v2977 = vpop.f32.mrf.mxu0
      %2978 = vmatprep.mubr.bf16.mxu0 %v1473
      %2979 = vmatmul.mubr.bf16.gmra.mxu0 %v1465
      %v2980 = vpop.f32.mrf.mxu0
      %v2981 = vadd.f32 0.0, %v2980
      %v2982 = vpop.f32.mrf.mxu0
      %v2983 = vpop.f32.mrf.mxu0
      %v2984 = vadd.f32 0.0, %v2983
      %v2985 = vpop.f32.mrf.mxu0
      %2986 = vmatprep.mubr.bf16.mxu0 %v1489
      %2987 = vmatmul.mubr.bf16.gmra.mxu0 %v1481
      %v2988 = vpop.f32.mrf.mxu0
      %v2989 = vadd.f32 0.0, %v2988
      %v2990 = vpop.f32.mrf.mxu0
      %v2991 = vpop.f32.mrf.mxu0
      %v2992 = vadd.f32 0.0, %v2991
      %v2993 = vpop.f32.mrf.mxu0
      %2994 = vmatprep.mubr.bf16.mxu0 %v1505
      %2995 = vmatmul.mubr.bf16.gmra.mxu0 %v1497
      %v2996 = vpop.f32.mrf.mxu0
      %v2997 = vadd.f32 0.0, %v2996
      %v2998 = vpop.f32.mrf.mxu0
      %v2999 = vpop.f32.mrf.mxu0
      %v3000 = vadd.f32 0.0, %v2999
      %v3001 = vpop.f32.mrf.mxu0
      %3002 = vmatprep.mubr.bf16.mxu0 %v1521
      %3003 = vmatmul.mubr.bf16.gmra.mxu0 %v1513
      %v3004 = vpop.f32.mrf.mxu0
      %v3005 = vadd.f32 0.0, %v3004
      %v3006 = vpop.f32.mrf.mxu0
      %v3007 = vpop.f32.mrf.mxu0
      %v3008 = vadd.f32 0.0, %v3007
      %v3009 = vpop.f32.mrf.mxu0
      %3010 = vmatprep.mubr.bf16.mxu0 %v1537
      %3011 = vmatmul.mubr.bf16.gmra.mxu0 %v1529
      %v3012 = vpop.f32.mrf.mxu0
      %v3013 = vadd.f32 0.0, %v3012
      %v3014 = vpop.f32.mrf.mxu0
      %v3015 = vpop.f32.mrf.mxu0
      %v3016 = vadd.f32 0.0, %v3015
      %v3017 = vpop.f32.mrf.mxu0
      %3018 = vmatprep.mubr.bf16.mxu0 %v2783
      %3019 = vmatmul.mubr.bf16.gmra.mxu0 %v2778
      %v3020 = vpop.f32.mrf.mxu0
      %v3021 = vadd.f32 0.0, %v3020
      %v3022 = vpop.f32.mrf.mxu0
      %v3023 = vpop.f32.mrf.mxu0
      %v3024 = vadd.f32 0.0, %v3023
      %v3025 = vpop.f32.mrf.mxu0
      %3026 = vmatprep.mubr.bf16.mxu0 %v2789
      %3027 = vmatmul.mubr.bf16.gmra.mxu0 %v2786
      %v3028 = vpop.f32.mrf.mxu0
      %v3029 = vadd.f32 0.0, %v3028
      %v3030 = vpop.f32.mrf.mxu0
      %v3031 = vpop.f32.mrf.mxu0
      %v3032 = vadd.f32 0.0, %v3031
      %v3033 = vpop.f32.mrf.mxu0
      %3034 = vdwg.mxu0
      %v3035 = vadd.f32 %v2713, %v2925
      %v3036 = vadd.f32 %v2714, %v2928
      %v3037 = vadd.f32 %v2715, %v2933
      %v3038 = vadd.f32 %v2716, %v2936
      %v3039 = vadd.f32 %v2717, %v2941
      %v3040 = vadd.f32 %v2718, %v2944
      %v3041 = vadd.f32 %v2719, %v2949
      %v3042 = vadd.f32 %v2720, %v2952
      %v3043 = vadd.f32 %v2721, %v2957
      %v3044 = vadd.f32 %v2722, %v2960
      %v3045 = vadd.f32 %v2723, %v2965
      %v3046 = vadd.f32 %v2724, %v2968
      %v3047 = vadd.f32 %v2725, %v2973
      %v3048 = vadd.f32 %v2726, %v2976
      %v3049 = vadd.f32 %v2727, %v2981
      %v3050 = vadd.f32 %v2728, %v2984
      %v3051 = vadd.f32 %v2729, %v2989
      %v3052 = vadd.f32 %v2730, %v2992
      %v3053 = vadd.f32 %v2731, %v2997
      %v3054 = vadd.f32 %v2732, %v3000
      %v3055 = vadd.f32 %v2733, %v3005
      %v3056 = vadd.f32 %v2734, %v3008
      %v3057 = vadd.f32 %v2735, %v3013
      %v3058 = vadd.f32 %v2736, %v3016
      %v3059 = vadd.f32 %v2737, %v3021
      %v3060 = vadd.f32 %v2738, %v3024
      %v3061 = vadd.f32 %v2739, %v3029
      %v3062 = vadd.f32 %v2740, %v3032
      %s3063 = scalar_lea.vmem %s3, 640
      %v3064 = vld [vmem:[%s3063] sm:$0xf]
      %v3065 = vld [vmem:[%s3063 + $0x4] sm:$0xf]
      %v3066 = vld [vmem:[%s3063 + $0x8] sm:$0xf]
      %v3067 = vld [vmem:[%s3063 + $0xc] sm:$0xf]
      %v3068 = vld [vmem:[%s3063 + $0x10] sm:$0xf]
      %v3069 = vld [vmem:[%s3063 + $0x14] sm:$0xf]
      %v3070 = vld [vmem:[%s3063 + $0x18] sm:$0xf]
      %v3071 = vld [vmem:[%s3063 + $0x1c] sm:$0xf]
      %v3072 = vld [vmem:[%s3063 + $0x20] sm:$0xf]
      %v3073 = vld [vmem:[%s3063 + $0x24] sm:$0xf]
      %v3074 = vld [vmem:[%s3063 + $0x28] sm:$0xf]
      %v3075 = vld [vmem:[%s3063 + $0x2c] sm:$0xf]
      %v3076 = vld [vmem:[%s3063 + $0x30] sm:$0xf]
      %v3077 = vld [vmem:[%s3063 + $0x34] sm:$0xf]
      %v3078 = vld [vmem:[%s3063 + $0x38] sm:$0xf]
      %v3079 = vld [vmem:[%s3063 + $0x3c] sm:$0xf]
      %v3080 = vld [vmem:[%s3063 + $0x40] sm:$0xf]
      %v3081 = vld [vmem:[%s3063 + $0x44] sm:$0xf]
      %v3082 = vld [vmem:[%s3063 + $0x48] sm:$0xf]
      %v3083 = vld [vmem:[%s3063 + $0x4c] sm:$0xf]
      %v3084 = vld [vmem:[%s3063 + $0x50] sm:$0xf]
      %v3085 = vld [vmem:[%s3063 + $0x54] sm:$0xf]
      %v3086 = vld [vmem:[%s3063 + $0x58] sm:$0xf]
      %v3087 = vld [vmem:[%s3063 + $0x5c] sm:$0xf]
      %v3088 = vld [vmem:[%s3063 + $0x60] sm:$0xf]
      %v3089 = vld [vmem:[%s3063 + $0x64] sm:$0xf]
      %v3090 = vld [vmem:[%s3063 + $0x68] sm:$0xf]
      %v3091 = vld [vmem:[%s3063 + $0x6c] sm:$0xf]
      %v3092 = vld [vmem:[%s3063 + $0x70] sm:$0xf]
      %v3093 = vld [vmem:[%s3063 + $0x74] sm:$0xf]
      %v3094 = vld [vmem:[%s3063 + $0x78] sm:$0xf]
      %v3095 = vld [vmem:[%s3063 + $0x7c] sm:$0xf]
      %v3096 = vrot.slane %v1142, 1
      %v3097 = vsel %vm2087, %v2138, %v3096
      %v3098 = vrot.slane %v1238, 1
      %v3099 = vsel %vm2087, %v2140, %v3098
      %v3136 = vunpack.c.l.b16 %v3064
      %v3137 = vunpack.c.l.b16 %v3065
      %v3138 = vunpack.c.l.b16 %v3066
      %v3139 = vunpack.c.l.b16 %v3067
      %v3140 = vunpack.c.l.b16 %v3068
      %v3141 = vunpack.c.l.b16 %v3069
      %v3142 = vunpack.c.l.b16 %v3070
      %v3143 = vunpack.c.l.b16 %v3071
      %v3144 = vunpack.c.l.b16 %v3072
      %v3145 = vunpack.c.l.b16 %v3073
      %v3146 = vunpack.c.l.b16 %v3074
      %v3147 = vunpack.c.l.b16 %v3075
      %v3148 = vunpack.c.l.b16 %v3076
      %v3149 = vunpack.c.l.b16 %v3077
      %v3150 = vunpack.c.l.b16 %v3078
      %v3151 = vunpack.c.l.b16 %v3079
      %v3152 = vunpack.c.l.b16 %v3080
      %v3153 = vunpack.c.l.b16 %v3081
      %v3154 = vunpack.c.l.b16 %v3082
      %v3155 = vunpack.c.l.b16 %v3083
      %v3156 = vunpack.c.l.b16 %v3084
      %v3157 = vunpack.c.l.b16 %v3085
      %v3158 = vunpack.c.l.b16 %v3086
      %v3159 = vunpack.c.l.b16 %v3087
      %v3160 = vunpack.c.l.b16 %v3088
      %v3161 = vunpack.c.l.b16 %v3089
      %v3162 = vunpack.c.l.b16 %v3090
      %v3163 = vunpack.c.l.b16 %v3091
      %v3164 = vunpack.c.l.b16 %v3092
      %v3165 = vunpack.c.l.b16 %v3093
      %v3166 = vunpack.c.l.b16 %v3094
      %v3167 = vunpack.c.l.b16 %v3095
      %v3168 = vpack.c.b16 %v3137, %v3136
      %v3169 = vpack.c.b16 %v3139, %v3138
      %v3170 = vpack.c.b16 %v3141, %v3140
      %v3171 = vpack.c.b16 %v3143, %v3142
      %v3172 = vpack.c.b16 %v3145, %v3144
      %v3173 = vpack.c.b16 %v3147, %v3146
      %v3174 = vpack.c.b16 %v3149, %v3148
      %v3175 = vpack.c.b16 %v3151, %v3150
      %v3176 = vpack.c.b16 %v3153, %v3152
      %v3177 = vpack.c.b16 %v3155, %v3154
      %v3178 = vpack.c.b16 %v3157, %v3156
      %v3179 = vpack.c.b16 %v3159, %v3158
      %v3180 = vpack.c.b16 %v3161, %v3160
      %v3181 = vpack.c.b16 %v3163, %v3162
      %v3182 = vpack.c.b16 %v3165, %v3164
      %v3183 = vpack.c.b16 %v3167, %v3166
      %3200 = vmatprep.subr.bf16.mxu0 0
      %3201 = vmatpush1.bf16.msra.mxu0 %v3175
      %3202 = vmatprep.subr.bf16.mxu0 0
      %3203 = vmatpush1.bf16.msra.mxu0 %v3174
      %3204 = vmatprep.subr.bf16.mxu0 0
      %3205 = vmatpush1.bf16.msra.mxu0 %v3173
      %3206 = vmatprep.subr.bf16.mxu0 0
      %3207 = vmatpush1.bf16.msra.mxu0 %v3172
      %3208 = vmatprep.subr.bf16.mxu0 0
      %3209 = vmatpush1.bf16.msra.mxu0 %v3171
      %3210 = vmatprep.subr.bf16.mxu0 0
      %3211 = vmatpush1.bf16.msra.mxu0 %v3170
      %3212 = vmatprep.subr.bf16.mxu0 0
      %3213 = vmatpush1.bf16.msra.mxu0 %v3169
      %3214 = vmatprep.subr.bf16.mxu0 0
      %3215 = vmatpush1.bf16.msra.mxu0 %v3168
      %3216 = vmatprep.subr.bf16.mxu0 0
      %3217 = vmatpush2.bf16.msra.mxu0 %v3183
      %3218 = vmatprep.subr.bf16.mxu0 0
      %3219 = vmatpush2.bf16.msra.mxu0 %v3182
      %3220 = vmatprep.subr.bf16.mxu0 0
      %3221 = vmatpush2.bf16.msra.mxu0 %v3181
      %3222 = vmatprep.subr.bf16.mxu0 0
      %3223 = vmatpush2.bf16.msra.mxu0 %v3180
      %3224 = vmatprep.subr.bf16.mxu0 0
      %3225 = vmatpush2.bf16.msra.mxu0 %v3179
      %3226 = vmatprep.subr.bf16.mxu0 0
      %3227 = vmatpush2.bf16.msra.mxu0 %v3178
      %3228 = vmatprep.subr.bf16.mxu0 0
      %3229 = vmatpush2.bf16.msra.mxu0 %v3177
      %3230 = vmatprep.subr.bf16.mxu0 0
      %3231 = vmatpush2.bf16.msra.mxu0 %v3176
      %3232 = vmatprep.mubr.bf16.mxu0 %v2097
      %3233 = vmatmul.mubr.bf16.gmra.mxu0 %v2095
      %v3234 = vpop.f32.mrf.mxu0
      %v3235 = vadd.f32 0.0, %v3234
      %v3236 = vpop.f32.mrf.mxu0
      %v3237 = vpop.f32.mrf.mxu0
      %v3238 = vadd.f32 0.0, %v3237
      %v3239 = vpop.f32.mrf.mxu0
      %3240 = vmatprep.mubr.bf16.mxu0 %v2101
      %3241 = vmatmul.mubr.bf16.gmra.mxu0 %v2099
      %v3242 = vpop.f32.mrf.mxu0
      %v3243 = vadd.f32 0.0, %v3242
      %v3244 = vpop.f32.mrf.mxu0
      %v3245 = vpop.f32.mrf.mxu0
      %v3246 = vadd.f32 0.0, %v3245
      %v3247 = vpop.f32.mrf.mxu0
      %3248 = vmatprep.mubr.bf16.mxu0 %v2105
      %3249 = vmatmul.mubr.bf16.gmra.mxu0 %v2103
      %v3250 = vpop.f32.mrf.mxu0
      %v3251 = vadd.f32 0.0, %v3250
      %v3252 = vpop.f32.mrf.mxu0
      %v3253 = vpop.f32.mrf.mxu0
      %v3254 = vadd.f32 0.0, %v3253
      %v3255 = vpop.f32.mrf.mxu0
      %3256 = vmatprep.mubr.bf16.mxu0 %v2109
      %3257 = vmatmul.mubr.bf16.gmra.mxu0 %v2107
      %v3258 = vpop.f32.mrf.mxu0
      %v3259 = vadd.f32 0.0, %v3258
      %v3260 = vpop.f32.mrf.mxu0
      %v3261 = vpop.f32.mrf.mxu0
      %v3262 = vadd.f32 0.0, %v3261
      %v3263 = vpop.f32.mrf.mxu0
      %3264 = vmatprep.mubr.bf16.mxu0 %v2113
      %3265 = vmatmul.mubr.bf16.gmra.mxu0 %v2111
      %v3266 = vpop.f32.mrf.mxu0
      %v3267 = vadd.f32 0.0, %v3266
      %v3268 = vpop.f32.mrf.mxu0
      %v3269 = vpop.f32.mrf.mxu0
      %v3270 = vadd.f32 0.0, %v3269
      %v3271 = vpop.f32.mrf.mxu0
      %3272 = vmatprep.mubr.bf16.mxu0 %v2117
      %3273 = vmatmul.mubr.bf16.gmra.mxu0 %v2115
      %v3274 = vpop.f32.mrf.mxu0
      %v3275 = vadd.f32 0.0, %v3274
      %v3276 = vpop.f32.mrf.mxu0
      %v3277 = vpop.f32.mrf.mxu0
      %v3278 = vadd.f32 0.0, %v3277
      %v3279 = vpop.f32.mrf.mxu0
      %3280 = vmatprep.mubr.bf16.mxu0 %v2121
      %3281 = vmatmul.mubr.bf16.gmra.mxu0 %v2119
      %v3282 = vpop.f32.mrf.mxu0
      %v3283 = vadd.f32 0.0, %v3282
      %v3284 = vpop.f32.mrf.mxu0
      %v3285 = vpop.f32.mrf.mxu0
      %v3286 = vadd.f32 0.0, %v3285
      %v3287 = vpop.f32.mrf.mxu0
      %3288 = vmatprep.mubr.bf16.mxu0 %v2125
      %3289 = vmatmul.mubr.bf16.gmra.mxu0 %v2123
      %v3290 = vpop.f32.mrf.mxu0
      %v3291 = vadd.f32 0.0, %v3290
      %v3292 = vpop.f32.mrf.mxu0
      %v3293 = vpop.f32.mrf.mxu0
      %v3294 = vadd.f32 0.0, %v3293
      %v3295 = vpop.f32.mrf.mxu0
      %3296 = vmatprep.mubr.bf16.mxu0 %v2129
      %3297 = vmatmul.mubr.bf16.gmra.mxu0 %v2127
      %v3298 = vpop.f32.mrf.mxu0
      %v3299 = vadd.f32 0.0, %v3298
      %v3300 = vpop.f32.mrf.mxu0
      %v3301 = vpop.f32.mrf.mxu0
      %v3302 = vadd.f32 0.0, %v3301
      %v3303 = vpop.f32.mrf.mxu0
      %3304 = vmatprep.mubr.bf16.mxu0 %v2133
      %3305 = vmatmul.mubr.bf16.gmra.mxu0 %v2131
      %v3306 = vpop.f32.mrf.mxu0
      %v3307 = vadd.f32 0.0, %v3306
      %v3308 = vpop.f32.mrf.mxu0
      %v3309 = vpop.f32.mrf.mxu0
      %v3310 = vadd.f32 0.0, %v3309
      %v3311 = vpop.f32.mrf.mxu0
      %3312 = vmatprep.mubr.bf16.mxu0 %v2137
      %3313 = vmatmul.mubr.bf16.gmra.mxu0 %v2135
      %v3314 = vpop.f32.mrf.mxu0
      %v3315 = vadd.f32 0.0, %v3314
      %v3316 = vpop.f32.mrf.mxu0
      %v3317 = vpop.f32.mrf.mxu0
      %v3318 = vadd.f32 0.0, %v3317
      %v3319 = vpop.f32.mrf.mxu0
      %3320 = vmatprep.mubr.bf16.mxu0 %v2141
      %3321 = vmatmul.mubr.bf16.gmra.mxu0 %v2139
      %v3322 = vpop.f32.mrf.mxu0
      %v3323 = vadd.f32 0.0, %v3322
      %v3324 = vpop.f32.mrf.mxu0
      %v3325 = vpop.f32.mrf.mxu0
      %v3326 = vadd.f32 0.0, %v3325
      %v3327 = vpop.f32.mrf.mxu0
      %3328 = vmatprep.mubr.bf16.mxu0 %v3099
      %3329 = vmatmul.mubr.bf16.gmra.mxu0 %v3097
      %v3330 = vpop.f32.mrf.mxu0
      %v3331 = vadd.f32 0.0, %v3330
      %v3332 = vpop.f32.mrf.mxu0
      %v3333 = vpop.f32.mrf.mxu0
      %v3334 = vadd.f32 0.0, %v3333
      %v3335 = vpop.f32.mrf.mxu0
      %3336 = vmatprep.mubr.bf16.mxu0 %v3098
      %3337 = vmatmul.mubr.bf16.gmra.mxu0 %v3096
      %v3338 = vpop.f32.mrf.mxu0
      %v3339 = vadd.f32 0.0, %v3338
      %v3340 = vpop.f32.mrf.mxu0
      %v3341 = vpop.f32.mrf.mxu0
      %v3342 = vadd.f32 0.0, %v3341
      %v3343 = vpop.f32.mrf.mxu0
      %3344 = vdwg.mxu0
      %v3345 = vadd.f32 %v3035, %v3235
      %v3346 = vadd.f32 %v3036, %v3238
      %v3347 = vadd.f32 %v3037, %v3243
      %v3348 = vadd.f32 %v3038, %v3246
      %v3349 = vadd.f32 %v3039, %v3251
      %v3350 = vadd.f32 %v3040, %v3254
      %v3351 = vadd.f32 %v3041, %v3259
      %v3352 = vadd.f32 %v3042, %v3262
      %v3353 = vadd.f32 %v3043, %v3267
      %v3354 = vadd.f32 %v3044, %v3270
      %v3355 = vadd.f32 %v3045, %v3275
      %v3356 = vadd.f32 %v3046, %v3278
      %v3357 = vadd.f32 %v3047, %v3283
      %v3358 = vadd.f32 %v3048, %v3286
      %v3359 = vadd.f32 %v3049, %v3291
      %v3360 = vadd.f32 %v3050, %v3294
      %v3361 = vadd.f32 %v3051, %v3299
      %v3362 = vadd.f32 %v3052, %v3302
      %v3363 = vadd.f32 %v3053, %v3307
      %v3364 = vadd.f32 %v3054, %v3310
      %v3365 = vadd.f32 %v3055, %v3315
      %v3366 = vadd.f32 %v3056, %v3318
      %v3367 = vadd.f32 %v3057, %v3323
      %v3368 = vadd.f32 %v3058, %v3326
      %v3369 = vadd.f32 %v3059, %v3331
      %v3370 = vadd.f32 %v3060, %v3334
      %v3371 = vadd.f32 %v3061, %v3339
      %v3372 = vadd.f32 %v3062, %v3342
      %s3373 = scalar_lea.vmem %s3, 768
      %v3374 = vld [vmem:[%s3373] sm:$0xf]
      %v3375 = vld [vmem:[%s3373 + $0x4] sm:$0xf]
      %v3376 = vld [vmem:[%s3373 + $0x8] sm:$0xf]
      %v3377 = vld [vmem:[%s3373 + $0xc] sm:$0xf]
      %v3378 = vld [vmem:[%s3373 + $0x10] sm:$0xf]
      %v3379 = vld [vmem:[%s3373 + $0x14] sm:$0xf]
      %v3380 = vld [vmem:[%s3373 + $0x18] sm:$0xf]
      %v3381 = vld [vmem:[%s3373 + $0x1c] sm:$0xf]
      %v3382 = vld [vmem:[%s3373 + $0x20] sm:$0xf]
      %v3383 = vld [vmem:[%s3373 + $0x24] sm:$0xf]
      %v3384 = vld [vmem:[%s3373 + $0x28] sm:$0xf]
      %v3385 = vld [vmem:[%s3373 + $0x2c] sm:$0xf]
      %v3386 = vld [vmem:[%s3373 + $0x30] sm:$0xf]
      %v3387 = vld [vmem:[%s3373 + $0x34] sm:$0xf]
      %v3388 = vld [vmem:[%s3373 + $0x38] sm:$0xf]
      %v3389 = vld [vmem:[%s3373 + $0x3c] sm:$0xf]
      %v3390 = vld [vmem:[%s3373 + $0x40] sm:$0xf]
      %v3391 = vld [vmem:[%s3373 + $0x44] sm:$0xf]
      %v3392 = vld [vmem:[%s3373 + $0x48] sm:$0xf]
      %v3393 = vld [vmem:[%s3373 + $0x4c] sm:$0xf]
      %v3394 = vld [vmem:[%s3373 + $0x50] sm:$0xf]
      %v3395 = vld [vmem:[%s3373 + $0x54] sm:$0xf]
      %v3396 = vld [vmem:[%s3373 + $0x58] sm:$0xf]
      %v3397 = vld [vmem:[%s3373 + $0x5c] sm:$0xf]
      %v3398 = vld [vmem:[%s3373 + $0x60] sm:$0xf]
      %v3399 = vld [vmem:[%s3373 + $0x64] sm:$0xf]
      %v3400 = vld [vmem:[%s3373 + $0x68] sm:$0xf]
      %v3401 = vld [vmem:[%s3373 + $0x6c] sm:$0xf]
      %v3402 = vld [vmem:[%s3373 + $0x70] sm:$0xf]
      %v3403 = vld [vmem:[%s3373 + $0x74] sm:$0xf]
      %v3404 = vld [vmem:[%s3373 + $0x78] sm:$0xf]
      %v3405 = vld [vmem:[%s3373 + $0x7c] sm:$0xf]
      %v3438 = vunpack.c.l.b16 %v3374
      %v3439 = vunpack.c.l.b16 %v3375
      %v3440 = vunpack.c.l.b16 %v3376
      %v3441 = vunpack.c.l.b16 %v3377
      %v3442 = vunpack.c.l.b16 %v3378
      %v3443 = vunpack.c.l.b16 %v3379
      %v3444 = vunpack.c.l.b16 %v3380
      %v3445 = vunpack.c.l.b16 %v3381
      %v3446 = vunpack.c.l.b16 %v3382
      %v3447 = vunpack.c.l.b16 %v3383
      %v3448 = vunpack.c.l.b16 %v3384
      %v3449 = vunpack.c.l.b16 %v3385
      %v3450 = vunpack.c.l.b16 %v3386
      %v3451 = vunpack.c.l.b16 %v3387
      %v3452 = vunpack.c.l.b16 %v3388
      %v3453 = vunpack.c.l.b16 %v3389
      %v3454 = vunpack.c.l.b16 %v3390
      %v3455 = vunpack.c.l.b16 %v3391
      %v3456 = vunpack.c.l.b16 %v3392
      %v3457 = vunpack.c.l.b16 %v3393
      %v3458 = vunpack.c.l.b16 %v3394
      %v3459 = vunpack.c.l.b16 %v3395
      %v3460 = vunpack.c.l.b16 %v3396
      %v3461 = vunpack.c.l.b16 %v3397
      %v3462 = vunpack.c.l.b16 %v3398
      %v3463 = vunpack.c.l.b16 %v3399
      %v3464 = vunpack.c.l.b16 %v3400
      %v3465 = vunpack.c.l.b16 %v3401
      %v3466 = vunpack.c.l.b16 %v3402
      %v3467 = vunpack.c.l.b16 %v3403
      %v3468 = vunpack.c.l.b16 %v3404
      %v3469 = vunpack.c.l.b16 %v3405
      %v3470 = vpack.c.b16 %v3439, %v3438
      %v3471 = vpack.c.b16 %v3441, %v3440
      %v3472 = vpack.c.b16 %v3443, %v3442
      %v3473 = vpack.c.b16 %v3445, %v3444
      %v3474 = vpack.c.b16 %v3447, %v3446
      %v3475 = vpack.c.b16 %v3449, %v3448
      %v3476 = vpack.c.b16 %v3451, %v3450
      %v3477 = vpack.c.b16 %v3453, %v3452
      %v3478 = vpack.c.b16 %v3455, %v3454
      %v3479 = vpack.c.b16 %v3457, %v3456
      %v3480 = vpack.c.b16 %v3459, %v3458
      %v3481 = vpack.c.b16 %v3461, %v3460
      %v3482 = vpack.c.b16 %v3463, %v3462
      %v3483 = vpack.c.b16 %v3465, %v3464
      %v3484 = vpack.c.b16 %v3467, %v3466
      %v3485 = vpack.c.b16 %v3469, %v3468
      %3502 = vmatprep.subr.bf16.mxu0 0
      %3503 = vmatpush1.bf16.msra.mxu0 %v3477
      %3504 = vmatprep.subr.bf16.mxu0 0
      %3505 = vmatpush1.bf16.msra.mxu0 %v3476
      %3506 = vmatprep.subr.bf16.mxu0 0
      %3507 = vmatpush1.bf16.msra.mxu0 %v3475
      %3508 = vmatprep.subr.bf16.mxu0 0
      %3509 = vmatpush1.bf16.msra.mxu0 %v3474
      %3510 = vmatprep.subr.bf16.mxu0 0
      %3511 = vmatpush1.bf16.msra.mxu0 %v3473
      %3512 = vmatprep.subr.bf16.mxu0 0
      %3513 = vmatpush1.bf16.msra.mxu0 %v3472
      %3514 = vmatprep.subr.bf16.mxu0 0
      %3515 = vmatpush1.bf16.msra.mxu0 %v3471
      %3516 = vmatprep.subr.bf16.mxu0 0
      %3517 = vmatpush1.bf16.msra.mxu0 %v3470
      %3518 = vmatprep.subr.bf16.mxu0 0
      %3519 = vmatpush2.bf16.msra.mxu0 %v3485
      %3520 = vmatprep.subr.bf16.mxu0 0
      %3521 = vmatpush2.bf16.msra.mxu0 %v3484
      %3522 = vmatprep.subr.bf16.mxu0 0
      %3523 = vmatpush2.bf16.msra.mxu0 %v3483
      %3524 = vmatprep.subr.bf16.mxu0 0
      %3525 = vmatpush2.bf16.msra.mxu0 %v3482
      %3526 = vmatprep.subr.bf16.mxu0 0
      %3527 = vmatpush2.bf16.msra.mxu0 %v3481
      %3528 = vmatprep.subr.bf16.mxu0 0
      %3529 = vmatpush2.bf16.msra.mxu0 %v3480
      %3530 = vmatprep.subr.bf16.mxu0 0
      %3531 = vmatpush2.bf16.msra.mxu0 %v3479
      %3532 = vmatprep.subr.bf16.mxu0 0
      %3533 = vmatpush2.bf16.msra.mxu0 %v3478
      %3534 = vmatprep.mubr.bf16.mxu0 %v1226
      %3535 = vmatmul.mubr.bf16.gmra.mxu0 %v1130
      %v3536 = vpop.f32.mrf.mxu0
      %v3537 = vadd.f32 0.0, %v3536
      %v3538 = vpop.f32.mrf.mxu0
      %v3539 = vpop.f32.mrf.mxu0
      %v3540 = vadd.f32 0.0, %v3539
      %v3541 = vpop.f32.mrf.mxu0
      %3542 = vmatprep.mubr.bf16.mxu0 %v1227
      %3543 = vmatmul.mubr.bf16.gmra.mxu0 %v1131
      %v3544 = vpop.f32.mrf.mxu0
      %v3545 = vadd.f32 0.0, %v3544
      %v3546 = vpop.f32.mrf.mxu0
      %v3547 = vpop.f32.mrf.mxu0
      %v3548 = vadd.f32 0.0, %v3547
      %v3549 = vpop.f32.mrf.mxu0
      %3550 = vmatprep.mubr.bf16.mxu0 %v1228
      %3551 = vmatmul.mubr.bf16.gmra.mxu0 %v1132
      %v3552 = vpop.f32.mrf.mxu0
      %v3553 = vadd.f32 0.0, %v3552
      %v3554 = vpop.f32.mrf.mxu0
      %v3555 = vpop.f32.mrf.mxu0
      %v3556 = vadd.f32 0.0, %v3555
      %v3557 = vpop.f32.mrf.mxu0
      %3558 = vmatprep.mubr.bf16.mxu0 %v1229
      %3559 = vmatmul.mubr.bf16.gmra.mxu0 %v1133
      %v3560 = vpop.f32.mrf.mxu0
      %v3561 = vadd.f32 0.0, %v3560
      %v3562 = vpop.f32.mrf.mxu0
      %v3563 = vpop.f32.mrf.mxu0
      %v3564 = vadd.f32 0.0, %v3563
      %v3565 = vpop.f32.mrf.mxu0
      %3566 = vmatprep.mubr.bf16.mxu0 %v1230
      %3567 = vmatmul.mubr.bf16.gmra.mxu0 %v1134
      %v3568 = vpop.f32.mrf.mxu0
      %v3569 = vadd.f32 0.0, %v3568
      %v3570 = vpop.f32.mrf.mxu0
      %v3571 = vpop.f32.mrf.mxu0
      %v3572 = vadd.f32 0.0, %v3571
      %v3573 = vpop.f32.mrf.mxu0
      %3574 = vmatprep.mubr.bf16.mxu0 %v1231
      %3575 = vmatmul.mubr.bf16.gmra.mxu0 %v1135
      %v3576 = vpop.f32.mrf.mxu0
      %v3577 = vadd.f32 0.0, %v3576
      %v3578 = vpop.f32.mrf.mxu0
      %v3579 = vpop.f32.mrf.mxu0
      %v3580 = vadd.f32 0.0, %v3579
      %v3581 = vpop.f32.mrf.mxu0
      %3582 = vmatprep.mubr.bf16.mxu0 %v1232
      %3583 = vmatmul.mubr.bf16.gmra.mxu0 %v1136
      %v3584 = vpop.f32.mrf.mxu0
      %v3585 = vadd.f32 0.0, %v3584
      %v3586 = vpop.f32.mrf.mxu0
      %v3587 = vpop.f32.mrf.mxu0
      %v3588 = vadd.f32 0.0, %v3587
      %v3589 = vpop.f32.mrf.mxu0
      %3590 = vmatprep.mubr.bf16.mxu0 %v1233
      %3591 = vmatmul.mubr.bf16.gmra.mxu0 %v1137
      %v3592 = vpop.f32.mrf.mxu0
      %v3593 = vadd.f32 0.0, %v3592
      %v3594 = vpop.f32.mrf.mxu0
      %v3595 = vpop.f32.mrf.mxu0
      %v3596 = vadd.f32 0.0, %v3595
      %v3597 = vpop.f32.mrf.mxu0
      %3598 = vmatprep.mubr.bf16.mxu0 %v1234
      %3599 = vmatmul.mubr.bf16.gmra.mxu0 %v1138
      %v3600 = vpop.f32.mrf.mxu0
      %v3601 = vadd.f32 0.0, %v3600
      %v3602 = vpop.f32.mrf.mxu0
      %v3603 = vpop.f32.mrf.mxu0
      %v3604 = vadd.f32 0.0, %v3603
      %v3605 = vpop.f32.mrf.mxu0
      %3606 = vmatprep.mubr.bf16.mxu0 %v1235
      %3607 = vmatmul.mubr.bf16.gmra.mxu0 %v1139
      %v3608 = vpop.f32.mrf.mxu0
      %v3609 = vadd.f32 0.0, %v3608
      %v3610 = vpop.f32.mrf.mxu0
      %v3611 = vpop.f32.mrf.mxu0
      %v3612 = vadd.f32 0.0, %v3611
      %v3613 = vpop.f32.mrf.mxu0
      %3614 = vmatprep.mubr.bf16.mxu0 %v1236
      %3615 = vmatmul.mubr.bf16.gmra.mxu0 %v1140
      %v3616 = vpop.f32.mrf.mxu0
      %v3617 = vadd.f32 0.0, %v3616
      %v3618 = vpop.f32.mrf.mxu0
      %v3619 = vpop.f32.mrf.mxu0
      %v3620 = vadd.f32 0.0, %v3619
      %v3621 = vpop.f32.mrf.mxu0
      %3622 = vmatprep.mubr.bf16.mxu0 %v1237
      %3623 = vmatmul.mubr.bf16.gmra.mxu0 %v1141
      %v3624 = vpop.f32.mrf.mxu0
      %v3625 = vadd.f32 0.0, %v3624
      %v3626 = vpop.f32.mrf.mxu0
      %v3627 = vpop.f32.mrf.mxu0
      %v3628 = vadd.f32 0.0, %v3627
      %v3629 = vpop.f32.mrf.mxu0
      %3630 = vmatprep.mubr.bf16.mxu0 %v1238
      %3631 = vmatmul.mubr.bf16.gmra.mxu0 %v1142
      %v3632 = vpop.f32.mrf.mxu0
      %v3633 = vadd.f32 0.0, %v3632
      %v3634 = vpop.f32.mrf.mxu0
      %v3635 = vpop.f32.mrf.mxu0
      %v3636 = vadd.f32 0.0, %v3635
      %v3637 = vpop.f32.mrf.mxu0
      %3638 = vmatprep.mubr.bf16.mxu0 %v1239
      %3639 = vmatmul.mubr.bf16.gmra.mxu0 %v1143
      %v3640 = vpop.f32.mrf.mxu0
      %v3641 = vadd.f32 0.0, %v3640
      %v3642 = vpop.f32.mrf.mxu0
      %v3643 = vpop.f32.mrf.mxu0
      %v3644 = vadd.f32 0.0, %v3643
      %v3645 = vpop.f32.mrf.mxu0
      %3646 = vdwg.mxu0
      %v3647 = vadd.f32 %v3345, %v3537
      %v3648 = vadd.f32 %v3346, %v3540
      %v3649 = vadd.f32 %v3347, %v3545
      %v3650 = vadd.f32 %v3348, %v3548
      %v3651 = vadd.f32 %v3349, %v3553
      %v3652 = vadd.f32 %v3350, %v3556
      %v3653 = vadd.f32 %v3351, %v3561
      %v3654 = vadd.f32 %v3352, %v3564
      %v3655 = vadd.f32 %v3353, %v3569
      %v3656 = vadd.f32 %v3354, %v3572
      %v3657 = vadd.f32 %v3355, %v3577
      %v3658 = vadd.f32 %v3356, %v3580
      %v3659 = vadd.f32 %v3357, %v3585
      %v3660 = vadd.f32 %v3358, %v3588
      %v3661 = vadd.f32 %v3359, %v3593
      %v3662 = vadd.f32 %v3360, %v3596
      %v3663 = vadd.f32 %v3361, %v3601
      %v3664 = vadd.f32 %v3362, %v3604
      %v3665 = vadd.f32 %v3363, %v3609
      %v3666 = vadd.f32 %v3364, %v3612
      %v3667 = vadd.f32 %v3365, %v3617
      %v3668 = vadd.f32 %v3366, %v3620
      %v3669 = vadd.f32 %v3367, %v3625
      %v3670 = vadd.f32 %v3368, %v3628
      %v3671 = vadd.f32 %v3369, %v3633
      %v3672 = vadd.f32 %v3370, %v3636
      %v3673 = vadd.f32 %v3371, %v3641
      %v3674 = vadd.f32 %v3372, %v3644
      %s3675 = scalar_lea.vmem %s3, 896
      %v3676 = vld [vmem:[%s3675] sm:$0xf]
      %v3677 = vld [vmem:[%s3675 + $0x4] sm:$0xf]
      %v3678 = vld [vmem:[%s3675 + $0x8] sm:$0xf]
      %v3679 = vld [vmem:[%s3675 + $0xc] sm:$0xf]
      %v3680 = vld [vmem:[%s3675 + $0x10] sm:$0xf]
      %v3681 = vld [vmem:[%s3675 + $0x14] sm:$0xf]
      %v3682 = vld [vmem:[%s3675 + $0x18] sm:$0xf]
      %v3683 = vld [vmem:[%s3675 + $0x1c] sm:$0xf]
      %v3684 = vld [vmem:[%s3675 + $0x20] sm:$0xf]
      %v3685 = vld [vmem:[%s3675 + $0x24] sm:$0xf]
      %v3686 = vld [vmem:[%s3675 + $0x28] sm:$0xf]
      %v3687 = vld [vmem:[%s3675 + $0x2c] sm:$0xf]
      %v3688 = vld [vmem:[%s3675 + $0x30] sm:$0xf]
      %v3689 = vld [vmem:[%s3675 + $0x34] sm:$0xf]
      %v3690 = vld [vmem:[%s3675 + $0x38] sm:$0xf]
      %v3691 = vld [vmem:[%s3675 + $0x3c] sm:$0xf]
      %v3692 = vld [vmem:[%s3675 + $0x40] sm:$0xf]
      %v3693 = vld [vmem:[%s3675 + $0x44] sm:$0xf]
      %v3694 = vld [vmem:[%s3675 + $0x48] sm:$0xf]
      %v3695 = vld [vmem:[%s3675 + $0x4c] sm:$0xf]
      %v3696 = vld [vmem:[%s3675 + $0x50] sm:$0xf]
      %v3697 = vld [vmem:[%s3675 + $0x54] sm:$0xf]
      %v3698 = vld [vmem:[%s3675 + $0x58] sm:$0xf]
      %v3699 = vld [vmem:[%s3675 + $0x5c] sm:$0xf]
      %v3700 = vld [vmem:[%s3675 + $0x60] sm:$0xf]
      %v3701 = vld [vmem:[%s3675 + $0x64] sm:$0xf]
      %v3702 = vld [vmem:[%s3675 + $0x68] sm:$0xf]
      %v3703 = vld [vmem:[%s3675 + $0x6c] sm:$0xf]
      %v3704 = vld [vmem:[%s3675 + $0x70] sm:$0xf]
      %v3705 = vld [vmem:[%s3675 + $0x74] sm:$0xf]
      %v3706 = vld [vmem:[%s3675 + $0x78] sm:$0xf]
      %v3707 = vld [vmem:[%s3675 + $0x7c] sm:$0xf]
      %v3709 = vshll.u32 %v1143, 16
      %v3711 = vrot.slane %v3709, 1
      %v3712 = vsel %vm1321, %v2786, %v3711
      %v3714 = vshll.u32 %v1239, 16
      %v3716 = vrot.slane %v3714, 1
      %v3717 = vsel %vm1321, %v2789, %v3716
      %v3718 = vshrl.u32 %v1143, 16
      %v3720 = vor.u32 %v3718, %v3711
      %v3721 = vshrl.u32 %v1239, 16
      %v3723 = vor.u32 %v3721, %v3716
      %v3760 = vunpack.c.l.b16 %v3676
      %v3761 = vunpack.c.l.b16 %v3677
      %v3762 = vunpack.c.l.b16 %v3678
      %v3763 = vunpack.c.l.b16 %v3679
      %v3764 = vunpack.c.l.b16 %v3680
      %v3765 = vunpack.c.l.b16 %v3681
      %v3766 = vunpack.c.l.b16 %v3682
      %v3767 = vunpack.c.l.b16 %v3683
      %v3768 = vunpack.c.l.b16 %v3684
      %v3769 = vunpack.c.l.b16 %v3685
      %v3770 = vunpack.c.l.b16 %v3686
      %v3771 = vunpack.c.l.b16 %v3687
      %v3772 = vunpack.c.l.b16 %v3688
      %v3773 = vunpack.c.l.b16 %v3689
      %v3774 = vunpack.c.l.b16 %v3690
      %v3775 = vunpack.c.l.b16 %v3691
      %v3776 = vunpack.c.l.b16 %v3692
      %v3777 = vunpack.c.l.b16 %v3693
      %v3778 = vunpack.c.l.b16 %v3694
      %v3779 = vunpack.c.l.b16 %v3695
      %v3780 = vunpack.c.l.b16 %v3696
      %v3781 = vunpack.c.l.b16 %v3697
      %v3782 = vunpack.c.l.b16 %v3698
      %v3783 = vunpack.c.l.b16 %v3699
      %v3784 = vunpack.c.l.b16 %v3700
      %v3785 = vunpack.c.l.b16 %v3701
      %v3786 = vunpack.c.l.b16 %v3702
      %v3787 = vunpack.c.l.b16 %v3703
      %v3788 = vunpack.c.l.b16 %v3704
      %v3789 = vunpack.c.l.b16 %v3705
      %v3790 = vunpack.c.l.b16 %v3706
      %v3791 = vunpack.c.l.b16 %v3707
      %v3792 = vpack.c.b16 %v3761, %v3760
      %v3793 = vpack.c.b16 %v3763, %v3762
      %v3794 = vpack.c.b16 %v3765, %v3764
      %v3795 = vpack.c.b16 %v3767, %v3766
      %v3796 = vpack.c.b16 %v3769, %v3768
      %v3797 = vpack.c.b16 %v3771, %v3770
      %v3798 = vpack.c.b16 %v3773, %v3772
      %v3799 = vpack.c.b16 %v3775, %v3774
      %v3800 = vpack.c.b16 %v3777, %v3776
      %v3801 = vpack.c.b16 %v3779, %v3778
      %v3802 = vpack.c.b16 %v3781, %v3780
      %v3803 = vpack.c.b16 %v3783, %v3782
      %v3804 = vpack.c.b16 %v3785, %v3784
      %v3805 = vpack.c.b16 %v3787, %v3786
      %v3806 = vpack.c.b16 %v3789, %v3788
      %v3807 = vpack.c.b16 %v3791, %v3790
      %3824 = vmatprep.subr.bf16.mxu0 0
      %3825 = vmatpush1.bf16.msra.mxu0 %v3799
      %3826 = vmatprep.subr.bf16.mxu0 0
      %3827 = vmatpush1.bf16.msra.mxu0 %v3798
      %3828 = vmatprep.subr.bf16.mxu0 0
      %3829 = vmatpush1.bf16.msra.mxu0 %v3797
      %3830 = vmatprep.subr.bf16.mxu0 0
      %3831 = vmatpush1.bf16.msra.mxu0 %v3796
      %3832 = vmatprep.subr.bf16.mxu0 0
      %3833 = vmatpush1.bf16.msra.mxu0 %v3795
      %3834 = vmatprep.subr.bf16.mxu0 0
      %3835 = vmatpush1.bf16.msra.mxu0 %v3794
      %3836 = vmatprep.subr.bf16.mxu0 0
      %3837 = vmatpush1.bf16.msra.mxu0 %v3793
      %3838 = vmatprep.subr.bf16.mxu0 0
      %3839 = vmatpush1.bf16.msra.mxu0 %v3792
      %3840 = vmatprep.subr.bf16.mxu0 0
      %3841 = vmatpush2.bf16.msra.mxu0 %v3807
      %3842 = vmatprep.subr.bf16.mxu0 0
      %3843 = vmatpush2.bf16.msra.mxu0 %v3806
      %3844 = vmatprep.subr.bf16.mxu0 0
      %3845 = vmatpush2.bf16.msra.mxu0 %v3805
      %3846 = vmatprep.subr.bf16.mxu0 0
      %3847 = vmatpush2.bf16.msra.mxu0 %v3804
      %3848 = vmatprep.subr.bf16.mxu0 0
      %3849 = vmatpush2.bf16.msra.mxu0 %v3803
      %3850 = vmatprep.subr.bf16.mxu0 0
      %3851 = vmatpush2.bf16.msra.mxu0 %v3802
      %3852 = vmatprep.subr.bf16.mxu0 0
      %3853 = vmatpush2.bf16.msra.mxu0 %v3801
      %3854 = vmatprep.subr.bf16.mxu0 0
      %3855 = vmatpush2.bf16.msra.mxu0 %v3800
      %3856 = vmatprep.mubr.bf16.mxu0 %v1377
      %3857 = vmatmul.mubr.bf16.gmra.mxu0 %v1369
      %v3858 = vpop.f32.mrf.mxu0
      %v3859 = vadd.f32 0.0, %v3858
      %v3860 = vpop.f32.mrf.mxu0
      %v3861 = vpop.f32.mrf.mxu0
      %v3862 = vadd.f32 0.0, %v3861
      %v3863 = vpop.f32.mrf.mxu0
      %3864 = vmatprep.mubr.bf16.mxu0 %v1393
      %3865 = vmatmul.mubr.bf16.gmra.mxu0 %v1385
      %v3866 = vpop.f32.mrf.mxu0
      %v3867 = vadd.f32 0.0, %v3866
      %v3868 = vpop.f32.mrf.mxu0
      %v3869 = vpop.f32.mrf.mxu0
      %v3870 = vadd.f32 0.0, %v3869
      %v3871 = vpop.f32.mrf.mxu0
      %3872 = vmatprep.mubr.bf16.mxu0 %v1409
      %3873 = vmatmul.mubr.bf16.gmra.mxu0 %v1401
      %v3874 = vpop.f32.mrf.mxu0
      %v3875 = vadd.f32 0.0, %v3874
      %v3876 = vpop.f32.mrf.mxu0
      %v3877 = vpop.f32.mrf.mxu0
      %v3878 = vadd.f32 0.0, %v3877
      %v3879 = vpop.f32.mrf.mxu0
      %3880 = vmatprep.mubr.bf16.mxu0 %v1425
      %3881 = vmatmul.mubr.bf16.gmra.mxu0 %v1417
      %v3882 = vpop.f32.mrf.mxu0
      %v3883 = vadd.f32 0.0, %v3882
      %v3884 = vpop.f32.mrf.mxu0
      %v3885 = vpop.f32.mrf.mxu0
      %v3886 = vadd.f32 0.0, %v3885
      %v3887 = vpop.f32.mrf.mxu0
      %3888 = vmatprep.mubr.bf16.mxu0 %v1441
      %3889 = vmatmul.mubr.bf16.gmra.mxu0 %v1433
      %v3890 = vpop.f32.mrf.mxu0
      %v3891 = vadd.f32 0.0, %v3890
      %v3892 = vpop.f32.mrf.mxu0
      %v3893 = vpop.f32.mrf.mxu0
      %v3894 = vadd.f32 0.0, %v3893
      %v3895 = vpop.f32.mrf.mxu0
      %3896 = vmatprep.mubr.bf16.mxu0 %v1457
      %3897 = vmatmul.mubr.bf16.gmra.mxu0 %v1449
      %v3898 = vpop.f32.mrf.mxu0
      %v3899 = vadd.f32 0.0, %v3898
      %v3900 = vpop.f32.mrf.mxu0
      %v3901 = vpop.f32.mrf.mxu0
      %v3902 = vadd.f32 0.0, %v3901
      %v3903 = vpop.f32.mrf.mxu0
      %3904 = vmatprep.mubr.bf16.mxu0 %v1473
      %3905 = vmatmul.mubr.bf16.gmra.mxu0 %v1465
      %v3906 = vpop.f32.mrf.mxu0
      %v3907 = vadd.f32 0.0, %v3906
      %v3908 = vpop.f32.mrf.mxu0
      %v3909 = vpop.f32.mrf.mxu0
      %v3910 = vadd.f32 0.0, %v3909
      %v3911 = vpop.f32.mrf.mxu0
      %3912 = vmatprep.mubr.bf16.mxu0 %v1489
      %3913 = vmatmul.mubr.bf16.gmra.mxu0 %v1481
      %v3914 = vpop.f32.mrf.mxu0
      %v3915 = vadd.f32 0.0, %v3914
      %v3916 = vpop.f32.mrf.mxu0
      %v3917 = vpop.f32.mrf.mxu0
      %v3918 = vadd.f32 0.0, %v3917
      %v3919 = vpop.f32.mrf.mxu0
      %3920 = vmatprep.mubr.bf16.mxu0 %v1505
      %3921 = vmatmul.mubr.bf16.gmra.mxu0 %v1497
      %v3922 = vpop.f32.mrf.mxu0
      %v3923 = vadd.f32 0.0, %v3922
      %v3924 = vpop.f32.mrf.mxu0
      %v3925 = vpop.f32.mrf.mxu0
      %v3926 = vadd.f32 0.0, %v3925
      %v3927 = vpop.f32.mrf.mxu0
      %3928 = vmatprep.mubr.bf16.mxu0 %v1521
      %3929 = vmatmul.mubr.bf16.gmra.mxu0 %v1513
      %v3930 = vpop.f32.mrf.mxu0
      %v3931 = vadd.f32 0.0, %v3930
      %v3932 = vpop.f32.mrf.mxu0
      %v3933 = vpop.f32.mrf.mxu0
      %v3934 = vadd.f32 0.0, %v3933
      %v3935 = vpop.f32.mrf.mxu0
      %3936 = vmatprep.mubr.bf16.mxu0 %v1537
      %3937 = vmatmul.mubr.bf16.gmra.mxu0 %v1529
      %v3938 = vpop.f32.mrf.mxu0
      %v3939 = vadd.f32 0.0, %v3938
      %v3940 = vpop.f32.mrf.mxu0
      %v3941 = vpop.f32.mrf.mxu0
      %v3942 = vadd.f32 0.0, %v3941
      %v3943 = vpop.f32.mrf.mxu0
      %3944 = vmatprep.mubr.bf16.mxu0 %v2783
      %3945 = vmatmul.mubr.bf16.gmra.mxu0 %v2778
      %v3946 = vpop.f32.mrf.mxu0
      %v3947 = vadd.f32 0.0, %v3946
      %v3948 = vpop.f32.mrf.mxu0
      %v3949 = vpop.f32.mrf.mxu0
      %v3950 = vadd.f32 0.0, %v3949
      %v3951 = vpop.f32.mrf.mxu0
      %3952 = vmatprep.mubr.bf16.mxu0 %v3717
      %3953 = vmatmul.mubr.bf16.gmra.mxu0 %v3712
      %v3954 = vpop.f32.mrf.mxu0
      %v3955 = vadd.f32 0.0, %v3954
      %v3956 = vpop.f32.mrf.mxu0
      %v3957 = vpop.f32.mrf.mxu0
      %v3958 = vadd.f32 0.0, %v3957
      %v3959 = vpop.f32.mrf.mxu0
      %3960 = vmatprep.mubr.bf16.mxu0 %v3723
      %3961 = vmatmul.mubr.bf16.gmra.mxu0 %v3720
      %v3962 = vpop.f32.mrf.mxu0
      %v3963 = vadd.f32 0.0, %v3962
      %v3964 = vpop.f32.mrf.mxu0
      %v3965 = vpop.f32.mrf.mxu0
      %v3966 = vadd.f32 0.0, %v3965
      %v3967 = vpop.f32.mrf.mxu0
      %3968 = vdwg.mxu0
      %v3969 = vadd.f32 %v3647, %v3859
      %v3970 = vadd.f32 %v3648, %v3862
      %v3971 = vadd.f32 %v3649, %v3867
      %v3972 = vadd.f32 %v3650, %v3870
      %v3973 = vadd.f32 %v3651, %v3875
      %v3974 = vadd.f32 %v3652, %v3878
      %v3975 = vadd.f32 %v3653, %v3883
      %v3976 = vadd.f32 %v3654, %v3886
      %v3977 = vadd.f32 %v3655, %v3891
      %v3978 = vadd.f32 %v3656, %v3894
      %v3979 = vadd.f32 %v3657, %v3899
      %v3980 = vadd.f32 %v3658, %v3902
      %v3981 = vadd.f32 %v3659, %v3907
      %v3982 = vadd.f32 %v3660, %v3910
      %v3983 = vadd.f32 %v3661, %v3915
      %v3984 = vadd.f32 %v3662, %v3918
      %v3985 = vadd.f32 %v3663, %v3923
      %v3986 = vadd.f32 %v3664, %v3926
      %v3987 = vadd.f32 %v3665, %v3931
      %v3988 = vadd.f32 %v3666, %v3934
      %v3989 = vadd.f32 %v3667, %v3939
      %v3990 = vadd.f32 %v3668, %v3942
      %v3991 = vadd.f32 %v3669, %v3947
      %v3992 = vadd.f32 %v3670, %v3950
      %v3993 = vadd.f32 %v3671, %v3955
      %v3994 = vadd.f32 %v3672, %v3958
      %v3995 = vadd.f32 %v3673, %v3963
      %v3996 = vadd.f32 %v3674, %v3966
      %s3997 = scalar_lea.vmem %s3, 1024
      %v3998 = vld [vmem:[%s3997] sm:$0xf]
      %v3999 = vld [vmem:[%s3997 + $0x4] sm:$0xf]
      %v4000 = vld [vmem:[%s3997 + $0x8] sm:$0xf]
      %v4001 = vld [vmem:[%s3997 + $0xc] sm:$0xf]
      %v4002 = vld [vmem:[%s3997 + $0x10] sm:$0xf]
      %v4003 = vld [vmem:[%s3997 + $0x14] sm:$0xf]
      %v4004 = vld [vmem:[%s3997 + $0x18] sm:$0xf]
      %v4005 = vld [vmem:[%s3997 + $0x1c] sm:$0xf]
      %v4006 = vld [vmem:[%s3997 + $0x20] sm:$0xf]
      %v4007 = vld [vmem:[%s3997 + $0x24] sm:$0xf]
      %v4008 = vld [vmem:[%s3997 + $0x28] sm:$0xf]
      %v4009 = vld [vmem:[%s3997 + $0x2c] sm:$0xf]
      %v4010 = vld [vmem:[%s3997 + $0x30] sm:$0xf]
      %v4011 = vld [vmem:[%s3997 + $0x34] sm:$0xf]
      %v4012 = vld [vmem:[%s3997 + $0x38] sm:$0xf]
      %v4013 = vld [vmem:[%s3997 + $0x3c] sm:$0xf]
      %v4014 = vld [vmem:[%s3997 + $0x40] sm:$0xf]
      %v4015 = vld [vmem:[%s3997 + $0x44] sm:$0xf]
      %v4016 = vld [vmem:[%s3997 + $0x48] sm:$0xf]
      %v4017 = vld [vmem:[%s3997 + $0x4c] sm:$0xf]
      %v4018 = vld [vmem:[%s3997 + $0x50] sm:$0xf]
      %v4019 = vld [vmem:[%s3997 + $0x54] sm:$0xf]
      %v4020 = vld [vmem:[%s3997 + $0x58] sm:$0xf]
      %v4021 = vld [vmem:[%s3997 + $0x5c] sm:$0xf]
      %v4022 = vld [vmem:[%s3997 + $0x60] sm:$0xf]
      %v4023 = vld [vmem:[%s3997 + $0x64] sm:$0xf]
      %v4024 = vld [vmem:[%s3997 + $0x68] sm:$0xf]
      %v4025 = vld [vmem:[%s3997 + $0x6c] sm:$0xf]
      %v4026 = vld [vmem:[%s3997 + $0x70] sm:$0xf]
      %v4027 = vld [vmem:[%s3997 + $0x74] sm:$0xf]
      %v4028 = vld [vmem:[%s3997 + $0x78] sm:$0xf]
      %v4029 = vld [vmem:[%s3997 + $0x7c] sm:$0xf]
      %v4030 = vrot.slane %v1143, 1
      %v4031 = vsel %vm2087, %v3096, %v4030
      %v4032 = vrot.slane %v1239, 1
      %v4033 = vsel %vm2087, %v3098, %v4032
      %v4070 = vunpack.c.l.b16 %v3998
      %v4071 = vunpack.c.l.b16 %v3999
      %v4072 = vunpack.c.l.b16 %v4000
      %v4073 = vunpack.c.l.b16 %v4001
      %v4074 = vunpack.c.l.b16 %v4002
      %v4075 = vunpack.c.l.b16 %v4003
      %v4076 = vunpack.c.l.b16 %v4004
      %v4077 = vunpack.c.l.b16 %v4005
      %v4078 = vunpack.c.l.b16 %v4006
      %v4079 = vunpack.c.l.b16 %v4007
      %v4080 = vunpack.c.l.b16 %v4008
      %v4081 = vunpack.c.l.b16 %v4009
      %v4082 = vunpack.c.l.b16 %v4010
      %v4083 = vunpack.c.l.b16 %v4011
      %v4084 = vunpack.c.l.b16 %v4012
      %v4085 = vunpack.c.l.b16 %v4013
      %v4086 = vunpack.c.l.b16 %v4014
      %v4087 = vunpack.c.l.b16 %v4015
      %v4088 = vunpack.c.l.b16 %v4016
      %v4089 = vunpack.c.l.b16 %v4017
      %v4090 = vunpack.c.l.b16 %v4018
      %v4091 = vunpack.c.l.b16 %v4019
      %v4092 = vunpack.c.l.b16 %v4020
      %v4093 = vunpack.c.l.b16 %v4021
      %v4094 = vunpack.c.l.b16 %v4022
      %v4095 = vunpack.c.l.b16 %v4023
      %v4096 = vunpack.c.l.b16 %v4024
      %v4097 = vunpack.c.l.b16 %v4025
      %v4098 = vunpack.c.l.b16 %v4026
      %v4099 = vunpack.c.l.b16 %v4027
      %v4100 = vunpack.c.l.b16 %v4028
      %v4101 = vunpack.c.l.b16 %v4029
      %v4102 = vpack.c.b16 %v4071, %v4070
      %v4103 = vpack.c.b16 %v4073, %v4072
      %v4104 = vpack.c.b16 %v4075, %v4074
      %v4105 = vpack.c.b16 %v4077, %v4076
      %v4106 = vpack.c.b16 %v4079, %v4078
      %v4107 = vpack.c.b16 %v4081, %v4080
      %v4108 = vpack.c.b16 %v4083, %v4082
      %v4109 = vpack.c.b16 %v4085, %v4084
      %v4110 = vpack.c.b16 %v4087, %v4086
      %v4111 = vpack.c.b16 %v4089, %v4088
      %v4112 = vpack.c.b16 %v4091, %v4090
      %v4113 = vpack.c.b16 %v4093, %v4092
      %v4114 = vpack.c.b16 %v4095, %v4094
      %v4115 = vpack.c.b16 %v4097, %v4096
      %v4116 = vpack.c.b16 %v4099, %v4098
      %v4117 = vpack.c.b16 %v4101, %v4100
      %4134 = vmatprep.subr.bf16.mxu0 0
      %4135 = vmatpush1.bf16.msra.mxu0 %v4109
      %4136 = vmatprep.subr.bf16.mxu0 0
      %4137 = vmatpush1.bf16.msra.mxu0 %v4108
      %4138 = vmatprep.subr.bf16.mxu0 0
      %4139 = vmatpush1.bf16.msra.mxu0 %v4107
      %4140 = vmatprep.subr.bf16.mxu0 0
      %4141 = vmatpush1.bf16.msra.mxu0 %v4106
      %4142 = vmatprep.subr.bf16.mxu0 0
      %4143 = vmatpush1.bf16.msra.mxu0 %v4105
      %4144 = vmatprep.subr.bf16.mxu0 0
      %4145 = vmatpush1.bf16.msra.mxu0 %v4104
      %4146 = vmatprep.subr.bf16.mxu0 0
      %4147 = vmatpush1.bf16.msra.mxu0 %v4103
      %4148 = vmatprep.subr.bf16.mxu0 0
      %4149 = vmatpush1.bf16.msra.mxu0 %v4102
      %4150 = vmatprep.subr.bf16.mxu0 0
      %4151 = vmatpush2.bf16.msra.mxu0 %v4117
      %4152 = vmatprep.subr.bf16.mxu0 0
      %4153 = vmatpush2.bf16.msra.mxu0 %v4116
      %4154 = vmatprep.subr.bf16.mxu0 0
      %4155 = vmatpush2.bf16.msra.mxu0 %v4115
      %4156 = vmatprep.subr.bf16.mxu0 0
      %4157 = vmatpush2.bf16.msra.mxu0 %v4114
      %4158 = vmatprep.subr.bf16.mxu0 0
      %4159 = vmatpush2.bf16.msra.mxu0 %v4113
      %4160 = vmatprep.subr.bf16.mxu0 0
      %4161 = vmatpush2.bf16.msra.mxu0 %v4112
      %4162 = vmatprep.subr.bf16.mxu0 0
      %4163 = vmatpush2.bf16.msra.mxu0 %v4111
      %4164 = vmatprep.subr.bf16.mxu0 0
      %4165 = vmatpush2.bf16.msra.mxu0 %v4110
      %4166 = vmatprep.mubr.bf16.mxu0 %v2101
      %4167 = vmatmul.mubr.bf16.gmra.mxu0 %v2099
      %v4168 = vpop.f32.mrf.mxu0
      %v4169 = vadd.f32 0.0, %v4168
      %v4170 = vpop.f32.mrf.mxu0
      %v4171 = vpop.f32.mrf.mxu0
      %v4172 = vadd.f32 0.0, %v4171
      %v4173 = vpop.f32.mrf.mxu0
      %4174 = vmatprep.mubr.bf16.mxu0 %v2105
      %4175 = vmatmul.mubr.bf16.gmra.mxu0 %v2103
      %v4176 = vpop.f32.mrf.mxu0
      %v4177 = vadd.f32 0.0, %v4176
      %v4178 = vpop.f32.mrf.mxu0
      %v4179 = vpop.f32.mrf.mxu0
      %v4180 = vadd.f32 0.0, %v4179
      %v4181 = vpop.f32.mrf.mxu0
      %4182 = vmatprep.mubr.bf16.mxu0 %v2109
      %4183 = vmatmul.mubr.bf16.gmra.mxu0 %v2107
      %v4184 = vpop.f32.mrf.mxu0
      %v4185 = vadd.f32 0.0, %v4184
      %v4186 = vpop.f32.mrf.mxu0
      %v4187 = vpop.f32.mrf.mxu0
      %v4188 = vadd.f32 0.0, %v4187
      %v4189 = vpop.f32.mrf.mxu0
      %4190 = vmatprep.mubr.bf16.mxu0 %v2113
      %4191 = vmatmul.mubr.bf16.gmra.mxu0 %v2111
      %v4192 = vpop.f32.mrf.mxu0
      %v4193 = vadd.f32 0.0, %v4192
      %v4194 = vpop.f32.mrf.mxu0
      %v4195 = vpop.f32.mrf.mxu0
      %v4196 = vadd.f32 0.0, %v4195
      %v4197 = vpop.f32.mrf.mxu0
      %4198 = vmatprep.mubr.bf16.mxu0 %v2117
      %4199 = vmatmul.mubr.bf16.gmra.mxu0 %v2115
      %v4200 = vpop.f32.mrf.mxu0
      %v4201 = vadd.f32 0.0, %v4200
      %v4202 = vpop.f32.mrf.mxu0
      %v4203 = vpop.f32.mrf.mxu0
      %v4204 = vadd.f32 0.0, %v4203
      %v4205 = vpop.f32.mrf.mxu0
      %4206 = vmatprep.mubr.bf16.mxu0 %v2121
      %4207 = vmatmul.mubr.bf16.gmra.mxu0 %v2119
      %v4208 = vpop.f32.mrf.mxu0
      %v4209 = vadd.f32 0.0, %v4208
      %v4210 = vpop.f32.mrf.mxu0
      %v4211 = vpop.f32.mrf.mxu0
      %v4212 = vadd.f32 0.0, %v4211
      %v4213 = vpop.f32.mrf.mxu0
      %4214 = vmatprep.mubr.bf16.mxu0 %v2125
      %4215 = vmatmul.mubr.bf16.gmra.mxu0 %v2123
      %v4216 = vpop.f32.mrf.mxu0
      %v4217 = vadd.f32 0.0, %v4216
      %v4218 = vpop.f32.mrf.mxu0
      %v4219 = vpop.f32.mrf.mxu0
      %v4220 = vadd.f32 0.0, %v4219
      %v4221 = vpop.f32.mrf.mxu0
      %4222 = vmatprep.mubr.bf16.mxu0 %v2129
      %4223 = vmatmul.mubr.bf16.gmra.mxu0 %v2127
      %v4224 = vpop.f32.mrf.mxu0
      %v4225 = vadd.f32 0.0, %v4224
      %v4226 = vpop.f32.mrf.mxu0
      %v4227 = vpop.f32.mrf.mxu0
      %v4228 = vadd.f32 0.0, %v4227
      %v4229 = vpop.f32.mrf.mxu0
      %4230 = vmatprep.mubr.bf16.mxu0 %v2133
      %4231 = vmatmul.mubr.bf16.gmra.mxu0 %v2131
      %v4232 = vpop.f32.mrf.mxu0
      %v4233 = vadd.f32 0.0, %v4232
      %v4234 = vpop.f32.mrf.mxu0
      %v4235 = vpop.f32.mrf.mxu0
      %v4236 = vadd.f32 0.0, %v4235
      %v4237 = vpop.f32.mrf.mxu0
      %4238 = vmatprep.mubr.bf16.mxu0 %v2137
      %4239 = vmatmul.mubr.bf16.gmra.mxu0 %v2135
      %v4240 = vpop.f32.mrf.mxu0
      %v4241 = vadd.f32 0.0, %v4240
      %v4242 = vpop.f32.mrf.mxu0
      %v4243 = vpop.f32.mrf.mxu0
      %v4244 = vadd.f32 0.0, %v4243
      %v4245 = vpop.f32.mrf.mxu0
      %4246 = vmatprep.mubr.bf16.mxu0 %v2141
      %4247 = vmatmul.mubr.bf16.gmra.mxu0 %v2139
      %v4248 = vpop.f32.mrf.mxu0
      %v4249 = vadd.f32 0.0, %v4248
      %v4250 = vpop.f32.mrf.mxu0
      %v4251 = vpop.f32.mrf.mxu0
      %v4252 = vadd.f32 0.0, %v4251
      %v4253 = vpop.f32.mrf.mxu0
      %4254 = vmatprep.mubr.bf16.mxu0 %v3099
      %4255 = vmatmul.mubr.bf16.gmra.mxu0 %v3097
      %v4256 = vpop.f32.mrf.mxu0
      %v4257 = vadd.f32 0.0, %v4256
      %v4258 = vpop.f32.mrf.mxu0
      %v4259 = vpop.f32.mrf.mxu0
      %v4260 = vadd.f32 0.0, %v4259
      %v4261 = vpop.f32.mrf.mxu0
      %4262 = vmatprep.mubr.bf16.mxu0 %v4033
      %4263 = vmatmul.mubr.bf16.gmra.mxu0 %v4031
      %v4264 = vpop.f32.mrf.mxu0
      %v4265 = vadd.f32 0.0, %v4264
      %v4266 = vpop.f32.mrf.mxu0
      %v4267 = vpop.f32.mrf.mxu0
      %v4268 = vadd.f32 0.0, %v4267
      %v4269 = vpop.f32.mrf.mxu0
      %4270 = vmatprep.mubr.bf16.mxu0 %v4032
      %4271 = vmatmul.mubr.bf16.gmra.mxu0 %v4030
      %v4272 = vpop.f32.mrf.mxu0
      %v4273 = vadd.f32 0.0, %v4272
      %v4274 = vpop.f32.mrf.mxu0
      %v4275 = vpop.f32.mrf.mxu0
      %v4276 = vadd.f32 0.0, %v4275
      %v4277 = vpop.f32.mrf.mxu0
      %4278 = vdwg.mxu0
      %v4279 = vadd.f32 %v3969, %v4169
      %v4280 = vadd.f32 %v3970, %v4172
      %v4281 = vadd.f32 %v3971, %v4177
      %v4282 = vadd.f32 %v3972, %v4180
      %v4283 = vadd.f32 %v3973, %v4185
      %v4284 = vadd.f32 %v3974, %v4188
      %v4285 = vadd.f32 %v3975, %v4193
      %v4286 = vadd.f32 %v3976, %v4196
      %v4287 = vadd.f32 %v3977, %v4201
      %v4288 = vadd.f32 %v3978, %v4204
      %v4289 = vadd.f32 %v3979, %v4209
      %v4290 = vadd.f32 %v3980, %v4212
      %v4291 = vadd.f32 %v3981, %v4217
      %v4292 = vadd.f32 %v3982, %v4220
      %v4293 = vadd.f32 %v3983, %v4225
      %v4294 = vadd.f32 %v3984, %v4228
      %v4295 = vadd.f32 %v3985, %v4233
      %v4296 = vadd.f32 %v3986, %v4236
      %v4297 = vadd.f32 %v3987, %v4241
      %v4298 = vadd.f32 %v3988, %v4244
      %v4299 = vadd.f32 %v3989, %v4249
      %v4300 = vadd.f32 %v3990, %v4252
      %v4301 = vadd.f32 %v3991, %v4257
      %v4302 = vadd.f32 %v3992, %v4260
      %v4303 = vadd.f32 %v3993, %v4265
      %v4304 = vadd.f32 %v3994, %v4268
      %v4305 = vadd.f32 %v3995, %v4273
      %v4306 = vadd.f32 %v3996, %v4276
      %v4307 = vld [vmem:[%s4] sm:$0x1]
      %v4309 = vlaneseq
      %v4310 = vshrl.u32 %v4309, 7
      %v4311 = vsub.s32 0, %v4310
      %v4312 = vrot.slane %v4307, %v4311
      %v4314 = vadd.f32 %v4279, %v4312
      %v4315 = vadd.f32 %v4280, %v4312
      %v4316 = vadd.f32 %v4281, %v4312
      %v4317 = vadd.f32 %v4282, %v4312
      %v4318 = vadd.f32 %v4283, %v4312
      %v4319 = vadd.f32 %v4284, %v4312
      %v4320 = vadd.f32 %v4285, %v4312
      %v4321 = vadd.f32 %v4286, %v4312
      %v4322 = vadd.f32 %v4287, %v4312
      %v4323 = vadd.f32 %v4288, %v4312
      %v4324 = vadd.f32 %v4289, %v4312
      %v4325 = vadd.f32 %v4290, %v4312
      %v4326 = vadd.f32 %v4291, %v4312
      %v4327 = vadd.f32 %v4292, %v4312
      %v4328 = vadd.f32 %v4293, %v4312
      %v4329 = vadd.f32 %v4294, %v4312
      %v4330 = vadd.f32 %v4295, %v4312
      %v4331 = vadd.f32 %v4296, %v4312
      %v4332 = vadd.f32 %v4297, %v4312
      %v4333 = vadd.f32 %v4298, %v4312
      %v4334 = vadd.f32 %v4299, %v4312
      %v4335 = vadd.f32 %v4300, %v4312
      %v4336 = vadd.f32 %v4301, %v4312
      %v4337 = vadd.f32 %v4302, %v4312
      %v4338 = vadd.f32 %v4303, %v4312
      %v4339 = vadd.f32 %v4304, %v4312
      %v4340 = vadd.f32 %v4305, %v4312
      %v4341 = vadd.f32 %v4306, %v4312
      %v4342 = vmax.f32 %v4314, 0.0
      %v4343 = vmax.f32 %v4315, 0.0
      %v4344 = vmax.f32 %v4316, 0.0
      %v4345 = vmax.f32 %v4317, 0.0
      %v4346 = vmax.f32 %v4318, 0.0
      %v4347 = vmax.f32 %v4319, 0.0
      %v4348 = vmax.f32 %v4320, 0.0
      %v4349 = vmax.f32 %v4321, 0.0
      %v4350 = vmax.f32 %v4322, 0.0
      %v4351 = vmax.f32 %v4323, 0.0
      %v4352 = vmax.f32 %v4324, 0.0
      %v4353 = vmax.f32 %v4325, 0.0
      %v4354 = vmax.f32 %v4326, 0.0
      %v4355 = vmax.f32 %v4327, 0.0
      %v4356 = vmax.f32 %v4328, 0.0
      %v4357 = vmax.f32 %v4329, 0.0
      %v4358 = vmax.f32 %v4330, 0.0
      %v4359 = vmax.f32 %v4331, 0.0
      %v4360 = vmax.f32 %v4332, 0.0
      %v4361 = vmax.f32 %v4333, 0.0
      %v4362 = vmax.f32 %v4334, 0.0
      %v4363 = vmax.f32 %v4335, 0.0
      %v4364 = vmax.f32 %v4336, 0.0
      %v4365 = vmax.f32 %v4337, 0.0
      %v4366 = vmax.f32 %v4338, 0.0
      %v4367 = vmax.f32 %v4339, 0.0
      %v4368 = vmax.f32 %v4340, 0.0
      %v4369 = vmax.f32 %v4341, 0.0
      %v4370 = vpack.c.bf16 %v4343, %v4342
      %v4371 = vpack.c.bf16 %v4345, %v4344
      %v4372 = vpack.c.bf16 %v4347, %v4346
      %v4373 = vpack.c.bf16 %v4349, %v4348
      %v4374 = vpack.c.bf16 %v4351, %v4350
      %v4375 = vpack.c.bf16 %v4353, %v4352
      %v4376 = vpack.c.bf16 %v4355, %v4354
      %v4377 = vpack.c.bf16 %v4357, %v4356
      %v4378 = vpack.c.bf16 %v4359, %v4358
      %v4379 = vpack.c.bf16 %v4361, %v4360
      %v4380 = vpack.c.bf16 %v4363, %v4362
      %v4381 = vpack.c.bf16 %v4365, %v4364
      %v4382 = vpack.c.bf16 %v4367, %v4366
      %v4383 = vpack.c.bf16 %v4369, %v4368
      %v4384 = vld [vmem:[%s5] sm:$0xf]
      %v4385 = vld [vmem:[%s5 + $0x4] sm:$0xf]
      %v4386 = vld [vmem:[%s5 + $0x8] sm:$0xf]
      %v4387 = vld [vmem:[%s5 + $0xc] sm:$0xf]
      %v4388 = vld [vmem:[%s5 + $0x10] sm:$0xf]
      %v4389 = vld [vmem:[%s5 + $0x14] sm:$0xf]
      %v4390 = vld [vmem:[%s5 + $0x18] sm:$0xf]
      %v4391 = vld [vmem:[%s5 + $0x1c] sm:$0xf]
      %v4392 = vld [vmem:[%s5 + $0x20] sm:$0xf]
      %v4393 = vld [vmem:[%s5 + $0x24] sm:$0xf]
      %v4394 = vld [vmem:[%s5 + $0x28] sm:$0xf]
      %v4395 = vld [vmem:[%s5 + $0x2c] sm:$0xf]
      %v4396 = vld [vmem:[%s5 + $0x30] sm:$0xf]
      %v4397 = vld [vmem:[%s5 + $0x34] sm:$0xf]
      %v4398 = vld [vmem:[%s5 + $0x38] sm:$0xf]
      %v4399 = vld [vmem:[%s5 + $0x3c] sm:$0xf]
      %s4400 = scalar_lea.vmem %s5, 64
      %v4401 = vld [vmem:[%s4400] sm:$0xf]
      %v4402 = vld [vmem:[%s4400 + $0x4] sm:$0xf]
      %v4403 = vld [vmem:[%s4400 + $0x8] sm:$0xf]
      %v4404 = vld [vmem:[%s4400 + $0xc] sm:$0xf]
      %v4405 = vld [vmem:[%s4400 + $0x10] sm:$0xf]
      %v4406 = vld [vmem:[%s4400 + $0x14] sm:$0xf]
      %v4407 = vld [vmem:[%s4400 + $0x18] sm:$0xf]
      %v4408 = vld [vmem:[%s4400 + $0x1c] sm:$0xf]
      %v4409 = vld [vmem:[%s4400 + $0x20] sm:$0xf]
      %v4410 = vld [vmem:[%s4400 + $0x24] sm:$0xf]
      %v4411 = vld [vmem:[%s4400 + $0x28] sm:$0xf]
      %v4412 = vld [vmem:[%s4400 + $0x2c] sm:$0xf]
      %v4413 = vld [vmem:[%s4400 + $0x30] sm:$0xf]
      %v4414 = vld [vmem:[%s4400 + $0x34] sm:$0xf]
      %v4415 = vld [vmem:[%s4400 + $0x38] sm:$0xf]
      %v4416 = vld [vmem:[%s4400 + $0x3c] sm:$0xf]
      %v4418 = vshrl.u32 %v4370, 16
      %v4420 = vshll.u32 %v4370, 16
      %v4422 = vrot.slane %v4420, 1
      %v4423 = vor.u32 %v4418, %v4422
      %v4425 = vshll.u32 %v4371, 16
      %v4427 = vrot.slane %v4425, 1
      %v4428 = vsel %vm1321, %v4423, %v4427
      %v4429 = vshrl.u32 %v4371, 16
      %v4431 = vor.u32 %v4429, %v4427
      %v4433 = vshll.u32 %v4372, 16
      %v4435 = vrot.slane %v4433, 1
      %v4436 = vsel %vm1321, %v4431, %v4435
      %v4437 = vshrl.u32 %v4372, 16
      %v4439 = vor.u32 %v4437, %v4435
      %v4441 = vshll.u32 %v4373, 16
      %v4443 = vrot.slane %v4441, 1
      %v4444 = vsel %vm1321, %v4439, %v4443
      %v4445 = vshrl.u32 %v4373, 16
      %v4447 = vor.u32 %v4445, %v4443
      %v4449 = vshll.u32 %v4374, 16
      %v4451 = vrot.slane %v4449, 1
      %v4452 = vsel %vm1321, %v4447, %v4451
      %v4453 = vshrl.u32 %v4374, 16
      %v4455 = vor.u32 %v4453, %v4451
      %v4457 = vshll.u32 %v4375, 16
      %v4459 = vrot.slane %v4457, 1
      %v4460 = vsel %vm1321, %v4455, %v4459
      %v4461 = vshrl.u32 %v4375, 16
      %v4463 = vor.u32 %v4461, %v4459
      %v4465 = vshll.u32 %v4376, 16
      %v4467 = vrot.slane %v4465, 1
      %v4468 = vsel %vm1321, %v4463, %v4467
      %v4469 = vshrl.u32 %v4376, 16
      %v4471 = vor.u32 %v4469, %v4467
      %v4473 = vshll.u32 %v4377, 16
      %v4475 = vrot.slane %v4473, 1
      %v4476 = vsel %vm1321, %v4471, %v4475
      %v4477 = vshrl.u32 %v4377, 16
      %v4479 = vor.u32 %v4477, %v4475
      %v4481 = vshll.u32 %v4378, 16
      %v4483 = vrot.slane %v4481, 1
      %v4484 = vsel %vm1321, %v4479, %v4483
      %v4485 = vshrl.u32 %v4378, 16
      %v4487 = vor.u32 %v4485, %v4483
      %v4489 = vshll.u32 %v4379, 16
      %v4491 = vrot.slane %v4489, 1
      %v4492 = vsel %vm1321, %v4487, %v4491
      %v4493 = vshrl.u32 %v4379, 16
      %v4495 = vor.u32 %v4493, %v4491
      %v4497 = vshll.u32 %v4380, 16
      %v4499 = vrot.slane %v4497, 1
      %v4500 = vsel %vm1321, %v4495, %v4499
      %v4501 = vshrl.u32 %v4380, 16
      %v4503 = vor.u32 %v4501, %v4499
      %v4505 = vshll.u32 %v4381, 16
      %v4507 = vrot.slane %v4505, 1
      %v4508 = vsel %vm1321, %v4503, %v4507
      %v4509 = vshrl.u32 %v4381, 16
      %v4511 = vor.u32 %v4509, %v4507
      %v4540 = vunpack.c.l.b16 %v4401
      %v4541 = vunpack.c.l.b16 %v4402
      %v4542 = vunpack.c.l.b16 %v4403
      %v4543 = vunpack.c.l.b16 %v4404
      %v4544 = vunpack.c.l.b16 %v4405
      %v4545 = vunpack.c.l.b16 %v4406
      %v4546 = vunpack.c.l.b16 %v4407
      %v4547 = vunpack.c.l.b16 %v4408
      %v4548 = vunpack.c.l.b16 %v4409
      %v4549 = vunpack.c.l.b16 %v4410
      %v4550 = vunpack.c.l.b16 %v4411
      %v4551 = vunpack.c.l.b16 %v4412
      %v4552 = vunpack.c.l.b16 %v4413
      %v4553 = vunpack.c.l.b16 %v4414
      %v4554 = vunpack.c.l.b16 %v4415
      %v4555 = vunpack.c.l.b16 %v4416
      %v4556 = vpack.c.b16 %v4541, %v4540
      %v4557 = vpack.c.b16 %v4543, %v4542
      %v4558 = vpack.c.b16 %v4545, %v4544
      %v4559 = vpack.c.b16 %v4547, %v4546
      %v4560 = vpack.c.b16 %v4549, %v4548
      %v4561 = vpack.c.b16 %v4551, %v4550
      %v4562 = vpack.c.b16 %v4553, %v4552
      %v4563 = vpack.c.b16 %v4555, %v4554
      %4572 = vmatprep.subr.bf16.mxu0 0
      %4573 = vmatpush1.bf16.msra.mxu0 %v4563
      %4574 = vmatprep.subr.bf16.mxu0 0
      %4575 = vmatpush1.bf16.msra.mxu0 %v4562
      %4576 = vmatprep.subr.bf16.mxu0 0
      %4577 = vmatpush1.bf16.msra.mxu0 %v4561
      %4578 = vmatprep.subr.bf16.mxu0 0
      %4579 = vmatpush1.bf16.msra.mxu0 %v4560
      %4580 = vmatprep.subr.bf16.mxu0 0
      %4581 = vmatpush1.bf16.msra.mxu0 %v4559
      %4582 = vmatprep.subr.bf16.mxu0 0
      %4583 = vmatpush1.bf16.msra.mxu0 %v4558
      %4584 = vmatprep.subr.bf16.mxu0 0
      %4585 = vmatpush1.bf16.msra.mxu0 %v4557
      %4586 = vmatprep.subr.bf16.mxu0 0
      %4587 = vmatpush1.bf16.msra.mxu0 %v4556
      %4588 = vmatprep.subr.bf16.mxu0 0
      %4589 = vmatpush2.bf16.msra.mxu0 0
      %4590 = vmatprep.subr.bf16.mxu0 0
      %4591 = vmatpush2.bf16.msra.mxu0 0
      %4592 = vmatprep.subr.bf16.mxu0 0
      %4593 = vmatpush2.bf16.msra.mxu0 0
      %4594 = vmatprep.subr.bf16.mxu0 0
      %4595 = vmatpush2.bf16.msra.mxu0 0
      %4596 = vmatprep.subr.bf16.mxu0 0
      %4597 = vmatpush2.bf16.msra.mxu0 0
      %4598 = vmatprep.subr.bf16.mxu0 0
      %4599 = vmatpush2.bf16.msra.mxu0 0
      %4600 = vmatprep.subr.bf16.mxu0 0
      %4601 = vmatpush2.bf16.msra.mxu0 0
      %4602 = vmatprep.subr.bf16.mxu0 0
      %4603 = vmatpush2.bf16.msra.mxu0 0
      %4604 = vmatprep.mubr.bf16.mxu0 0
      %4605 = vmatmul.mubr.bf16.gmra.mxu0 %v4428
      %v4606 = vpop.f32.mrf.mxu0
      %v4607 = vadd.f32 0.0, %v4606
      %v4608 = vpop.f32.mrf.mxu0
      %v4609 = vpop.f32.mrf.mxu0
      %v4610 = vadd.f32 0.0, %v4609
      %v4611 = vpop.f32.mrf.mxu0
      %4612 = vmatprep.mubr.bf16.mxu0 0
      %4613 = vmatmul.mubr.bf16.gmra.mxu0 %v4436
      %v4614 = vpop.f32.mrf.mxu0
      %v4615 = vadd.f32 0.0, %v4614
      %v4616 = vpop.f32.mrf.mxu0
      %v4617 = vpop.f32.mrf.mxu0
      %v4618 = vadd.f32 0.0, %v4617
      %v4619 = vpop.f32.mrf.mxu0
      %4620 = vmatprep.mubr.bf16.mxu0 0
      %4621 = vmatmul.mubr.bf16.gmra.mxu0 %v4444
      %v4622 = vpop.f32.mrf.mxu0
      %v4623 = vadd.f32 0.0, %v4622
      %v4624 = vpop.f32.mrf.mxu0
      %v4625 = vpop.f32.mrf.mxu0
      %v4626 = vadd.f32 0.0, %v4625
      %v4627 = vpop.f32.mrf.mxu0
      %4628 = vmatprep.mubr.bf16.mxu0 0
      %4629 = vmatmul.mubr.bf16.gmra.mxu0 %v4452
      %v4630 = vpop.f32.mrf.mxu0
      %v4631 = vadd.f32 0.0, %v4630
      %v4632 = vpop.f32.mrf.mxu0
      %v4633 = vpop.f32.mrf.mxu0
      %v4634 = vadd.f32 0.0, %v4633
      %v4635 = vpop.f32.mrf.mxu0
      %4636 = vmatprep.mubr.bf16.mxu0 0
      %4637 = vmatmul.mubr.bf16.gmra.mxu0 %v4460
      %v4638 = vpop.f32.mrf.mxu0
      %v4639 = vadd.f32 0.0, %v4638
      %v4640 = vpop.f32.mrf.mxu0
      %v4641 = vpop.f32.mrf.mxu0
      %v4642 = vadd.f32 0.0, %v4641
      %v4643 = vpop.f32.mrf.mxu0
      %4644 = vmatprep.mubr.bf16.mxu0 0
      %4645 = vmatmul.mubr.bf16.gmra.mxu0 %v4468
      %v4646 = vpop.f32.mrf.mxu0
      %v4647 = vadd.f32 0.0, %v4646
      %v4648 = vpop.f32.mrf.mxu0
      %v4649 = vpop.f32.mrf.mxu0
      %v4650 = vadd.f32 0.0, %v4649
      %v4651 = vpop.f32.mrf.mxu0
      %4652 = vmatprep.mubr.bf16.mxu0 0
      %4653 = vmatmul.mubr.bf16.gmra.mxu0 %v4476
      %v4654 = vpop.f32.mrf.mxu0
      %v4655 = vadd.f32 0.0, %v4654
      %v4656 = vpop.f32.mrf.mxu0
      %v4657 = vpop.f32.mrf.mxu0
      %v4658 = vadd.f32 0.0, %v4657
      %v4659 = vpop.f32.mrf.mxu0
      %4660 = vmatprep.mubr.bf16.mxu0 0
      %4661 = vmatmul.mubr.bf16.gmra.mxu0 %v4484
      %v4662 = vpop.f32.mrf.mxu0
      %v4663 = vadd.f32 0.0, %v4662
      %v4664 = vpop.f32.mrf.mxu0
      %v4665 = vpop.f32.mrf.mxu0
      %v4666 = vadd.f32 0.0, %v4665
      %v4667 = vpop.f32.mrf.mxu0
      %4668 = vmatprep.mubr.bf16.mxu0 0
      %4669 = vmatmul.mubr.bf16.gmra.mxu0 %v4492
      %v4670 = vpop.f32.mrf.mxu0
      %v4671 = vadd.f32 0.0, %v4670
      %v4672 = vpop.f32.mrf.mxu0
      %v4673 = vpop.f32.mrf.mxu0
      %v4674 = vadd.f32 0.0, %v4673
      %v4675 = vpop.f32.mrf.mxu0
      %4676 = vmatprep.mubr.bf16.mxu0 0
      %4677 = vmatmul.mubr.bf16.gmra.mxu0 %v4500
      %v4678 = vpop.f32.mrf.mxu0
      %v4679 = vadd.f32 0.0, %v4678
      %v4680 = vpop.f32.mrf.mxu0
      %v4681 = vpop.f32.mrf.mxu0
      %v4682 = vadd.f32 0.0, %v4681
      %v4683 = vpop.f32.mrf.mxu0
      %4684 = vmatprep.mubr.bf16.mxu0 0
      %4685 = vmatmul.mubr.bf16.gmra.mxu0 %v4508
      %v4686 = vpop.f32.mrf.mxu0
      %v4687 = vadd.f32 0.0, %v4686
      %v4688 = vpop.f32.mrf.mxu0
      %v4689 = vpop.f32.mrf.mxu0
      %v4690 = vadd.f32 0.0, %v4689
      %v4691 = vpop.f32.mrf.mxu0
      %4692 = vmatprep.mubr.bf16.mxu0 0
      %4693 = vmatmul.mubr.bf16.gmra.mxu0 %v4511
      %v4694 = vpop.f32.mrf.mxu0
      %v4695 = vadd.f32 0.0, %v4694
      %v4696 = vpop.f32.mrf.mxu0
      %v4697 = vpop.f32.mrf.mxu0
      %v4698 = vadd.f32 0.0, %v4697
      %v4699 = vpop.f32.mrf.mxu0
      %4700 = vdwg.mxu0
      %v4717 = vunpack.c.l.b16 %v4384
      %v4718 = vunpack.c.l.b16 %v4385
      %v4719 = vunpack.c.l.b16 %v4386
      %v4720 = vunpack.c.l.b16 %v4387
      %v4721 = vunpack.c.l.b16 %v4388
      %v4722 = vunpack.c.l.b16 %v4389
      %v4723 = vunpack.c.l.b16 %v4390
      %v4724 = vunpack.c.l.b16 %v4391
      %v4725 = vunpack.c.l.b16 %v4392
      %v4726 = vunpack.c.l.b16 %v4393
      %v4727 = vunpack.c.l.b16 %v4394
      %v4728 = vunpack.c.l.b16 %v4395
      %v4729 = vunpack.c.l.b16 %v4396
      %v4730 = vunpack.c.l.b16 %v4397
      %v4731 = vunpack.c.l.b16 %v4398
      %v4732 = vunpack.c.l.b16 %v4399
      %v4733 = vpack.c.b16 %v4718, %v4717
      %v4734 = vpack.c.b16 %v4720, %v4719
      %v4735 = vpack.c.b16 %v4722, %v4721
      %v4736 = vpack.c.b16 %v4724, %v4723
      %v4737 = vpack.c.b16 %v4726, %v4725
      %v4738 = vpack.c.b16 %v4728, %v4727
      %v4739 = vpack.c.b16 %v4730, %v4729
      %v4740 = vpack.c.b16 %v4732, %v4731
      %4749 = vmatprep.subr.bf16.mxu0 0
      %4750 = vmatpush1.bf16.msra.mxu0 %v4740
      %4751 = vmatprep.subr.bf16.mxu0 0
      %4752 = vmatpush1.bf16.msra.mxu0 %v4739
      %4753 = vmatprep.subr.bf16.mxu0 0
      %4754 = vmatpush1.bf16.msra.mxu0 %v4738
      %4755 = vmatprep.subr.bf16.mxu0 0
      %4756 = vmatpush1.bf16.msra.mxu0 %v4737
      %4757 = vmatprep.subr.bf16.mxu0 0
      %4758 = vmatpush1.bf16.msra.mxu0 %v4736
      %4759 = vmatprep.subr.bf16.mxu0 0
      %4760 = vmatpush1.bf16.msra.mxu0 %v4735
      %4761 = vmatprep.subr.bf16.mxu0 0
      %4762 = vmatpush1.bf16.msra.mxu0 %v4734
      %4763 = vmatprep.subr.bf16.mxu0 0
      %4764 = vmatpush1.bf16.msra.mxu0 %v4733
      %4765 = vmatprep.subr.bf16.mxu0 0
      %4766 = vmatpush2.bf16.msra.mxu0 0
      %4767 = vmatprep.subr.bf16.mxu0 0
      %4768 = vmatpush2.bf16.msra.mxu0 0
      %4769 = vmatprep.subr.bf16.mxu0 0
      %4770 = vmatpush2.bf16.msra.mxu0 0
      %4771 = vmatprep.subr.bf16.mxu0 0
      %4772 = vmatpush2.bf16.msra.mxu0 0
      %4773 = vmatprep.subr.bf16.mxu0 0
      %4774 = vmatpush2.bf16.msra.mxu0 0
      %4775 = vmatprep.subr.bf16.mxu0 0
      %4776 = vmatpush2.bf16.msra.mxu0 0
      %4777 = vmatprep.subr.bf16.mxu0 0
      %4778 = vmatpush2.bf16.msra.mxu0 0
      %4779 = vmatprep.subr.bf16.mxu0 0
      %4780 = vmatpush2.bf16.msra.mxu0 0
      %4781 = vmatprep.mubr.bf16.mxu0 0
      %4782 = vmatmul.mubr.bf16.gmra.mxu0 %v4370
      %v4783 = vpop.f32.mrf.mxu0
      %v4784 = vadd.f32 %v4607, %v4783
      %v4785 = vpop.f32.mrf.mxu0
      %v4786 = vpop.f32.mrf.mxu0
      %v4787 = vadd.f32 %v4610, %v4786
      %v4788 = vpop.f32.mrf.mxu0
      %4789 = vmatprep.mubr.bf16.mxu0 0
      %4790 = vmatmul.mubr.bf16.gmra.mxu0 %v4371
      %v4791 = vpop.f32.mrf.mxu0
      %v4792 = vadd.f32 %v4615, %v4791
      %v4793 = vpop.f32.mrf.mxu0
      %v4794 = vpop.f32.mrf.mxu0
      %v4795 = vadd.f32 %v4618, %v4794
      %v4796 = vpop.f32.mrf.mxu0
      %4797 = vmatprep.mubr.bf16.mxu0 0
      %4798 = vmatmul.mubr.bf16.gmra.mxu0 %v4372
      %v4799 = vpop.f32.mrf.mxu0
      %v4800 = vadd.f32 %v4623, %v4799
      %v4801 = vpop.f32.mrf.mxu0
      %v4802 = vpop.f32.mrf.mxu0
      %v4803 = vadd.f32 %v4626, %v4802
      %v4804 = vpop.f32.mrf.mxu0
      %4805 = vmatprep.mubr.bf16.mxu0 0
      %4806 = vmatmul.mubr.bf16.gmra.mxu0 %v4373
      %v4807 = vpop.f32.mrf.mxu0
      %v4808 = vadd.f32 %v4631, %v4807
      %v4809 = vpop.f32.mrf.mxu0
      %v4810 = vpop.f32.mrf.mxu0
      %v4811 = vadd.f32 %v4634, %v4810
      %v4812 = vpop.f32.mrf.mxu0
      %4813 = vmatprep.mubr.bf16.mxu0 0
      %4814 = vmatmul.mubr.bf16.gmra.mxu0 %v4374
      %v4815 = vpop.f32.mrf.mxu0
      %v4816 = vadd.f32 %v4639, %v4815
      %v4817 = vpop.f32.mrf.mxu0
      %v4818 = vpop.f32.mrf.mxu0
      %v4819 = vadd.f32 %v4642, %v4818
      %v4820 = vpop.f32.mrf.mxu0
      %4821 = vmatprep.mubr.bf16.mxu0 0
      %4822 = vmatmul.mubr.bf16.gmra.mxu0 %v4375
      %v4823 = vpop.f32.mrf.mxu0
      %v4824 = vadd.f32 %v4647, %v4823
      %v4825 = vpop.f32.mrf.mxu0
      %v4826 = vpop.f32.mrf.mxu0
      %v4827 = vadd.f32 %v4650, %v4826
      %v4828 = vpop.f32.mrf.mxu0
      %4829 = vmatprep.mubr.bf16.mxu0 0
      %4830 = vmatmul.mubr.bf16.gmra.mxu0 %v4376
      %v4831 = vpop.f32.mrf.mxu0
      %v4832 = vadd.f32 %v4655, %v4831
      %v4833 = vpop.f32.mrf.mxu0
      %v4834 = vpop.f32.mrf.mxu0
      %v4835 = vadd.f32 %v4658, %v4834
      %v4836 = vpop.f32.mrf.mxu0
      %4837 = vmatprep.mubr.bf16.mxu0 0
      %4838 = vmatmul.mubr.bf16.gmra.mxu0 %v4377
      %v4839 = vpop.f32.mrf.mxu0
      %v4840 = vadd.f32 %v4663, %v4839
      %v4841 = vpop.f32.mrf.mxu0
      %v4842 = vpop.f32.mrf.mxu0
      %v4843 = vadd.f32 %v4666, %v4842
      %v4844 = vpop.f32.mrf.mxu0
      %4845 = vmatprep.mubr.bf16.mxu0 0
      %4846 = vmatmul.mubr.bf16.gmra.mxu0 %v4378
      %v4847 = vpop.f32.mrf.mxu0
      %v4848 = vadd.f32 %v4671, %v4847
      %v4849 = vpop.f32.mrf.mxu0
      %v4850 = vpop.f32.mrf.mxu0
      %v4851 = vadd.f32 %v4674, %v4850
      %v4852 = vpop.f32.mrf.mxu0
      %4853 = vmatprep.mubr.bf16.mxu0 0
      %4854 = vmatmul.mubr.bf16.gmra.mxu0 %v4379
      %v4855 = vpop.f32.mrf.mxu0
      %v4856 = vadd.f32 %v4679, %v4855
      %v4857 = vpop.f32.mrf.mxu0
      %v4858 = vpop.f32.mrf.mxu0
      %v4859 = vadd.f32 %v4682, %v4858
      %v4860 = vpop.f32.mrf.mxu0
      %4861 = vmatprep.mubr.bf16.mxu0 0
      %4862 = vmatmul.mubr.bf16.gmra.mxu0 %v4380
      %v4863 = vpop.f32.mrf.mxu0
      %v4864 = vadd.f32 %v4687, %v4863
      %v4865 = vpop.f32.mrf.mxu0
      %v4866 = vpop.f32.mrf.mxu0
      %v4867 = vadd.f32 %v4690, %v4866
      %v4868 = vpop.f32.mrf.mxu0
      %4869 = vmatprep.mubr.bf16.mxu0 0
      %4870 = vmatmul.mubr.bf16.gmra.mxu0 %v4381
      %v4871 = vpop.f32.mrf.mxu0
      %v4872 = vadd.f32 %v4695, %v4871
      %v4873 = vpop.f32.mrf.mxu0
      %v4874 = vpop.f32.mrf.mxu0
      %v4875 = vadd.f32 %v4698, %v4874
      %v4876 = vpop.f32.mrf.mxu0
      %4877 = vdwg.mxu0
      %s4878 = scalar_lea.vmem %s5, 128
      %v4879 = vld [vmem:[%s4878] sm:$0xf]
      %v4880 = vld [vmem:[%s4878 + $0x4] sm:$0xf]
      %v4881 = vld [vmem:[%s4878 + $0x8] sm:$0xf]
      %v4882 = vld [vmem:[%s4878 + $0xc] sm:$0xf]
      %v4883 = vld [vmem:[%s4878 + $0x10] sm:$0xf]
      %v4884 = vld [vmem:[%s4878 + $0x14] sm:$0xf]
      %v4885 = vld [vmem:[%s4878 + $0x18] sm:$0xf]
      %v4886 = vld [vmem:[%s4878 + $0x1c] sm:$0xf]
      %v4887 = vld [vmem:[%s4878 + $0x20] sm:$0xf]
      %v4888 = vld [vmem:[%s4878 + $0x24] sm:$0xf]
      %v4889 = vld [vmem:[%s4878 + $0x28] sm:$0xf]
      %v4890 = vld [vmem:[%s4878 + $0x2c] sm:$0xf]
      %v4891 = vld [vmem:[%s4878 + $0x30] sm:$0xf]
      %v4892 = vld [vmem:[%s4878 + $0x34] sm:$0xf]
      %v4893 = vld [vmem:[%s4878 + $0x38] sm:$0xf]
      %v4894 = vld [vmem:[%s4878 + $0x3c] sm:$0xf]
      %v4907 = vrot.slane %v4370, 1
      %v4908 = vrot.slane %v4371, 1
      %v4909 = vsel %vm2087, %v4907, %v4908
      %v4910 = vrot.slane %v4372, 1
      %v4911 = vsel %vm2087, %v4908, %v4910
      %v4912 = vrot.slane %v4373, 1
      %v4913 = vsel %vm2087, %v4910, %v4912
      %v4914 = vrot.slane %v4374, 1
      %v4915 = vsel %vm2087, %v4912, %v4914
      %v4916 = vrot.slane %v4375, 1
      %v4917 = vsel %vm2087, %v4914, %v4916
      %v4918 = vrot.slane %v4376, 1
      %v4919 = vsel %vm2087, %v4916, %v4918
      %v4920 = vrot.slane %v4377, 1
      %v4921 = vsel %vm2087, %v4918, %v4920
      %v4922 = vrot.slane %v4378, 1
      %v4923 = vsel %vm2087, %v4920, %v4922
      %v4924 = vrot.slane %v4379, 1
      %v4925 = vsel %vm2087, %v4922, %v4924
      %v4926 = vrot.slane %v4380, 1
      %v4927 = vsel %vm2087, %v4924, %v4926
      %v4928 = vrot.slane %v4381, 1
      %v4929 = vsel %vm2087, %v4926, %v4928
      %v4958 = vunpack.c.l.b16 %v4879
      %v4959 = vunpack.c.l.b16 %v4880
      %v4960 = vunpack.c.l.b16 %v4881
      %v4961 = vunpack.c.l.b16 %v4882
      %v4962 = vunpack.c.l.b16 %v4883
      %v4963 = vunpack.c.l.b16 %v4884
      %v4964 = vunpack.c.l.b16 %v4885
      %v4965 = vunpack.c.l.b16 %v4886
      %v4966 = vunpack.c.l.b16 %v4887
      %v4967 = vunpack.c.l.b16 %v4888
      %v4968 = vunpack.c.l.b16 %v4889
      %v4969 = vunpack.c.l.b16 %v4890
      %v4970 = vunpack.c.l.b16 %v4891
      %v4971 = vunpack.c.l.b16 %v4892
      %v4972 = vunpack.c.l.b16 %v4893
      %v4973 = vunpack.c.l.b16 %v4894
      %v4974 = vpack.c.b16 %v4959, %v4958
      %v4975 = vpack.c.b16 %v4961, %v4960
      %v4976 = vpack.c.b16 %v4963, %v4962
      %v4977 = vpack.c.b16 %v4965, %v4964
      %v4978 = vpack.c.b16 %v4967, %v4966
      %v4979 = vpack.c.b16 %v4969, %v4968
      %v4980 = vpack.c.b16 %v4971, %v4970
      %v4981 = vpack.c.b16 %v4973, %v4972
      %4990 = vmatprep.subr.bf16.mxu0 0
      %4991 = vmatpush1.bf16.msra.mxu0 %v4981
      %4992 = vmatprep.subr.bf16.mxu0 0
      %4993 = vmatpush1.bf16.msra.mxu0 %v4980
      %4994 = vmatprep.subr.bf16.mxu0 0
      %4995 = vmatpush1.bf16.msra.mxu0 %v4979
      %4996 = vmatprep.subr.bf16.mxu0 0
      %4997 = vmatpush1.bf16.msra.mxu0 %v4978
      %4998 = vmatprep.subr.bf16.mxu0 0
      %4999 = vmatpush1.bf16.msra.mxu0 %v4977
      %5000 = vmatprep.subr.bf16.mxu0 0
      %5001 = vmatpush1.bf16.msra.mxu0 %v4976
      %5002 = vmatprep.subr.bf16.mxu0 0
      %5003 = vmatpush1.bf16.msra.mxu0 %v4975
      %5004 = vmatprep.subr.bf16.mxu0 0
      %5005 = vmatpush1.bf16.msra.mxu0 %v4974
      %5006 = vmatprep.subr.bf16.mxu0 0
      %5007 = vmatpush2.bf16.msra.mxu0 0
      %5008 = vmatprep.subr.bf16.mxu0 0
      %5009 = vmatpush2.bf16.msra.mxu0 0
      %5010 = vmatprep.subr.bf16.mxu0 0
      %5011 = vmatpush2.bf16.msra.mxu0 0
      %5012 = vmatprep.subr.bf16.mxu0 0
      %5013 = vmatpush2.bf16.msra.mxu0 0
      %5014 = vmatprep.subr.bf16.mxu0 0
      %5015 = vmatpush2.bf16.msra.mxu0 0
      %5016 = vmatprep.subr.bf16.mxu0 0
      %5017 = vmatpush2.bf16.msra.mxu0 0
      %5018 = vmatprep.subr.bf16.mxu0 0
      %5019 = vmatpush2.bf16.msra.mxu0 0
      %5020 = vmatprep.subr.bf16.mxu0 0
      %5021 = vmatpush2.bf16.msra.mxu0 0
      %5022 = vmatprep.mubr.bf16.mxu0 0
      %5023 = vmatmul.mubr.bf16.gmra.mxu0 %v4909
      %v5024 = vpop.f32.mrf.mxu0
      %v5025 = vadd.f32 0.0, %v5024
      %v5026 = vpop.f32.mrf.mxu0
      %v5027 = vpop.f32.mrf.mxu0
      %v5028 = vadd.f32 0.0, %v5027
      %v5029 = vpop.f32.mrf.mxu0
      %5030 = vmatprep.mubr.bf16.mxu0 0
      %5031 = vmatmul.mubr.bf16.gmra.mxu0 %v4911
      %v5032 = vpop.f32.mrf.mxu0
      %v5033 = vadd.f32 0.0, %v5032
      %v5034 = vpop.f32.mrf.mxu0
      %v5035 = vpop.f32.mrf.mxu0
      %v5036 = vadd.f32 0.0, %v5035
      %v5037 = vpop.f32.mrf.mxu0
      %5038 = vmatprep.mubr.bf16.mxu0 0
      %5039 = vmatmul.mubr.bf16.gmra.mxu0 %v4913
      %v5040 = vpop.f32.mrf.mxu0
      %v5041 = vadd.f32 0.0, %v5040
      %v5042 = vpop.f32.mrf.mxu0
      %v5043 = vpop.f32.mrf.mxu0
      %v5044 = vadd.f32 0.0, %v5043
      %v5045 = vpop.f32.mrf.mxu0
      %5046 = vmatprep.mubr.bf16.mxu0 0
      %5047 = vmatmul.mubr.bf16.gmra.mxu0 %v4915
      %v5048 = vpop.f32.mrf.mxu0
      %v5049 = vadd.f32 0.0, %v5048
      %v5050 = vpop.f32.mrf.mxu0
      %v5051 = vpop.f32.mrf.mxu0
      %v5052 = vadd.f32 0.0, %v5051
      %v5053 = vpop.f32.mrf.mxu0
      %5054 = vmatprep.mubr.bf16.mxu0 0
      %5055 = vmatmul.mubr.bf16.gmra.mxu0 %v4917
      %v5056 = vpop.f32.mrf.mxu0
      %v5057 = vadd.f32 0.0, %v5056
      %v5058 = vpop.f32.mrf.mxu0
      %v5059 = vpop.f32.mrf.mxu0
      %v5060 = vadd.f32 0.0, %v5059
      %v5061 = vpop.f32.mrf.mxu0
      %5062 = vmatprep.mubr.bf16.mxu0 0
      %5063 = vmatmul.mubr.bf16.gmra.mxu0 %v4919
      %v5064 = vpop.f32.mrf.mxu0
      %v5065 = vadd.f32 0.0, %v5064
      %v5066 = vpop.f32.mrf.mxu0
      %v5067 = vpop.f32.mrf.mxu0
      %v5068 = vadd.f32 0.0, %v5067
      %v5069 = vpop.f32.mrf.mxu0
      %5070 = vmatprep.mubr.bf16.mxu0 0
      %5071 = vmatmul.mubr.bf16.gmra.mxu0 %v4921
      %v5072 = vpop.f32.mrf.mxu0
      %v5073 = vadd.f32 0.0, %v5072
      %v5074 = vpop.f32.mrf.mxu0
      %v5075 = vpop.f32.mrf.mxu0
      %v5076 = vadd.f32 0.0, %v5075
      %v5077 = vpop.f32.mrf.mxu0
      %5078 = vmatprep.mubr.bf16.mxu0 0
      %5079 = vmatmul.mubr.bf16.gmra.mxu0 %v4923
      %v5080 = vpop.f32.mrf.mxu0
      %v5081 = vadd.f32 0.0, %v5080
      %v5082 = vpop.f32.mrf.mxu0
      %v5083 = vpop.f32.mrf.mxu0
      %v5084 = vadd.f32 0.0, %v5083
      %v5085 = vpop.f32.mrf.mxu0
      %5086 = vmatprep.mubr.bf16.mxu0 0
      %5087 = vmatmul.mubr.bf16.gmra.mxu0 %v4925
      %v5088 = vpop.f32.mrf.mxu0
      %v5089 = vadd.f32 0.0, %v5088
      %v5090 = vpop.f32.mrf.mxu0
      %v5091 = vpop.f32.mrf.mxu0
      %v5092 = vadd.f32 0.0, %v5091
      %v5093 = vpop.f32.mrf.mxu0
      %5094 = vmatprep.mubr.bf16.mxu0 0
      %5095 = vmatmul.mubr.bf16.gmra.mxu0 %v4927
      %v5096 = vpop.f32.mrf.mxu0
      %v5097 = vadd.f32 0.0, %v5096
      %v5098 = vpop.f32.mrf.mxu0
      %v5099 = vpop.f32.mrf.mxu0
      %v5100 = vadd.f32 0.0, %v5099
      %v5101 = vpop.f32.mrf.mxu0
      %5102 = vmatprep.mubr.bf16.mxu0 0
      %5103 = vmatmul.mubr.bf16.gmra.mxu0 %v4929
      %v5104 = vpop.f32.mrf.mxu0
      %v5105 = vadd.f32 0.0, %v5104
      %v5106 = vpop.f32.mrf.mxu0
      %v5107 = vpop.f32.mrf.mxu0
      %v5108 = vadd.f32 0.0, %v5107
      %v5109 = vpop.f32.mrf.mxu0
      %5110 = vmatprep.mubr.bf16.mxu0 0
      %5111 = vmatmul.mubr.bf16.gmra.mxu0 %v4928
      %v5112 = vpop.f32.mrf.mxu0
      %v5113 = vadd.f32 0.0, %v5112
      %v5114 = vpop.f32.mrf.mxu0
      %v5115 = vpop.f32.mrf.mxu0
      %v5116 = vadd.f32 0.0, %v5115
      %v5117 = vpop.f32.mrf.mxu0
      %5118 = vdwg.mxu0
      %v5119 = vadd.f32 %v4784, %v5025
      %v5120 = vadd.f32 %v4787, %v5028
      %v5121 = vadd.f32 %v4792, %v5033
      %v5122 = vadd.f32 %v4795, %v5036
      %v5123 = vadd.f32 %v4800, %v5041
      %v5124 = vadd.f32 %v4803, %v5044
      %v5125 = vadd.f32 %v4808, %v5049
      %v5126 = vadd.f32 %v4811, %v5052
      %v5127 = vadd.f32 %v4816, %v5057
      %v5128 = vadd.f32 %v4819, %v5060
      %v5129 = vadd.f32 %v4824, %v5065
      %v5130 = vadd.f32 %v4827, %v5068
      %v5131 = vadd.f32 %v4832, %v5073
      %v5132 = vadd.f32 %v4835, %v5076
      %v5133 = vadd.f32 %v4840, %v5081
      %v5134 = vadd.f32 %v4843, %v5084
      %v5135 = vadd.f32 %v4848, %v5089
      %v5136 = vadd.f32 %v4851, %v5092
      %v5137 = vadd.f32 %v4856, %v5097
      %v5138 = vadd.f32 %v4859, %v5100
      %v5139 = vadd.f32 %v4864, %v5105
      %v5140 = vadd.f32 %v4867, %v5108
      %v5141 = vadd.f32 %v4872, %v5113
      %v5142 = vadd.f32 %v4875, %v5116
      %s5143 = scalar_lea.vmem %s5, 192
      %v5144 = vld [vmem:[%s5143] sm:$0xf]
      %v5145 = vld [vmem:[%s5143 + $0x4] sm:$0xf]
      %v5146 = vld [vmem:[%s5143 + $0x8] sm:$0xf]
      %v5147 = vld [vmem:[%s5143 + $0xc] sm:$0xf]
      %v5148 = vld [vmem:[%s5143 + $0x10] sm:$0xf]
      %v5149 = vld [vmem:[%s5143 + $0x14] sm:$0xf]
      %v5150 = vld [vmem:[%s5143 + $0x18] sm:$0xf]
      %v5151 = vld [vmem:[%s5143 + $0x1c] sm:$0xf]
      %v5152 = vld [vmem:[%s5143 + $0x20] sm:$0xf]
      %v5153 = vld [vmem:[%s5143 + $0x24] sm:$0xf]
      %v5154 = vld [vmem:[%s5143 + $0x28] sm:$0xf]
      %v5155 = vld [vmem:[%s5143 + $0x2c] sm:$0xf]
      %v5156 = vld [vmem:[%s5143 + $0x30] sm:$0xf]
      %v5157 = vld [vmem:[%s5143 + $0x34] sm:$0xf]
      %v5158 = vld [vmem:[%s5143 + $0x38] sm:$0xf]
      %v5159 = vld [vmem:[%s5143 + $0x3c] sm:$0xf]
      %v5176 = vunpack.c.l.b16 %v5144
      %v5177 = vunpack.c.l.b16 %v5145
      %v5178 = vunpack.c.l.b16 %v5146
      %v5179 = vunpack.c.l.b16 %v5147
      %v5180 = vunpack.c.l.b16 %v5148
      %v5181 = vunpack.c.l.b16 %v5149
      %v5182 = vunpack.c.l.b16 %v5150
      %v5183 = vunpack.c.l.b16 %v5151
      %v5184 = vunpack.c.l.b16 %v5152
      %v5185 = vunpack.c.l.b16 %v5153
      %v5186 = vunpack.c.l.b16 %v5154
      %v5187 = vunpack.c.l.b16 %v5155
      %v5188 = vunpack.c.l.b16 %v5156
      %v5189 = vunpack.c.l.b16 %v5157
      %v5190 = vunpack.c.l.b16 %v5158
      %v5191 = vunpack.c.l.b16 %v5159
      %v5192 = vpack.c.b16 %v5177, %v5176
      %v5193 = vpack.c.b16 %v5179, %v5178
      %v5194 = vpack.c.b16 %v5181, %v5180
      %v5195 = vpack.c.b16 %v5183, %v5182
      %v5196 = vpack.c.b16 %v5185, %v5184
      %v5197 = vpack.c.b16 %v5187, %v5186
      %v5198 = vpack.c.b16 %v5189, %v5188
      %v5199 = vpack.c.b16 %v5191, %v5190
      %5208 = vmatprep.subr.bf16.mxu0 0
      %5209 = vmatpush1.bf16.msra.mxu0 %v5199
      %5210 = vmatprep.subr.bf16.mxu0 0
      %5211 = vmatpush1.bf16.msra.mxu0 %v5198
      %5212 = vmatprep.subr.bf16.mxu0 0
      %5213 = vmatpush1.bf16.msra.mxu0 %v5197
      %5214 = vmatprep.subr.bf16.mxu0 0
      %5215 = vmatpush1.bf16.msra.mxu0 %v5196
      %5216 = vmatprep.subr.bf16.mxu0 0
      %5217 = vmatpush1.bf16.msra.mxu0 %v5195
      %5218 = vmatprep.subr.bf16.mxu0 0
      %5219 = vmatpush1.bf16.msra.mxu0 %v5194
      %5220 = vmatprep.subr.bf16.mxu0 0
      %5221 = vmatpush1.bf16.msra.mxu0 %v5193
      %5222 = vmatprep.subr.bf16.mxu0 0
      %5223 = vmatpush1.bf16.msra.mxu0 %v5192
      %5224 = vmatprep.subr.bf16.mxu0 0
      %5225 = vmatpush2.bf16.msra.mxu0 0
      %5226 = vmatprep.subr.bf16.mxu0 0
      %5227 = vmatpush2.bf16.msra.mxu0 0
      %5228 = vmatprep.subr.bf16.mxu0 0
      %5229 = vmatpush2.bf16.msra.mxu0 0
      %5230 = vmatprep.subr.bf16.mxu0 0
      %5231 = vmatpush2.bf16.msra.mxu0 0
      %5232 = vmatprep.subr.bf16.mxu0 0
      %5233 = vmatpush2.bf16.msra.mxu0 0
      %5234 = vmatprep.subr.bf16.mxu0 0
      %5235 = vmatpush2.bf16.msra.mxu0 0
      %5236 = vmatprep.subr.bf16.mxu0 0
      %5237 = vmatpush2.bf16.msra.mxu0 0
      %5238 = vmatprep.subr.bf16.mxu0 0
      %5239 = vmatpush2.bf16.msra.mxu0 0
      %5240 = vmatprep.mubr.bf16.mxu0 0
      %5241 = vmatmul.mubr.bf16.gmra.mxu0 %v4371
      %v5242 = vpop.f32.mrf.mxu0
      %v5243 = vadd.f32 0.0, %v5242
      %v5244 = vpop.f32.mrf.mxu0
      %v5245 = vpop.f32.mrf.mxu0
      %v5246 = vadd.f32 0.0, %v5245
      %v5247 = vpop.f32.mrf.mxu0
      %5248 = vmatprep.mubr.bf16.mxu0 0
      %5249 = vmatmul.mubr.bf16.gmra.mxu0 %v4372
      %v5250 = vpop.f32.mrf.mxu0
      %v5251 = vadd.f32 0.0, %v5250
      %v5252 = vpop.f32.mrf.mxu0
      %v5253 = vpop.f32.mrf.mxu0
      %v5254 = vadd.f32 0.0, %v5253
      %v5255 = vpop.f32.mrf.mxu0
      %5256 = vmatprep.mubr.bf16.mxu0 0
      %5257 = vmatmul.mubr.bf16.gmra.mxu0 %v4373
      %v5258 = vpop.f32.mrf.mxu0
      %v5259 = vadd.f32 0.0, %v5258
      %v5260 = vpop.f32.mrf.mxu0
      %v5261 = vpop.f32.mrf.mxu0
      %v5262 = vadd.f32 0.0, %v5261
      %v5263 = vpop.f32.mrf.mxu0
      %5264 = vmatprep.mubr.bf16.mxu0 0
      %5265 = vmatmul.mubr.bf16.gmra.mxu0 %v4374
      %v5266 = vpop.f32.mrf.mxu0
      %v5267 = vadd.f32 0.0, %v5266
      %v5268 = vpop.f32.mrf.mxu0
      %v5269 = vpop.f32.mrf.mxu0
      %v5270 = vadd.f32 0.0, %v5269
      %v5271 = vpop.f32.mrf.mxu0
      %5272 = vmatprep.mubr.bf16.mxu0 0
      %5273 = vmatmul.mubr.bf16.gmra.mxu0 %v4375
      %v5274 = vpop.f32.mrf.mxu0
      %v5275 = vadd.f32 0.0, %v5274
      %v5276 = vpop.f32.mrf.mxu0
      %v5277 = vpop.f32.mrf.mxu0
      %v5278 = vadd.f32 0.0, %v5277
      %v5279 = vpop.f32.mrf.mxu0
      %5280 = vmatprep.mubr.bf16.mxu0 0
      %5281 = vmatmul.mubr.bf16.gmra.mxu0 %v4376
      %v5282 = vpop.f32.mrf.mxu0
      %v5283 = vadd.f32 0.0, %v5282
      %v5284 = vpop.f32.mrf.mxu0
      %v5285 = vpop.f32.mrf.mxu0
      %v5286 = vadd.f32 0.0, %v5285
      %v5287 = vpop.f32.mrf.mxu0
      %5288 = vmatprep.mubr.bf16.mxu0 0
      %5289 = vmatmul.mubr.bf16.gmra.mxu0 %v4377
      %v5290 = vpop.f32.mrf.mxu0
      %v5291 = vadd.f32 0.0, %v5290
      %v5292 = vpop.f32.mrf.mxu0
      %v5293 = vpop.f32.mrf.mxu0
      %v5294 = vadd.f32 0.0, %v5293
      %v5295 = vpop.f32.mrf.mxu0
      %5296 = vmatprep.mubr.bf16.mxu0 0
      %5297 = vmatmul.mubr.bf16.gmra.mxu0 %v4378
      %v5298 = vpop.f32.mrf.mxu0
      %v5299 = vadd.f32 0.0, %v5298
      %v5300 = vpop.f32.mrf.mxu0
      %v5301 = vpop.f32.mrf.mxu0
      %v5302 = vadd.f32 0.0, %v5301
      %v5303 = vpop.f32.mrf.mxu0
      %5304 = vmatprep.mubr.bf16.mxu0 0
      %5305 = vmatmul.mubr.bf16.gmra.mxu0 %v4379
      %v5306 = vpop.f32.mrf.mxu0
      %v5307 = vadd.f32 0.0, %v5306
      %v5308 = vpop.f32.mrf.mxu0
      %v5309 = vpop.f32.mrf.mxu0
      %v5310 = vadd.f32 0.0, %v5309
      %v5311 = vpop.f32.mrf.mxu0
      %5312 = vmatprep.mubr.bf16.mxu0 0
      %5313 = vmatmul.mubr.bf16.gmra.mxu0 %v4380
      %v5314 = vpop.f32.mrf.mxu0
      %v5315 = vadd.f32 0.0, %v5314
      %v5316 = vpop.f32.mrf.mxu0
      %v5317 = vpop.f32.mrf.mxu0
      %v5318 = vadd.f32 0.0, %v5317
      %v5319 = vpop.f32.mrf.mxu0
      %5320 = vmatprep.mubr.bf16.mxu0 0
      %5321 = vmatmul.mubr.bf16.gmra.mxu0 %v4381
      %v5322 = vpop.f32.mrf.mxu0
      %v5323 = vadd.f32 0.0, %v5322
      %v5324 = vpop.f32.mrf.mxu0
      %v5325 = vpop.f32.mrf.mxu0
      %v5326 = vadd.f32 0.0, %v5325
      %v5327 = vpop.f32.mrf.mxu0
      %5328 = vmatprep.mubr.bf16.mxu0 0
      %5329 = vmatmul.mubr.bf16.gmra.mxu0 %v4382
      %v5330 = vpop.f32.mrf.mxu0
      %v5331 = vadd.f32 0.0, %v5330
      %v5332 = vpop.f32.mrf.mxu0
      %v5333 = vpop.f32.mrf.mxu0
      %v5334 = vadd.f32 0.0, %v5333
      %v5335 = vpop.f32.mrf.mxu0
      %5336 = vdwg.mxu0
      %v5337 = vadd.f32 %v5119, %v5243
      %v5338 = vadd.f32 %v5120, %v5246
      %v5339 = vadd.f32 %v5121, %v5251
      %v5340 = vadd.f32 %v5122, %v5254
      %v5341 = vadd.f32 %v5123, %v5259
      %v5342 = vadd.f32 %v5124, %v5262
      %v5343 = vadd.f32 %v5125, %v5267
      %v5344 = vadd.f32 %v5126, %v5270
      %v5345 = vadd.f32 %v5127, %v5275
      %v5346 = vadd.f32 %v5128, %v5278
      %v5347 = vadd.f32 %v5129, %v5283
      %v5348 = vadd.f32 %v5130, %v5286
      %v5349 = vadd.f32 %v5131, %v5291
      %v5350 = vadd.f32 %v5132, %v5294
      %v5351 = vadd.f32 %v5133, %v5299
      %v5352 = vadd.f32 %v5134, %v5302
      %v5353 = vadd.f32 %v5135, %v5307
      %v5354 = vadd.f32 %v5136, %v5310
      %v5355 = vadd.f32 %v5137, %v5315
      %v5356 = vadd.f32 %v5138, %v5318
      %v5357 = vadd.f32 %v5139, %v5323
      %v5358 = vadd.f32 %v5140, %v5326
      %v5359 = vadd.f32 %v5141, %v5331
      %v5360 = vadd.f32 %v5142, %v5334
      %s5361 = scalar_lea.vmem %s5, 256
      %v5362 = vld [vmem:[%s5361] sm:$0xf]
      %v5363 = vld [vmem:[%s5361 + $0x4] sm:$0xf]
      %v5364 = vld [vmem:[%s5361 + $0x8] sm:$0xf]
      %v5365 = vld [vmem:[%s5361 + $0xc] sm:$0xf]
      %v5366 = vld [vmem:[%s5361 + $0x10] sm:$0xf]
      %v5367 = vld [vmem:[%s5361 + $0x14] sm:$0xf]
      %v5368 = vld [vmem:[%s5361 + $0x18] sm:$0xf]
      %v5369 = vld [vmem:[%s5361 + $0x1c] sm:$0xf]
      %v5370 = vld [vmem:[%s5361 + $0x20] sm:$0xf]
      %v5371 = vld [vmem:[%s5361 + $0x24] sm:$0xf]
      %v5372 = vld [vmem:[%s5361 + $0x28] sm:$0xf]
      %v5373 = vld [vmem:[%s5361 + $0x2c] sm:$0xf]
      %v5374 = vld [vmem:[%s5361 + $0x30] sm:$0xf]
      %v5375 = vld [vmem:[%s5361 + $0x34] sm:$0xf]
      %v5376 = vld [vmem:[%s5361 + $0x38] sm:$0xf]
      %v5377 = vld [vmem:[%s5361 + $0x3c] sm:$0xf]
      %v5379 = vshll.u32 %v4382, 16
      %v5381 = vrot.slane %v5379, 1
      %v5382 = vsel %vm1321, %v4511, %v5381
      %v5383 = vshrl.u32 %v4382, 16
      %v5385 = vor.u32 %v5383, %v5381
      %v5404 = vunpack.c.l.b16 %v5362
      %v5405 = vunpack.c.l.b16 %v5363
      %v5406 = vunpack.c.l.b16 %v5364
      %v5407 = vunpack.c.l.b16 %v5365
      %v5408 = vunpack.c.l.b16 %v5366
      %v5409 = vunpack.c.l.b16 %v5367
      %v5410 = vunpack.c.l.b16 %v5368
      %v5411 = vunpack.c.l.b16 %v5369
      %v5412 = vunpack.c.l.b16 %v5370
      %v5413 = vunpack.c.l.b16 %v5371
      %v5414 = vunpack.c.l.b16 %v5372
      %v5415 = vunpack.c.l.b16 %v5373
      %v5416 = vunpack.c.l.b16 %v5374
      %v5417 = vunpack.c.l.b16 %v5375
      %v5418 = vunpack.c.l.b16 %v5376
      %v5419 = vunpack.c.l.b16 %v5377
      %v5420 = vpack.c.b16 %v5405, %v5404
      %v5421 = vpack.c.b16 %v5407, %v5406
      %v5422 = vpack.c.b16 %v5409, %v5408
      %v5423 = vpack.c.b16 %v5411, %v5410
      %v5424 = vpack.c.b16 %v5413, %v5412
      %v5425 = vpack.c.b16 %v5415, %v5414
      %v5426 = vpack.c.b16 %v5417, %v5416
      %v5427 = vpack.c.b16 %v5419, %v5418
      %5436 = vmatprep.subr.bf16.mxu0 0
      %5437 = vmatpush1.bf16.msra.mxu0 %v5427
      %5438 = vmatprep.subr.bf16.mxu0 0
      %5439 = vmatpush1.bf16.msra.mxu0 %v5426
      %5440 = vmatprep.subr.bf16.mxu0 0
      %5441 = vmatpush1.bf16.msra.mxu0 %v5425
      %5442 = vmatprep.subr.bf16.mxu0 0
      %5443 = vmatpush1.bf16.msra.mxu0 %v5424
      %5444 = vmatprep.subr.bf16.mxu0 0
      %5445 = vmatpush1.bf16.msra.mxu0 %v5423
      %5446 = vmatprep.subr.bf16.mxu0 0
      %5447 = vmatpush1.bf16.msra.mxu0 %v5422
      %5448 = vmatprep.subr.bf16.mxu0 0
      %5449 = vmatpush1.bf16.msra.mxu0 %v5421
      %5450 = vmatprep.subr.bf16.mxu0 0
      %5451 = vmatpush1.bf16.msra.mxu0 %v5420
      %5452 = vmatprep.subr.bf16.mxu0 0
      %5453 = vmatpush2.bf16.msra.mxu0 0
      %5454 = vmatprep.subr.bf16.mxu0 0
      %5455 = vmatpush2.bf16.msra.mxu0 0
      %5456 = vmatprep.subr.bf16.mxu0 0
      %5457 = vmatpush2.bf16.msra.mxu0 0
      %5458 = vmatprep.subr.bf16.mxu0 0
      %5459 = vmatpush2.bf16.msra.mxu0 0
      %5460 = vmatprep.subr.bf16.mxu0 0
      %5461 = vmatpush2.bf16.msra.mxu0 0
      %5462 = vmatprep.subr.bf16.mxu0 0
      %5463 = vmatpush2.bf16.msra.mxu0 0
      %5464 = vmatprep.subr.bf16.mxu0 0
      %5465 = vmatpush2.bf16.msra.mxu0 0
      %5466 = vmatprep.subr.bf16.mxu0 0
      %5467 = vmatpush2.bf16.msra.mxu0 0
      %5468 = vmatprep.mubr.bf16.mxu0 0
      %5469 = vmatmul.mubr.bf16.gmra.mxu0 %v4436
      %v5470 = vpop.f32.mrf.mxu0
      %v5471 = vadd.f32 0.0, %v5470
      %v5472 = vpop.f32.mrf.mxu0
      %v5473 = vpop.f32.mrf.mxu0
      %v5474 = vadd.f32 0.0, %v5473
      %v5475 = vpop.f32.mrf.mxu0
      %5476 = vmatprep.mubr.bf16.mxu0 0
      %5477 = vmatmul.mubr.bf16.gmra.mxu0 %v4444
      %v5478 = vpop.f32.mrf.mxu0
      %v5479 = vadd.f32 0.0, %v5478
      %v5480 = vpop.f32.mrf.mxu0
      %v5481 = vpop.f32.mrf.mxu0
      %v5482 = vadd.f32 0.0, %v5481
      %v5483 = vpop.f32.mrf.mxu0
      %5484 = vmatprep.mubr.bf16.mxu0 0
      %5485 = vmatmul.mubr.bf16.gmra.mxu0 %v4452
      %v5486 = vpop.f32.mrf.mxu0
      %v5487 = vadd.f32 0.0, %v5486
      %v5488 = vpop.f32.mrf.mxu0
      %v5489 = vpop.f32.mrf.mxu0
      %v5490 = vadd.f32 0.0, %v5489
      %v5491 = vpop.f32.mrf.mxu0
      %5492 = vmatprep.mubr.bf16.mxu0 0
      %5493 = vmatmul.mubr.bf16.gmra.mxu0 %v4460
      %v5494 = vpop.f32.mrf.mxu0
      %v5495 = vadd.f32 0.0, %v5494
      %v5496 = vpop.f32.mrf.mxu0
      %v5497 = vpop.f32.mrf.mxu0
      %v5498 = vadd.f32 0.0, %v5497
      %v5499 = vpop.f32.mrf.mxu0
      %5500 = vmatprep.mubr.bf16.mxu0 0
      %5501 = vmatmul.mubr.bf16.gmra.mxu0 %v4468
      %v5502 = vpop.f32.mrf.mxu0
      %v5503 = vadd.f32 0.0, %v5502
      %v5504 = vpop.f32.mrf.mxu0
      %v5505 = vpop.f32.mrf.mxu0
      %v5506 = vadd.f32 0.0, %v5505
      %v5507 = vpop.f32.mrf.mxu0
      %5508 = vmatprep.mubr.bf16.mxu0 0
      %5509 = vmatmul.mubr.bf16.gmra.mxu0 %v4476
      %v5510 = vpop.f32.mrf.mxu0
      %v5511 = vadd.f32 0.0, %v5510
      %v5512 = vpop.f32.mrf.mxu0
      %v5513 = vpop.f32.mrf.mxu0
      %v5514 = vadd.f32 0.0, %v5513
      %v5515 = vpop.f32.mrf.mxu0
      %5516 = vmatprep.mubr.bf16.mxu0 0
      %5517 = vmatmul.mubr.bf16.gmra.mxu0 %v4484
      %v5518 = vpop.f32.mrf.mxu0
      %v5519 = vadd.f32 0.0, %v5518
      %v5520 = vpop.f32.mrf.mxu0
      %v5521 = vpop.f32.mrf.mxu0
      %v5522 = vadd.f32 0.0, %v5521
      %v5523 = vpop.f32.mrf.mxu0
      %5524 = vmatprep.mubr.bf16.mxu0 0
      %5525 = vmatmul.mubr.bf16.gmra.mxu0 %v4492
      %v5526 = vpop.f32.mrf.mxu0
      %v5527 = vadd.f32 0.0, %v5526
      %v5528 = vpop.f32.mrf.mxu0
      %v5529 = vpop.f32.mrf.mxu0
      %v5530 = vadd.f32 0.0, %v5529
      %v5531 = vpop.f32.mrf.mxu0
      %5532 = vmatprep.mubr.bf16.mxu0 0
      %5533 = vmatmul.mubr.bf16.gmra.mxu0 %v4500
      %v5534 = vpop.f32.mrf.mxu0
      %v5535 = vadd.f32 0.0, %v5534
      %v5536 = vpop.f32.mrf.mxu0
      %v5537 = vpop.f32.mrf.mxu0
      %v5538 = vadd.f32 0.0, %v5537
      %v5539 = vpop.f32.mrf.mxu0
      %5540 = vmatprep.mubr.bf16.mxu0 0
      %5541 = vmatmul.mubr.bf16.gmra.mxu0 %v4508
      %v5542 = vpop.f32.mrf.mxu0
      %v5543 = vadd.f32 0.0, %v5542
      %v5544 = vpop.f32.mrf.mxu0
      %v5545 = vpop.f32.mrf.mxu0
      %v5546 = vadd.f32 0.0, %v5545
      %v5547 = vpop.f32.mrf.mxu0
      %5548 = vmatprep.mubr.bf16.mxu0 0
      %5549 = vmatmul.mubr.bf16.gmra.mxu0 %v5382
      %v5550 = vpop.f32.mrf.mxu0
      %v5551 = vadd.f32 0.0, %v5550
      %v5552 = vpop.f32.mrf.mxu0
      %v5553 = vpop.f32.mrf.mxu0
      %v5554 = vadd.f32 0.0, %v5553
      %v5555 = vpop.f32.mrf.mxu0
      %5556 = vmatprep.mubr.bf16.mxu0 0
      %5557 = vmatmul.mubr.bf16.gmra.mxu0 %v5385
      %v5558 = vpop.f32.mrf.mxu0
      %v5559 = vadd.f32 0.0, %v5558
      %v5560 = vpop.f32.mrf.mxu0
      %v5561 = vpop.f32.mrf.mxu0
      %v5562 = vadd.f32 0.0, %v5561
      %v5563 = vpop.f32.mrf.mxu0
      %5564 = vdwg.mxu0
      %v5565 = vadd.f32 %v5337, %v5471
      %v5566 = vadd.f32 %v5338, %v5474
      %v5567 = vadd.f32 %v5339, %v5479
      %v5568 = vadd.f32 %v5340, %v5482
      %v5569 = vadd.f32 %v5341, %v5487
      %v5570 = vadd.f32 %v5342, %v5490
      %v5571 = vadd.f32 %v5343, %v5495
      %v5572 = vadd.f32 %v5344, %v5498
      %v5573 = vadd.f32 %v5345, %v5503
      %v5574 = vadd.f32 %v5346, %v5506
      %v5575 = vadd.f32 %v5347, %v5511
      %v5576 = vadd.f32 %v5348, %v5514
      %v5577 = vadd.f32 %v5349, %v5519
      %v5578 = vadd.f32 %v5350, %v5522
      %v5579 = vadd.f32 %v5351, %v5527
      %v5580 = vadd.f32 %v5352, %v5530
      %v5581 = vadd.f32 %v5353, %v5535
      %v5582 = vadd.f32 %v5354, %v5538
      %v5583 = vadd.f32 %v5355, %v5543
      %v5584 = vadd.f32 %v5356, %v5546
      %v5585 = vadd.f32 %v5357, %v5551
      %v5586 = vadd.f32 %v5358, %v5554
      %v5587 = vadd.f32 %v5359, %v5559
      %v5588 = vadd.f32 %v5360, %v5562
      %s5589 = scalar_lea.vmem %s5, 320
      %v5590 = vld [vmem:[%s5589] sm:$0xf]
      %v5591 = vld [vmem:[%s5589 + $0x4] sm:$0xf]
      %v5592 = vld [vmem:[%s5589 + $0x8] sm:$0xf]
      %v5593 = vld [vmem:[%s5589 + $0xc] sm:$0xf]
      %v5594 = vld [vmem:[%s5589 + $0x10] sm:$0xf]
      %v5595 = vld [vmem:[%s5589 + $0x14] sm:$0xf]
      %v5596 = vld [vmem:[%s5589 + $0x18] sm:$0xf]
      %v5597 = vld [vmem:[%s5589 + $0x1c] sm:$0xf]
      %v5598 = vld [vmem:[%s5589 + $0x20] sm:$0xf]
      %v5599 = vld [vmem:[%s5589 + $0x24] sm:$0xf]
      %v5600 = vld [vmem:[%s5589 + $0x28] sm:$0xf]
      %v5601 = vld [vmem:[%s5589 + $0x2c] sm:$0xf]
      %v5602 = vld [vmem:[%s5589 + $0x30] sm:$0xf]
      %v5603 = vld [vmem:[%s5589 + $0x34] sm:$0xf]
      %v5604 = vld [vmem:[%s5589 + $0x38] sm:$0xf]
      %v5605 = vld [vmem:[%s5589 + $0x3c] sm:$0xf]
      %v5607 = vrot.slane %v4382, 1
      %v5608 = vsel %vm2087, %v4928, %v5607
      %v5627 = vunpack.c.l.b16 %v5590
      %v5628 = vunpack.c.l.b16 %v5591
      %v5629 = vunpack.c.l.b16 %v5592
      %v5630 = vunpack.c.l.b16 %v5593
      %v5631 = vunpack.c.l.b16 %v5594
      %v5632 = vunpack.c.l.b16 %v5595
      %v5633 = vunpack.c.l.b16 %v5596
      %v5634 = vunpack.c.l.b16 %v5597
      %v5635 = vunpack.c.l.b16 %v5598
      %v5636 = vunpack.c.l.b16 %v5599
      %v5637 = vunpack.c.l.b16 %v5600
      %v5638 = vunpack.c.l.b16 %v5601
      %v5639 = vunpack.c.l.b16 %v5602
      %v5640 = vunpack.c.l.b16 %v5603
      %v5641 = vunpack.c.l.b16 %v5604
      %v5642 = vunpack.c.l.b16 %v5605
      %v5643 = vpack.c.b16 %v5628, %v5627
      %v5644 = vpack.c.b16 %v5630, %v5629
      %v5645 = vpack.c.b16 %v5632, %v5631
      %v5646 = vpack.c.b16 %v5634, %v5633
      %v5647 = vpack.c.b16 %v5636, %v5635
      %v5648 = vpack.c.b16 %v5638, %v5637
      %v5649 = vpack.c.b16 %v5640, %v5639
      %v5650 = vpack.c.b16 %v5642, %v5641
      %5659 = vmatprep.subr.bf16.mxu0 0
      %5660 = vmatpush1.bf16.msra.mxu0 %v5650
      %5661 = vmatprep.subr.bf16.mxu0 0
      %5662 = vmatpush1.bf16.msra.mxu0 %v5649
      %5663 = vmatprep.subr.bf16.mxu0 0
      %5664 = vmatpush1.bf16.msra.mxu0 %v5648
      %5665 = vmatprep.subr.bf16.mxu0 0
      %5666 = vmatpush1.bf16.msra.mxu0 %v5647
      %5667 = vmatprep.subr.bf16.mxu0 0
      %5668 = vmatpush1.bf16.msra.mxu0 %v5646
      %5669 = vmatprep.subr.bf16.mxu0 0
      %5670 = vmatpush1.bf16.msra.mxu0 %v5645
      %5671 = vmatprep.subr.bf16.mxu0 0
      %5672 = vmatpush1.bf16.msra.mxu0 %v5644
      %5673 = vmatprep.subr.bf16.mxu0 0
      %5674 = vmatpush1.bf16.msra.mxu0 %v5643
      %5675 = vmatprep.subr.bf16.mxu0 0
      %5676 = vmatpush2.bf16.msra.mxu0 0
      %5677 = vmatprep.subr.bf16.mxu0 0
      %5678 = vmatpush2.bf16.msra.mxu0 0
      %5679 = vmatprep.subr.bf16.mxu0 0
      %5680 = vmatpush2.bf16.msra.mxu0 0
      %5681 = vmatprep.subr.bf16.mxu0 0
      %5682 = vmatpush2.bf16.msra.mxu0 0
      %5683 = vmatprep.subr.bf16.mxu0 0
      %5684 = vmatpush2.bf16.msra.mxu0 0
      %5685 = vmatprep.subr.bf16.mxu0 0
      %5686 = vmatpush2.bf16.msra.mxu0 0
      %5687 = vmatprep.subr.bf16.mxu0 0
      %5688 = vmatpush2.bf16.msra.mxu0 0
      %5689 = vmatprep.subr.bf16.mxu0 0
      %5690 = vmatpush2.bf16.msra.mxu0 0
      %5691 = vmatprep.mubr.bf16.mxu0 0
      %5692 = vmatmul.mubr.bf16.gmra.mxu0 %v4911
      %v5693 = vpop.f32.mrf.mxu0
      %v5694 = vadd.f32 0.0, %v5693
      %v5695 = vpop.f32.mrf.mxu0
      %v5696 = vpop.f32.mrf.mxu0
      %v5697 = vadd.f32 0.0, %v5696
      %v5698 = vpop.f32.mrf.mxu0
      %5699 = vmatprep.mubr.bf16.mxu0 0
      %5700 = vmatmul.mubr.bf16.gmra.mxu0 %v4913
      %v5701 = vpop.f32.mrf.mxu0
      %v5702 = vadd.f32 0.0, %v5701
      %v5703 = vpop.f32.mrf.mxu0
      %v5704 = vpop.f32.mrf.mxu0
      %v5705 = vadd.f32 0.0, %v5704
      %v5706 = vpop.f32.mrf.mxu0
      %5707 = vmatprep.mubr.bf16.mxu0 0
      %5708 = vmatmul.mubr.bf16.gmra.mxu0 %v4915
      %v5709 = vpop.f32.mrf.mxu0
      %v5710 = vadd.f32 0.0, %v5709
      %v5711 = vpop.f32.mrf.mxu0
      %v5712 = vpop.f32.mrf.mxu0
      %v5713 = vadd.f32 0.0, %v5712
      %v5714 = vpop.f32.mrf.mxu0
      %5715 = vmatprep.mubr.bf16.mxu0 0
      %5716 = vmatmul.mubr.bf16.gmra.mxu0 %v4917
      %v5717 = vpop.f32.mrf.mxu0
      %v5718 = vadd.f32 0.0, %v5717
      %v5719 = vpop.f32.mrf.mxu0
      %v5720 = vpop.f32.mrf.mxu0
      %v5721 = vadd.f32 0.0, %v5720
      %v5722 = vpop.f32.mrf.mxu0
      %5723 = vmatprep.mubr.bf16.mxu0 0
      %5724 = vmatmul.mubr.bf16.gmra.mxu0 %v4919
      %v5725 = vpop.f32.mrf.mxu0
      %v5726 = vadd.f32 0.0, %v5725
      %v5727 = vpop.f32.mrf.mxu0
      %v5728 = vpop.f32.mrf.mxu0
      %v5729 = vadd.f32 0.0, %v5728
      %v5730 = vpop.f32.mrf.mxu0
      %5731 = vmatprep.mubr.bf16.mxu0 0
      %5732 = vmatmul.mubr.bf16.gmra.mxu0 %v4921
      %v5733 = vpop.f32.mrf.mxu0
      %v5734 = vadd.f32 0.0, %v5733
      %v5735 = vpop.f32.mrf.mxu0
      %v5736 = vpop.f32.mrf.mxu0
      %v5737 = vadd.f32 0.0, %v5736
      %v5738 = vpop.f32.mrf.mxu0
      %5739 = vmatprep.mubr.bf16.mxu0 0
      %5740 = vmatmul.mubr.bf16.gmra.mxu0 %v4923
      %v5741 = vpop.f32.mrf.mxu0
      %v5742 = vadd.f32 0.0, %v5741
      %v5743 = vpop.f32.mrf.mxu0
      %v5744 = vpop.f32.mrf.mxu0
      %v5745 = vadd.f32 0.0, %v5744
      %v5746 = vpop.f32.mrf.mxu0
      %5747 = vmatprep.mubr.bf16.mxu0 0
      %5748 = vmatmul.mubr.bf16.gmra.mxu0 %v4925
      %v5749 = vpop.f32.mrf.mxu0
      %v5750 = vadd.f32 0.0, %v5749
      %v5751 = vpop.f32.mrf.mxu0
      %v5752 = vpop.f32.mrf.mxu0
      %v5753 = vadd.f32 0.0, %v5752
      %v5754 = vpop.f32.mrf.mxu0
      %5755 = vmatprep.mubr.bf16.mxu0 0
      %5756 = vmatmul.mubr.bf16.gmra.mxu0 %v4927
      %v5757 = vpop.f32.mrf.mxu0
      %v5758 = vadd.f32 0.0, %v5757
      %v5759 = vpop.f32.mrf.mxu0
      %v5760 = vpop.f32.mrf.mxu0
      %v5761 = vadd.f32 0.0, %v5760
      %v5762 = vpop.f32.mrf.mxu0
      %5763 = vmatprep.mubr.bf16.mxu0 0
      %5764 = vmatmul.mubr.bf16.gmra.mxu0 %v4929
      %v5765 = vpop.f32.mrf.mxu0
      %v5766 = vadd.f32 0.0, %v5765
      %v5767 = vpop.f32.mrf.mxu0
      %v5768 = vpop.f32.mrf.mxu0
      %v5769 = vadd.f32 0.0, %v5768
      %v5770 = vpop.f32.mrf.mxu0
      %5771 = vmatprep.mubr.bf16.mxu0 0
      %5772 = vmatmul.mubr.bf16.gmra.mxu0 %v5608
      %v5773 = vpop.f32.mrf.mxu0
      %v5774 = vadd.f32 0.0, %v5773
      %v5775 = vpop.f32.mrf.mxu0
      %v5776 = vpop.f32.mrf.mxu0
      %v5777 = vadd.f32 0.0, %v5776
      %v5778 = vpop.f32.mrf.mxu0
      %5779 = vmatprep.mubr.bf16.mxu0 0
      %5780 = vmatmul.mubr.bf16.gmra.mxu0 %v5607
      %v5781 = vpop.f32.mrf.mxu0
      %v5782 = vadd.f32 0.0, %v5781
      %v5783 = vpop.f32.mrf.mxu0
      %v5784 = vpop.f32.mrf.mxu0
      %v5785 = vadd.f32 0.0, %v5784
      %v5786 = vpop.f32.mrf.mxu0
      %5787 = vdwg.mxu0
      %v5788 = vadd.f32 %v5565, %v5694
      %v5789 = vadd.f32 %v5566, %v5697
      %v5790 = vadd.f32 %v5567, %v5702
      %v5791 = vadd.f32 %v5568, %v5705
      %v5792 = vadd.f32 %v5569, %v5710
      %v5793 = vadd.f32 %v5570, %v5713
      %v5794 = vadd.f32 %v5571, %v5718
      %v5795 = vadd.f32 %v5572, %v5721
      %v5796 = vadd.f32 %v5573, %v5726
      %v5797 = vadd.f32 %v5574, %v5729
      %v5798 = vadd.f32 %v5575, %v5734
      %v5799 = vadd.f32 %v5576, %v5737
      %v5800 = vadd.f32 %v5577, %v5742
      %v5801 = vadd.f32 %v5578, %v5745
      %v5802 = vadd.f32 %v5579, %v5750
      %v5803 = vadd.f32 %v5580, %v5753
      %v5804 = vadd.f32 %v5581, %v5758
      %v5805 = vadd.f32 %v5582, %v5761
      %v5806 = vadd.f32 %v5583, %v5766
      %v5807 = vadd.f32 %v5584, %v5769
      %v5808 = vadd.f32 %v5585, %v5774
      %v5809 = vadd.f32 %v5586, %v5777
      %v5810 = vadd.f32 %v5587, %v5782
      %v5811 = vadd.f32 %v5588, %v5785
      %s5812 = scalar_lea.vmem %s5, 384
      %v5813 = vld [vmem:[%s5812] sm:$0xf]
      %v5814 = vld [vmem:[%s5812 + $0x4] sm:$0xf]
      %v5815 = vld [vmem:[%s5812 + $0x8] sm:$0xf]
      %v5816 = vld [vmem:[%s5812 + $0xc] sm:$0xf]
      %v5817 = vld [vmem:[%s5812 + $0x10] sm:$0xf]
      %v5818 = vld [vmem:[%s5812 + $0x14] sm:$0xf]
      %v5819 = vld [vmem:[%s5812 + $0x18] sm:$0xf]
      %v5820 = vld [vmem:[%s5812 + $0x1c] sm:$0xf]
      %v5821 = vld [vmem:[%s5812 + $0x20] sm:$0xf]
      %v5822 = vld [vmem:[%s5812 + $0x24] sm:$0xf]
      %v5823 = vld [vmem:[%s5812 + $0x28] sm:$0xf]
      %v5824 = vld [vmem:[%s5812 + $0x2c] sm:$0xf]
      %v5825 = vld [vmem:[%s5812 + $0x30] sm:$0xf]
      %v5826 = vld [vmem:[%s5812 + $0x34] sm:$0xf]
      %v5827 = vld [vmem:[%s5812 + $0x38] sm:$0xf]
      %v5828 = vld [vmem:[%s5812 + $0x3c] sm:$0xf]
      %v5845 = vunpack.c.l.b16 %v5813
      %v5846 = vunpack.c.l.b16 %v5814
      %v5847 = vunpack.c.l.b16 %v5815
      %v5848 = vunpack.c.l.b16 %v5816
      %v5849 = vunpack.c.l.b16 %v5817
      %v5850 = vunpack.c.l.b16 %v5818
      %v5851 = vunpack.c.l.b16 %v5819
      %v5852 = vunpack.c.l.b16 %v5820
      %v5853 = vunpack.c.l.b16 %v5821
      %v5854 = vunpack.c.l.b16 %v5822
      %v5855 = vunpack.c.l.b16 %v5823
      %v5856 = vunpack.c.l.b16 %v5824
      %v5857 = vunpack.c.l.b16 %v5825
      %v5858 = vunpack.c.l.b16 %v5826
      %v5859 = vunpack.c.l.b16 %v5827
      %v5860 = vunpack.c.l.b16 %v5828
      %v5861 = vpack.c.b16 %v5846, %v5845
      %v5862 = vpack.c.b16 %v5848, %v5847
      %v5863 = vpack.c.b16 %v5850, %v5849
      %v5864 = vpack.c.b16 %v5852, %v5851
      %v5865 = vpack.c.b16 %v5854, %v5853
      %v5866 = vpack.c.b16 %v5856, %v5855
      %v5867 = vpack.c.b16 %v5858, %v5857
      %v5868 = vpack.c.b16 %v5860, %v5859
      %5877 = vmatprep.subr.bf16.mxu0 0
      %5878 = vmatpush1.bf16.msra.mxu0 %v5868
      %5879 = vmatprep.subr.bf16.mxu0 0
      %5880 = vmatpush1.bf16.msra.mxu0 %v5867
      %5881 = vmatprep.subr.bf16.mxu0 0
      %5882 = vmatpush1.bf16.msra.mxu0 %v5866
      %5883 = vmatprep.subr.bf16.mxu0 0
      %5884 = vmatpush1.bf16.msra.mxu0 %v5865
      %5885 = vmatprep.subr.bf16.mxu0 0
      %5886 = vmatpush1.bf16.msra.mxu0 %v5864
      %5887 = vmatprep.subr.bf16.mxu0 0
      %5888 = vmatpush1.bf16.msra.mxu0 %v5863
      %5889 = vmatprep.subr.bf16.mxu0 0
      %5890 = vmatpush1.bf16.msra.mxu0 %v5862
      %5891 = vmatprep.subr.bf16.mxu0 0
      %5892 = vmatpush1.bf16.msra.mxu0 %v5861
      %5893 = vmatprep.subr.bf16.mxu0 0
      %5894 = vmatpush2.bf16.msra.mxu0 0
      %5895 = vmatprep.subr.bf16.mxu0 0
      %5896 = vmatpush2.bf16.msra.mxu0 0
      %5897 = vmatprep.subr.bf16.mxu0 0
      %5898 = vmatpush2.bf16.msra.mxu0 0
      %5899 = vmatprep.subr.bf16.mxu0 0
      %5900 = vmatpush2.bf16.msra.mxu0 0
      %5901 = vmatprep.subr.bf16.mxu0 0
      %5902 = vmatpush2.bf16.msra.mxu0 0
      %5903 = vmatprep.subr.bf16.mxu0 0
      %5904 = vmatpush2.bf16.msra.mxu0 0
      %5905 = vmatprep.subr.bf16.mxu0 0
      %5906 = vmatpush2.bf16.msra.mxu0 0
      %5907 = vmatprep.subr.bf16.mxu0 0
      %5908 = vmatpush2.bf16.msra.mxu0 0
      %5909 = vmatprep.mubr.bf16.mxu0 0
      %5910 = vmatmul.mubr.bf16.gmra.mxu0 %v4372
      %v5911 = vpop.f32.mrf.mxu0
      %v5912 = vadd.f32 0.0, %v5911
      %v5913 = vpop.f32.mrf.mxu0
      %v5914 = vpop.f32.mrf.mxu0
      %v5915 = vadd.f32 0.0, %v5914
      %v5916 = vpop.f32.mrf.mxu0
      %5917 = vmatprep.mubr.bf16.mxu0 0
      %5918 = vmatmul.mubr.bf16.gmra.mxu0 %v4373
      %v5919 = vpop.f32.mrf.mxu0
      %v5920 = vadd.f32 0.0, %v5919
      %v5921 = vpop.f32.mrf.mxu0
      %v5922 = vpop.f32.mrf.mxu0
      %v5923 = vadd.f32 0.0, %v5922
      %v5924 = vpop.f32.mrf.mxu0
      %5925 = vmatprep.mubr.bf16.mxu0 0
      %5926 = vmatmul.mubr.bf16.gmra.mxu0 %v4374
      %v5927 = vpop.f32.mrf.mxu0
      %v5928 = vadd.f32 0.0, %v5927
      %v5929 = vpop.f32.mrf.mxu0
      %v5930 = vpop.f32.mrf.mxu0
      %v5931 = vadd.f32 0.0, %v5930
      %v5932 = vpop.f32.mrf.mxu0
      %5933 = vmatprep.mubr.bf16.mxu0 0
      %5934 = vmatmul.mubr.bf16.gmra.mxu0 %v4375
      %v5935 = vpop.f32.mrf.mxu0
      %v5936 = vadd.f32 0.0, %v5935
      %v5937 = vpop.f32.mrf.mxu0
      %v5938 = vpop.f32.mrf.mxu0
      %v5939 = vadd.f32 0.0, %v5938
      %v5940 = vpop.f32.mrf.mxu0
      %5941 = vmatprep.mubr.bf16.mxu0 0
      %5942 = vmatmul.mubr.bf16.gmra.mxu0 %v4376
      %v5943 = vpop.f32.mrf.mxu0
      %v5944 = vadd.f32 0.0, %v5943
      %v5945 = vpop.f32.mrf.mxu0
      %v5946 = vpop.f32.mrf.mxu0
      %v5947 = vadd.f32 0.0, %v5946
      %v5948 = vpop.f32.mrf.mxu0
      %5949 = vmatprep.mubr.bf16.mxu0 0
      %5950 = vmatmul.mubr.bf16.gmra.mxu0 %v4377
      %v5951 = vpop.f32.mrf.mxu0
      %v5952 = vadd.f32 0.0, %v5951
      %v5953 = vpop.f32.mrf.mxu0
      %v5954 = vpop.f32.mrf.mxu0
      %v5955 = vadd.f32 0.0, %v5954
      %v5956 = vpop.f32.mrf.mxu0
      %5957 = vmatprep.mubr.bf16.mxu0 0
      %5958 = vmatmul.mubr.bf16.gmra.mxu0 %v4378
      %v5959 = vpop.f32.mrf.mxu0
      %v5960 = vadd.f32 0.0, %v5959
      %v5961 = vpop.f32.mrf.mxu0
      %v5962 = vpop.f32.mrf.mxu0
      %v5963 = vadd.f32 0.0, %v5962
      %v5964 = vpop.f32.mrf.mxu0
      %5965 = vmatprep.mubr.bf16.mxu0 0
      %5966 = vmatmul.mubr.bf16.gmra.mxu0 %v4379
      %v5967 = vpop.f32.mrf.mxu0
      %v5968 = vadd.f32 0.0, %v5967
      %v5969 = vpop.f32.mrf.mxu0
      %v5970 = vpop.f32.mrf.mxu0
      %v5971 = vadd.f32 0.0, %v5970
      %v5972 = vpop.f32.mrf.mxu0
      %5973 = vmatprep.mubr.bf16.mxu0 0
      %5974 = vmatmul.mubr.bf16.gmra.mxu0 %v4380
      %v5975 = vpop.f32.mrf.mxu0
      %v5976 = vadd.f32 0.0, %v5975
      %v5977 = vpop.f32.mrf.mxu0
      %v5978 = vpop.f32.mrf.mxu0
      %v5979 = vadd.f32 0.0, %v5978
      %v5980 = vpop.f32.mrf.mxu0
      %5981 = vmatprep.mubr.bf16.mxu0 0
      %5982 = vmatmul.mubr.bf16.gmra.mxu0 %v4381
      %v5983 = vpop.f32.mrf.mxu0
      %v5984 = vadd.f32 0.0, %v5983
      %v5985 = vpop.f32.mrf.mxu0
      %v5986 = vpop.f32.mrf.mxu0
      %v5987 = vadd.f32 0.0, %v5986
      %v5988 = vpop.f32.mrf.mxu0
      %5989 = vmatprep.mubr.bf16.mxu0 0
      %5990 = vmatmul.mubr.bf16.gmra.mxu0 %v4382
      %v5991 = vpop.f32.mrf.mxu0
      %v5992 = vadd.f32 0.0, %v5991
      %v5993 = vpop.f32.mrf.mxu0
      %v5994 = vpop.f32.mrf.mxu0
      %v5995 = vadd.f32 0.0, %v5994
      %v5996 = vpop.f32.mrf.mxu0
      %5997 = vmatprep.mubr.bf16.mxu0 0
      %5998 = vmatmul.mubr.bf16.gmra.mxu0 %v4383
      %v5999 = vpop.f32.mrf.mxu0
      %v6000 = vadd.f32 0.0, %v5999
      %v6001 = vpop.f32.mrf.mxu0
      %v6002 = vpop.f32.mrf.mxu0
      %v6003 = vadd.f32 0.0, %v6002
      %v6004 = vpop.f32.mrf.mxu0
      %6005 = vdwg.mxu0
      %v6006 = vadd.f32 %v5788, %v5912
      %v6007 = vadd.f32 %v5789, %v5915
      %v6008 = vadd.f32 %v5790, %v5920
      %v6009 = vadd.f32 %v5791, %v5923
      %v6010 = vadd.f32 %v5792, %v5928
      %v6011 = vadd.f32 %v5793, %v5931
      %v6012 = vadd.f32 %v5794, %v5936
      %v6013 = vadd.f32 %v5795, %v5939
      %v6014 = vadd.f32 %v5796, %v5944
      %v6015 = vadd.f32 %v5797, %v5947
      %v6016 = vadd.f32 %v5798, %v5952
      %v6017 = vadd.f32 %v5799, %v5955
      %v6018 = vadd.f32 %v5800, %v5960
      %v6019 = vadd.f32 %v5801, %v5963
      %v6020 = vadd.f32 %v5802, %v5968
      %v6021 = vadd.f32 %v5803, %v5971
      %v6022 = vadd.f32 %v5804, %v5976
      %v6023 = vadd.f32 %v5805, %v5979
      %v6024 = vadd.f32 %v5806, %v5984
      %v6025 = vadd.f32 %v5807, %v5987
      %v6026 = vadd.f32 %v5808, %v5992
      %v6027 = vadd.f32 %v5809, %v5995
      %v6028 = vadd.f32 %v5810, %v6000
      %v6029 = vadd.f32 %v5811, %v6003
      %s6030 = scalar_lea.vmem %s5, 448
      %v6031 = vld [vmem:[%s6030] sm:$0xf]
      %v6032 = vld [vmem:[%s6030 + $0x4] sm:$0xf]
      %v6033 = vld [vmem:[%s6030 + $0x8] sm:$0xf]
      %v6034 = vld [vmem:[%s6030 + $0xc] sm:$0xf]
      %v6035 = vld [vmem:[%s6030 + $0x10] sm:$0xf]
      %v6036 = vld [vmem:[%s6030 + $0x14] sm:$0xf]
      %v6037 = vld [vmem:[%s6030 + $0x18] sm:$0xf]
      %v6038 = vld [vmem:[%s6030 + $0x1c] sm:$0xf]
      %v6039 = vld [vmem:[%s6030 + $0x20] sm:$0xf]
      %v6040 = vld [vmem:[%s6030 + $0x24] sm:$0xf]
      %v6041 = vld [vmem:[%s6030 + $0x28] sm:$0xf]
      %v6042 = vld [vmem:[%s6030 + $0x2c] sm:$0xf]
      %v6043 = vld [vmem:[%s6030 + $0x30] sm:$0xf]
      %v6044 = vld [vmem:[%s6030 + $0x34] sm:$0xf]
      %v6045 = vld [vmem:[%s6030 + $0x38] sm:$0xf]
      %v6046 = vld [vmem:[%s6030 + $0x3c] sm:$0xf]
      %v6048 = vshll.u32 %v4383, 16
      %v6050 = vrot.slane %v6048, 1
      %v6051 = vsel %vm1321, %v5385, %v6050
      %v6052 = vshrl.u32 %v4383, 16
      %v6054 = vor.u32 %v6052, %v6050
      %v6073 = vunpack.c.l.b16 %v6031
      %v6074 = vunpack.c.l.b16 %v6032
      %v6075 = vunpack.c.l.b16 %v6033
      %v6076 = vunpack.c.l.b16 %v6034
      %v6077 = vunpack.c.l.b16 %v6035
      %v6078 = vunpack.c.l.b16 %v6036
      %v6079 = vunpack.c.l.b16 %v6037
      %v6080 = vunpack.c.l.b16 %v6038
      %v6081 = vunpack.c.l.b16 %v6039
      %v6082 = vunpack.c.l.b16 %v6040
      %v6083 = vunpack.c.l.b16 %v6041
      %v6084 = vunpack.c.l.b16 %v6042
      %v6085 = vunpack.c.l.b16 %v6043
      %v6086 = vunpack.c.l.b16 %v6044
      %v6087 = vunpack.c.l.b16 %v6045
      %v6088 = vunpack.c.l.b16 %v6046
      %v6089 = vpack.c.b16 %v6074, %v6073
      %v6090 = vpack.c.b16 %v6076, %v6075
      %v6091 = vpack.c.b16 %v6078, %v6077
      %v6092 = vpack.c.b16 %v6080, %v6079
      %v6093 = vpack.c.b16 %v6082, %v6081
      %v6094 = vpack.c.b16 %v6084, %v6083
      %v6095 = vpack.c.b16 %v6086, %v6085
      %v6096 = vpack.c.b16 %v6088, %v6087
      %6105 = vmatprep.subr.bf16.mxu0 0
      %6106 = vmatpush1.bf16.msra.mxu0 %v6096
      %6107 = vmatprep.subr.bf16.mxu0 0
      %6108 = vmatpush1.bf16.msra.mxu0 %v6095
      %6109 = vmatprep.subr.bf16.mxu0 0
      %6110 = vmatpush1.bf16.msra.mxu0 %v6094
      %6111 = vmatprep.subr.bf16.mxu0 0
      %6112 = vmatpush1.bf16.msra.mxu0 %v6093
      %6113 = vmatprep.subr.bf16.mxu0 0
      %6114 = vmatpush1.bf16.msra.mxu0 %v6092
      %6115 = vmatprep.subr.bf16.mxu0 0
      %6116 = vmatpush1.bf16.msra.mxu0 %v6091
      %6117 = vmatprep.subr.bf16.mxu0 0
      %6118 = vmatpush1.bf16.msra.mxu0 %v6090
      %6119 = vmatprep.subr.bf16.mxu0 0
      %6120 = vmatpush1.bf16.msra.mxu0 %v6089
      %6121 = vmatprep.subr.bf16.mxu0 0
      %6122 = vmatpush2.bf16.msra.mxu0 0
      %6123 = vmatprep.subr.bf16.mxu0 0
      %6124 = vmatpush2.bf16.msra.mxu0 0
      %6125 = vmatprep.subr.bf16.mxu0 0
      %6126 = vmatpush2.bf16.msra.mxu0 0
      %6127 = vmatprep.subr.bf16.mxu0 0
      %6128 = vmatpush2.bf16.msra.mxu0 0
      %6129 = vmatprep.subr.bf16.mxu0 0
      %6130 = vmatpush2.bf16.msra.mxu0 0
      %6131 = vmatprep.subr.bf16.mxu0 0
      %6132 = vmatpush2.bf16.msra.mxu0 0
      %6133 = vmatprep.subr.bf16.mxu0 0
      %6134 = vmatpush2.bf16.msra.mxu0 0
      %6135 = vmatprep.subr.bf16.mxu0 0
      %6136 = vmatpush2.bf16.msra.mxu0 0
      %6137 = vmatprep.mubr.bf16.mxu0 0
      %6138 = vmatmul.mubr.bf16.gmra.mxu0 %v4444
      %v6139 = vpop.f32.mrf.mxu0
      %v6140 = vadd.f32 0.0, %v6139
      %v6141 = vpop.f32.mrf.mxu0
      %v6142 = vpop.f32.mrf.mxu0
      %v6143 = vadd.f32 0.0, %v6142
      %v6144 = vpop.f32.mrf.mxu0
      %6145 = vmatprep.mubr.bf16.mxu0 0
      %6146 = vmatmul.mubr.bf16.gmra.mxu0 %v4452
      %v6147 = vpop.f32.mrf.mxu0
      %v6148 = vadd.f32 0.0, %v6147
      %v6149 = vpop.f32.mrf.mxu0
      %v6150 = vpop.f32.mrf.mxu0
      %v6151 = vadd.f32 0.0, %v6150
      %v6152 = vpop.f32.mrf.mxu0
      %6153 = vmatprep.mubr.bf16.mxu0 0
      %6154 = vmatmul.mubr.bf16.gmra.mxu0 %v4460
      %v6155 = vpop.f32.mrf.mxu0
      %v6156 = vadd.f32 0.0, %v6155
      %v6157 = vpop.f32.mrf.mxu0
      %v6158 = vpop.f32.mrf.mxu0
      %v6159 = vadd.f32 0.0, %v6158
      %v6160 = vpop.f32.mrf.mxu0
      %6161 = vmatprep.mubr.bf16.mxu0 0
      %6162 = vmatmul.mubr.bf16.gmra.mxu0 %v4468
      %v6163 = vpop.f32.mrf.mxu0
      %v6164 = vadd.f32 0.0, %v6163
      %v6165 = vpop.f32.mrf.mxu0
      %v6166 = vpop.f32.mrf.mxu0
      %v6167 = vadd.f32 0.0, %v6166
      %v6168 = vpop.f32.mrf.mxu0
      %6169 = vmatprep.mubr.bf16.mxu0 0
      %6170 = vmatmul.mubr.bf16.gmra.mxu0 %v4476
      %v6171 = vpop.f32.mrf.mxu0
      %v6172 = vadd.f32 0.0, %v6171
      %v6173 = vpop.f32.mrf.mxu0
      %v6174 = vpop.f32.mrf.mxu0
      %v6175 = vadd.f32 0.0, %v6174
      %v6176 = vpop.f32.mrf.mxu0
      %6177 = vmatprep.mubr.bf16.mxu0 0
      %6178 = vmatmul.mubr.bf16.gmra.mxu0 %v4484
      %v6179 = vpop.f32.mrf.mxu0
      %v6180 = vadd.f32 0.0, %v6179
      %v6181 = vpop.f32.mrf.mxu0
      %v6182 = vpop.f32.mrf.mxu0
      %v6183 = vadd.f32 0.0, %v6182
      %v6184 = vpop.f32.mrf.mxu0
      %6185 = vmatprep.mubr.bf16.mxu0 0
      %6186 = vmatmul.mubr.bf16.gmra.mxu0 %v4492
      %v6187 = vpop.f32.mrf.mxu0
      %v6188 = vadd.f32 0.0, %v6187
      %v6189 = vpop.f32.mrf.mxu0
      %v6190 = vpop.f32.mrf.mxu0
      %v6191 = vadd.f32 0.0, %v6190
      %v6192 = vpop.f32.mrf.mxu0
      %6193 = vmatprep.mubr.bf16.mxu0 0
      %6194 = vmatmul.mubr.bf16.gmra.mxu0 %v4500
      %v6195 = vpop.f32.mrf.mxu0
      %v6196 = vadd.f32 0.0, %v6195
      %v6197 = vpop.f32.mrf.mxu0
      %v6198 = vpop.f32.mrf.mxu0
      %v6199 = vadd.f32 0.0, %v6198
      %v6200 = vpop.f32.mrf.mxu0
      %6201 = vmatprep.mubr.bf16.mxu0 0
      %6202 = vmatmul.mubr.bf16.gmra.mxu0 %v4508
      %v6203 = vpop.f32.mrf.mxu0
      %v6204 = vadd.f32 0.0, %v6203
      %v6205 = vpop.f32.mrf.mxu0
      %v6206 = vpop.f32.mrf.mxu0
      %v6207 = vadd.f32 0.0, %v6206
      %v6208 = vpop.f32.mrf.mxu0
      %6209 = vmatprep.mubr.bf16.mxu0 0
      %6210 = vmatmul.mubr.bf16.gmra.mxu0 %v5382
      %v6211 = vpop.f32.mrf.mxu0
      %v6212 = vadd.f32 0.0, %v6211
      %v6213 = vpop.f32.mrf.mxu0
      %v6214 = vpop.f32.mrf.mxu0
      %v6215 = vadd.f32 0.0, %v6214
      %v6216 = vpop.f32.mrf.mxu0
      %6217 = vmatprep.mubr.bf16.mxu0 0
      %6218 = vmatmul.mubr.bf16.gmra.mxu0 %v6051
      %v6219 = vpop.f32.mrf.mxu0
      %v6220 = vadd.f32 0.0, %v6219
      %v6221 = vpop.f32.mrf.mxu0
      %v6222 = vpop.f32.mrf.mxu0
      %v6223 = vadd.f32 0.0, %v6222
      %v6224 = vpop.f32.mrf.mxu0
      %6225 = vmatprep.mubr.bf16.mxu0 0
      %6226 = vmatmul.mubr.bf16.gmra.mxu0 %v6054
      %v6227 = vpop.f32.mrf.mxu0
      %v6228 = vadd.f32 0.0, %v6227
      %v6229 = vpop.f32.mrf.mxu0
      %v6230 = vpop.f32.mrf.mxu0
      %v6231 = vadd.f32 0.0, %v6230
      %v6232 = vpop.f32.mrf.mxu0
      %6233 = vdwg.mxu0
      %v6234 = vadd.f32 %v6006, %v6140
      %v6235 = vadd.f32 %v6007, %v6143
      %v6236 = vadd.f32 %v6008, %v6148
      %v6237 = vadd.f32 %v6009, %v6151
      %v6238 = vadd.f32 %v6010, %v6156
      %v6239 = vadd.f32 %v6011, %v6159
      %v6240 = vadd.f32 %v6012, %v6164
      %v6241 = vadd.f32 %v6013, %v6167
      %v6242 = vadd.f32 %v6014, %v6172
      %v6243 = vadd.f32 %v6015, %v6175
      %v6244 = vadd.f32 %v6016, %v6180
      %v6245 = vadd.f32 %v6017, %v6183
      %v6246 = vadd.f32 %v6018, %v6188
      %v6247 = vadd.f32 %v6019, %v6191
      %v6248 = vadd.f32 %v6020, %v6196
      %v6249 = vadd.f32 %v6021, %v6199
      %v6250 = vadd.f32 %v6022, %v6204
      %v6251 = vadd.f32 %v6023, %v6207
      %v6252 = vadd.f32 %v6024, %v6212
      %v6253 = vadd.f32 %v6025, %v6215
      %v6254 = vadd.f32 %v6026, %v6220
      %v6255 = vadd.f32 %v6027, %v6223
      %v6256 = vadd.f32 %v6028, %v6228
      %v6257 = vadd.f32 %v6029, %v6231
      %s6258 = scalar_lea.vmem %s5, 512
      %v6259 = vld [vmem:[%s6258] sm:$0xf]
      %v6260 = vld [vmem:[%s6258 + $0x4] sm:$0xf]
      %v6261 = vld [vmem:[%s6258 + $0x8] sm:$0xf]
      %v6262 = vld [vmem:[%s6258 + $0xc] sm:$0xf]
      %v6263 = vld [vmem:[%s6258 + $0x10] sm:$0xf]
      %v6264 = vld [vmem:[%s6258 + $0x14] sm:$0xf]
      %v6265 = vld [vmem:[%s6258 + $0x18] sm:$0xf]
      %v6266 = vld [vmem:[%s6258 + $0x1c] sm:$0xf]
      %v6267 = vld [vmem:[%s6258 + $0x20] sm:$0xf]
      %v6268 = vld [vmem:[%s6258 + $0x24] sm:$0xf]
      %v6269 = vld [vmem:[%s6258 + $0x28] sm:$0xf]
      %v6270 = vld [vmem:[%s6258 + $0x2c] sm:$0xf]
      %v6271 = vld [vmem:[%s6258 + $0x30] sm:$0xf]
      %v6272 = vld [vmem:[%s6258 + $0x34] sm:$0xf]
      %v6273 = vld [vmem:[%s6258 + $0x38] sm:$0xf]
      %v6274 = vld [vmem:[%s6258 + $0x3c] sm:$0xf]
      %v6276 = vrot.slane %v4383, 1
      %v6277 = vsel %vm2087, %v5607, %v6276
      %v6296 = vunpack.c.l.b16 %v6259
      %v6297 = vunpack.c.l.b16 %v6260
      %v6298 = vunpack.c.l.b16 %v6261
      %v6299 = vunpack.c.l.b16 %v6262
      %v6300 = vunpack.c.l.b16 %v6263
      %v6301 = vunpack.c.l.b16 %v6264
      %v6302 = vunpack.c.l.b16 %v6265
      %v6303 = vunpack.c.l.b16 %v6266
      %v6304 = vunpack.c.l.b16 %v6267
      %v6305 = vunpack.c.l.b16 %v6268
      %v6306 = vunpack.c.l.b16 %v6269
      %v6307 = vunpack.c.l.b16 %v6270
      %v6308 = vunpack.c.l.b16 %v6271
      %v6309 = vunpack.c.l.b16 %v6272
      %v6310 = vunpack.c.l.b16 %v6273
      %v6311 = vunpack.c.l.b16 %v6274
      %v6312 = vpack.c.b16 %v6297, %v6296
      %v6313 = vpack.c.b16 %v6299, %v6298
      %v6314 = vpack.c.b16 %v6301, %v6300
      %v6315 = vpack.c.b16 %v6303, %v6302
      %v6316 = vpack.c.b16 %v6305, %v6304
      %v6317 = vpack.c.b16 %v6307, %v6306
      %v6318 = vpack.c.b16 %v6309, %v6308
      %v6319 = vpack.c.b16 %v6311, %v6310
      %6328 = vmatprep.subr.bf16.mxu0 0
      %6329 = vmatpush1.bf16.msra.mxu0 %v6319
      %6330 = vmatprep.subr.bf16.mxu0 0
      %6331 = vmatpush1.bf16.msra.mxu0 %v6318
      %6332 = vmatprep.subr.bf16.mxu0 0
      %6333 = vmatpush1.bf16.msra.mxu0 %v6317
      %6334 = vmatprep.subr.bf16.mxu0 0
      %6335 = vmatpush1.bf16.msra.mxu0 %v6316
      %6336 = vmatprep.subr.bf16.mxu0 0
      %6337 = vmatpush1.bf16.msra.mxu0 %v6315
      %6338 = vmatprep.subr.bf16.mxu0 0
      %6339 = vmatpush1.bf16.msra.mxu0 %v6314
      %6340 = vmatprep.subr.bf16.mxu0 0
      %6341 = vmatpush1.bf16.msra.mxu0 %v6313
      %6342 = vmatprep.subr.bf16.mxu0 0
      %6343 = vmatpush1.bf16.msra.mxu0 %v6312
      %6344 = vmatprep.subr.bf16.mxu0 0
      %6345 = vmatpush2.bf16.msra.mxu0 0
      %6346 = vmatprep.subr.bf16.mxu0 0
      %6347 = vmatpush2.bf16.msra.mxu0 0
      %6348 = vmatprep.subr.bf16.mxu0 0
      %6349 = vmatpush2.bf16.msra.mxu0 0
      %6350 = vmatprep.subr.bf16.mxu0 0
      %6351 = vmatpush2.bf16.msra.mxu0 0
      %6352 = vmatprep.subr.bf16.mxu0 0
      %6353 = vmatpush2.bf16.msra.mxu0 0
      %6354 = vmatprep.subr.bf16.mxu0 0
      %6355 = vmatpush2.bf16.msra.mxu0 0
      %6356 = vmatprep.subr.bf16.mxu0 0
      %6357 = vmatpush2.bf16.msra.mxu0 0
      %6358 = vmatprep.subr.bf16.mxu0 0
      %6359 = vmatpush2.bf16.msra.mxu0 0
      %6360 = vmatprep.mubr.bf16.mxu0 0
      %6361 = vmatmul.mubr.bf16.gmra.mxu0 %v4913
      %v6362 = vpop.f32.mrf.mxu0
      %v6363 = vadd.f32 0.0, %v6362
      %v6364 = vpop.f32.mrf.mxu0
      %v6365 = vpop.f32.mrf.mxu0
      %v6366 = vadd.f32 0.0, %v6365
      %v6367 = vpop.f32.mrf.mxu0
      %6368 = vmatprep.mubr.bf16.mxu0 0
      %6369 = vmatmul.mubr.bf16.gmra.mxu0 %v4915
      %v6370 = vpop.f32.mrf.mxu0
      %v6371 = vadd.f32 0.0, %v6370
      %v6372 = vpop.f32.mrf.mxu0
      %v6373 = vpop.f32.mrf.mxu0
      %v6374 = vadd.f32 0.0, %v6373
      %v6375 = vpop.f32.mrf.mxu0
      %6376 = vmatprep.mubr.bf16.mxu0 0
      %6377 = vmatmul.mubr.bf16.gmra.mxu0 %v4917
      %v6378 = vpop.f32.mrf.mxu0
      %v6379 = vadd.f32 0.0, %v6378
      %v6380 = vpop.f32.mrf.mxu0
      %v6381 = vpop.f32.mrf.mxu0
      %v6382 = vadd.f32 0.0, %v6381
      %v6383 = vpop.f32.mrf.mxu0
      %6384 = vmatprep.mubr.bf16.mxu0 0
      %6385 = vmatmul.mubr.bf16.gmra.mxu0 %v4919
      %v6386 = vpop.f32.mrf.mxu0
      %v6387 = vadd.f32 0.0, %v6386
      %v6388 = vpop.f32.mrf.mxu0
      %v6389 = vpop.f32.mrf.mxu0
      %v6390 = vadd.f32 0.0, %v6389
      %v6391 = vpop.f32.mrf.mxu0
      %6392 = vmatprep.mubr.bf16.mxu0 0
      %6393 = vmatmul.mubr.bf16.gmra.mxu0 %v4921
      %v6394 = vpop.f32.mrf.mxu0
      %v6395 = vadd.f32 0.0, %v6394
      %v6396 = vpop.f32.mrf.mxu0
      %v6397 = vpop.f32.mrf.mxu0
      %v6398 = vadd.f32 0.0, %v6397
      %v6399 = vpop.f32.mrf.mxu0
      %6400 = vmatprep.mubr.bf16.mxu0 0
      %6401 = vmatmul.mubr.bf16.gmra.mxu0 %v4923
      %v6402 = vpop.f32.mrf.mxu0
      %v6403 = vadd.f32 0.0, %v6402
      %v6404 = vpop.f32.mrf.mxu0
      %v6405 = vpop.f32.mrf.mxu0
      %v6406 = vadd.f32 0.0, %v6405
      %v6407 = vpop.f32.mrf.mxu0
      %6408 = vmatprep.mubr.bf16.mxu0 0
      %6409 = vmatmul.mubr.bf16.gmra.mxu0 %v4925
      %v6410 = vpop.f32.mrf.mxu0
      %v6411 = vadd.f32 0.0, %v6410
      %v6412 = vpop.f32.mrf.mxu0
      %v6413 = vpop.f32.mrf.mxu0
      %v6414 = vadd.f32 0.0, %v6413
      %v6415 = vpop.f32.mrf.mxu0
      %6416 = vmatprep.mubr.bf16.mxu0 0
      %6417 = vmatmul.mubr.bf16.gmra.mxu0 %v4927
      %v6418 = vpop.f32.mrf.mxu0
      %v6419 = vadd.f32 0.0, %v6418
      %v6420 = vpop.f32.mrf.mxu0
      %v6421 = vpop.f32.mrf.mxu0
      %v6422 = vadd.f32 0.0, %v6421
      %v6423 = vpop.f32.mrf.mxu0
      %6424 = vmatprep.mubr.bf16.mxu0 0
      %6425 = vmatmul.mubr.bf16.gmra.mxu0 %v4929
      %v6426 = vpop.f32.mrf.mxu0
      %v6427 = vadd.f32 0.0, %v6426
      %v6428 = vpop.f32.mrf.mxu0
      %v6429 = vpop.f32.mrf.mxu0
      %v6430 = vadd.f32 0.0, %v6429
      %v6431 = vpop.f32.mrf.mxu0
      %6432 = vmatprep.mubr.bf16.mxu0 0
      %6433 = vmatmul.mubr.bf16.gmra.mxu0 %v5608
      %v6434 = vpop.f32.mrf.mxu0
      %v6435 = vadd.f32 0.0, %v6434
      %v6436 = vpop.f32.mrf.mxu0
      %v6437 = vpop.f32.mrf.mxu0
      %v6438 = vadd.f32 0.0, %v6437
      %v6439 = vpop.f32.mrf.mxu0
      %6440 = vmatprep.mubr.bf16.mxu0 0
      %6441 = vmatmul.mubr.bf16.gmra.mxu0 %v6277
      %v6442 = vpop.f32.mrf.mxu0
      %v6443 = vadd.f32 0.0, %v6442
      %v6444 = vpop.f32.mrf.mxu0
      %v6445 = vpop.f32.mrf.mxu0
      %v6446 = vadd.f32 0.0, %v6445
      %v6447 = vpop.f32.mrf.mxu0
      %6448 = vmatprep.mubr.bf16.mxu0 0
      %6449 = vmatmul.mubr.bf16.gmra.mxu0 %v6276
      %v6450 = vpop.f32.mrf.mxu0
      %v6451 = vadd.f32 0.0, %v6450
      %v6452 = vpop.f32.mrf.mxu0
      %v6453 = vpop.f32.mrf.mxu0
      %v6454 = vadd.f32 0.0, %v6453
      %v6455 = vpop.f32.mrf.mxu0
      %6456 = vdwg.mxu0
      %v6457 = vadd.f32 %v6234, %v6363
      %v6458 = vadd.f32 %v6235, %v6366
      %v6459 = vadd.f32 %v6236, %v6371
      %v6460 = vadd.f32 %v6237, %v6374
      %v6461 = vadd.f32 %v6238, %v6379
      %v6462 = vadd.f32 %v6239, %v6382
      %v6463 = vadd.f32 %v6240, %v6387
      %v6464 = vadd.f32 %v6241, %v6390
      %v6465 = vadd.f32 %v6242, %v6395
      %v6466 = vadd.f32 %v6243, %v6398
      %v6467 = vadd.f32 %v6244, %v6403
      %v6468 = vadd.f32 %v6245, %v6406
      %v6469 = vadd.f32 %v6246, %v6411
      %v6470 = vadd.f32 %v6247, %v6414
      %v6471 = vadd.f32 %v6248, %v6419
      %v6472 = vadd.f32 %v6249, %v6422
      %v6473 = vadd.f32 %v6250, %v6427
      %v6474 = vadd.f32 %v6251, %v6430
      %v6475 = vadd.f32 %v6252, %v6435
      %v6476 = vadd.f32 %v6253, %v6438
      %v6477 = vadd.f32 %v6254, %v6443
      %v6478 = vadd.f32 %v6255, %v6446
      %v6479 = vadd.f32 %v6256, %v6451
      %v6480 = vadd.f32 %v6257, %v6454
      %v6481 = vld [vmem:[%s6] sm:$0x1]
      %v6483 = vlaneseq
      %v6484 = vshrl.u32 %v6483, 7
      %v6485 = vsub.s32 0, %v6484
      %v6486 = vrot.slane %v6481, %v6485
      %v6488 = vadd.f32 %v6457, %v6486
      %v6489 = vadd.f32 %v6458, %v6486
      %v6490 = vadd.f32 %v6459, %v6486
      %v6491 = vadd.f32 %v6460, %v6486
      %v6492 = vadd.f32 %v6461, %v6486
      %v6493 = vadd.f32 %v6462, %v6486
      %v6494 = vadd.f32 %v6463, %v6486
      %v6495 = vadd.f32 %v6464, %v6486
      %v6496 = vadd.f32 %v6465, %v6486
      %v6497 = vadd.f32 %v6466, %v6486
      %v6498 = vadd.f32 %v6467, %v6486
      %v6499 = vadd.f32 %v6468, %v6486
      %v6500 = vadd.f32 %v6469, %v6486
      %v6501 = vadd.f32 %v6470, %v6486
      %v6502 = vadd.f32 %v6471, %v6486
      %v6503 = vadd.f32 %v6472, %v6486
      %v6504 = vadd.f32 %v6473, %v6486
      %v6505 = vadd.f32 %v6474, %v6486
      %v6506 = vadd.f32 %v6475, %v6486
      %v6507 = vadd.f32 %v6476, %v6486
      %v6508 = vadd.f32 %v6477, %v6486
      %v6509 = vadd.f32 %v6478, %v6486
      %v6510 = vadd.f32 %v6479, %v6486
      %v6511 = vadd.f32 %v6480, %v6486
      %v6512 = vmax.f32 %v6488, 0.0
      %v6513 = vmax.f32 %v6489, 0.0
      %v6514 = vmax.f32 %v6490, 0.0
      %v6515 = vmax.f32 %v6491, 0.0
      %v6516 = vmax.f32 %v6492, 0.0
      %v6517 = vmax.f32 %v6493, 0.0
      %v6518 = vmax.f32 %v6494, 0.0
      %v6519 = vmax.f32 %v6495, 0.0
      %v6520 = vmax.f32 %v6496, 0.0
      %v6521 = vmax.f32 %v6497, 0.0
      %v6522 = vmax.f32 %v6498, 0.0
      %v6523 = vmax.f32 %v6499, 0.0
      %v6524 = vmax.f32 %v6500, 0.0
      %v6525 = vmax.f32 %v6501, 0.0
      %v6526 = vmax.f32 %v6502, 0.0
      %v6527 = vmax.f32 %v6503, 0.0
      %v6528 = vmax.f32 %v6504, 0.0
      %v6529 = vmax.f32 %v6505, 0.0
      %v6530 = vmax.f32 %v6506, 0.0
      %v6531 = vmax.f32 %v6507, 0.0
      %v6532 = vmax.f32 %v6508, 0.0
      %v6533 = vmax.f32 %v6509, 0.0
      %v6534 = vmax.f32 %v6510, 0.0
      %v6535 = vmax.f32 %v6511, 0.0
      %6536 = vst [vmem:[%s298] sm:$0xff] %v6512
      %6537 = vst [vmem:[%s298 + $0x8] sm:$0xff] %v6513
      %6538 = vst [vmem:[%s298 + $0x10] sm:$0xff] %v6514
      %6539 = vst [vmem:[%s298 + $0x18] sm:$0xff] %v6515
      %6540 = vst [vmem:[%s298 + $0x20] sm:$0xff] %v6516
      %6541 = vst [vmem:[%s298 + $0x28] sm:$0xff] %v6517
      %6542 = vst [vmem:[%s298 + $0x30] sm:$0xff] %v6518
      %6543 = vst [vmem:[%s298 + $0x38] sm:$0xff] %v6519
      %6544 = vst [vmem:[%s298 + $0x40] sm:$0xff] %v6520
      %6545 = vst [vmem:[%s298 + $0x48] sm:$0xff] %v6521
      %6546 = vst [vmem:[%s298 + $0x50] sm:$0xff] %v6522
      %6547 = vst [vmem:[%s298 + $0x58] sm:$0xff] %v6523
      %6548 = vst [vmem:[%s298 + $0x60] sm:$0xff] %v6524
      %6549 = vst [vmem:[%s298 + $0x68] sm:$0xff] %v6525
      %6550 = vst [vmem:[%s298 + $0x70] sm:$0xff] %v6526
      %6551 = vst [vmem:[%s298 + $0x78] sm:$0xff] %v6527
      %6552 = vst [vmem:[%s298 + $0x80] sm:$0xff] %v6528
      %6553 = vst [vmem:[%s298 + $0x88] sm:$0xff] %v6529
      %6554 = vst [vmem:[%s298 + $0x90] sm:$0xff] %v6530
      %6555 = vst [vmem:[%s298 + $0x98] sm:$0xff] %v6531
      %6556 = vst [vmem:[%s298 + $0xa0] sm:$0xff] %v6532
      %6557 = vst [vmem:[%s298 + $0xa8] sm:$0xff] %v6533
      %6558 = vst [vmem:[%s298 + $0xb0] sm:$0xff] %v6534
      %6559 = vst [vmem:[%s298 + $0xb8] sm:$0xf] %v6535
      %6560 = vst [vmem:[%s298 + $0xbc] sm:$0xf] 0.0
      %p6561 = scmp.lt.s32.totalorder %s18, 1
      %s6562 = scalar_select %p6561, %s18, 1
      %s6563 = smul.addr %s6562, 24
      %s6564 = smul.addr %s6563, 8
      %s6565 = scalar_lea.vmem %s7, %s6564
      // Predicated region
      $region49: #{conv_up_forward.1} parent=47 // pred_check
        %p6566 = pneg %p193
      $region50: #{conv_up_forward.1} parent=47 // pred_check_branch
        %6568 = sbr.rel (%p6566) target = $region52
      $region51: #{conv_up_forward.1} parent=47 // pred_region
        _
      $region52: #{conv_up_forward.1} parent=47 // pred_fallthru
        _
    $region48: #{conv_up_forward.1} parent=5 // pred_fallthru
      _
    %p6569 = scmp.le.s32.totalorder 2, %s13
    // Predicated region
    $region53: #{conv_up_forward.1} parent=5 // pred_check
      %p6570 = pneg %p6569
    $region54: #{conv_up_forward.1} parent=5 // pred_check_branch
      %6572 = sbr.rel (%p6570) target = $region56
    $region55: #{conv_up_forward.1} parent=5 // pred_region
      %s6573 = ssub.s32 %s13, 2
      // Predicated region
      $region57: #{conv_up_forward.1} parent=55 // pred_check
        %p6574 = pneg %p199
      $region58: #{conv_up_forward.1} parent=55 // pred_check_branch
        %6576 = sbr.rel (%p6574) target = $region60
      $region59: #{conv_up_forward.1} parent=55 // pred_region
        %p6577 = scmp.lt.s32.totalorder %s19, 1
        %s6578 = scalar_select %p6577, %s19, 1
        %s6579 = smul.addr %s6578, 24
        %s6580 = smul.addr %s6579, 8
        %s6581 = scalar_lea.vmem %s7, %s6580
      $region60: #{conv_up_forward.1} parent=55 // pred_fallthru
        _
    $region56: #{conv_up_forward.1} parent=5 // pred_fallthru
      _
  $region6: #{conv_up_forward.1} parent=0 // loop_footer
    %s17 = sadd.s32 1, %s13
  $region7: #{conv_up_forward.1} parent=0 // loop_footer_branch
    %12 = sbr.rel target = $region3
  $region8: #{conv_up_forward.1} parent=0 // loop_exit
    _

</llo_original>
